<compile_context>
chip_gen: v7x
topology: tpu7x:2x2x1
jax: 0.10.0
libtpu: 0.0.40
codegen_flags: <defaults>
</compile_context>

<pallas_src>
import functools

import jax
import jax.numpy as jnp
from jax import lax
from jax.experimental import pallas as pl
from jax.experimental.pallas import tpu as pltpu

LANE = 128      # lane tile (last dim)
SUBLANE = 8     # sublane tile (second-to-last dim, f32)

# PyTorch gate order is [i, f, g, o]; we repack to [i, f, o, g] so the three
# sigmoid gates are contiguous (single EUP sigmoid over 3H lanes per step).
GATE_ORDER = (0, 1, 3, 2)


def _round_up(x, m):
    return (x + m - 1) // m * m


def _full_block(shape):
    zeros = (0,) * len(shape)
    return pl.BlockSpec(shape, lambda: zeros)


def _lstm_model_kernel(*refs, seq, batch_p, in_p, hidden_p, layers):
    """Fused multi-layer LSTM + FC head; everything resident in VMEM."""
    n_w = 3 * layers
    x_ref = refs[0]                      # (seq, Bp, Ip) f32
    layer_refs = refs[1:1 + n_w]         # per layer: w_ih (in,4Hp) bf16, w_hh (Hp,4Hp) bf16, b (1,4Hp) f32
    w_fc_ref = refs[1 + n_w]             # (Hp, Op) bf16
    b_fc_ref = refs[2 + n_w]             # (1, Op)  f32
    out_ref = refs[3 + n_w]              # (Bp, Op) f32
    seq_h_scr = refs[4 + n_w]            # (seq, Bp, Hp) f32 — inter-layer h sequence
    gates_scr = refs[5 + n_w]            # (seq, Bp, 4Hp) f32 — hoisted input projection

    Bp, Hp = batch_p, hidden_p
    h = None

    for l in range(layers):
        w_ih_ref = layer_refs[3 * l + 0]
        w_hh_ref = layer_refs[3 * l + 1]
        b_ref = layer_refs[3 * l + 2]

        if l == 0:
            inp = x_ref[...].reshape(seq * Bp, in_p)
        else:
            inp = seq_h_scr[...].reshape(seq * Bp, Hp)

        # Hoisted: whole-sequence input projection + bias, one big MXU matmul
        # (bias added once per layer, not per timestep).
        gx = jnp.dot(inp.astype(jnp.bfloat16), w_ih_ref[...],
                     preferred_element_type=jnp.float32) + b_ref[...]
        gates_scr[...] = gx.reshape(seq, Bp, 4 * Hp)

        w_hh = w_hh_ref[...]             # loop-invariant, resident in VMEM/vregs
        last_layer = (l == layers - 1)

        def step(t, carry, w_hh=w_hh, last_layer=last_layer):
            h_prev, c_prev = carry
            # Only the recurrent matmul + gate elementwise math is serial.
            g = gates_scr[t] + jnp.dot(h_prev.astype(jnp.bfloat16), w_hh,
                                       preferred_element_type=jnp.float32)
            # Gate order [i, f, o, g]: one contiguous sigmoid, one tanh.
            # All slices are 128-lane aligned (Hp is a multiple of 128).
            ifo = jax.nn.sigmoid(g[:, :3 * Hp])
            i_g = ifo[:, 0 * Hp:1 * Hp]
            f_g = ifo[:, 1 * Hp:2 * Hp]
            o_g = ifo[:, 2 * Hp:3 * Hp]
            g_g = jnp.tanh(g[:, 3 * Hp:4 * Hp])
            c_new = f_g * c_prev + i_g * g_g
            h_new = o_g * jnp.tanh(c_new)
            if not last_layer:
                seq_h_scr[t] = h_new     # next layer's input; never leaves VMEM
            return (h_new, c_new)

        h0 = jnp.zeros((Bp, Hp), jnp.float32)
        c0 = jnp.zeros((Bp, Hp), jnp.float32)
        h, _ = lax.fori_loop(0, seq, step, (h0, c0), unroll=(seq <= 32))

    # Fused FC head on the final hidden state only — lane-dense (Bp, Op) store.
    out_ref[...] = (jnp.dot(h.astype(jnp.bfloat16), w_fc_ref[...],
                            preferred_element_type=jnp.float32) + b_fc_ref[...])


def _pad_gate_weight(w, hidden, hidden_p, in_dim, in_p):
    """PyTorch (4H, in) [i,f,g,o] -> transposed, gate-reordered [i,f,o,g],
    gate-block-padded (in_p, 4*Hp) bf16."""
    w4 = w.reshape(4, hidden, in_dim)[jnp.array(GATE_ORDER)]
    w4 = jnp.pad(w4, ((0, 0), (0, hidden_p - hidden), (0, in_p - in_dim)))
    return w4.reshape(4 * hidden_p, in_p).T.astype(jnp.bfloat16)


def _pad_gate_bias(b_ih, b_hh, hidden, hidden_p):
    b4 = (b_ih + b_hh).reshape(4, hidden)[jnp.array(GATE_ORDER)]
    b4 = jnp.pad(b4, ((0, 0), (0, hidden_p - hidden)))
    return b4.reshape(1, 4 * hidden_p).astype(jnp.float32)


@jax.jit
def lstm_model_forward(params, x):
    """x: (batch, seq, inputs) -> (batch, outputs). Matches LSTMModel.forward."""
    batch, seq, inputs = x.shape
    lstm_p = params["lstm"]
    layers = len(lstm_p)
    hidden = lstm_p[0]["w_hh"].shape[1]
    outputs = params["fc"]["w"].shape[0]

    Bp = _round_up(batch, SUBLANE)
    Ip = _round_up(inputs, LANE)
    Hp = _round_up(hidden, LANE)
    Op = _round_up(outputs, LANE)

    # time-major, zero-padded to (8,128)-dense tiles
    x_tm = jnp.transpose(x, (1, 0, 2)).astype(jnp.float32)
    x_pad = jnp.pad(x_tm, ((0, 0), (0, Bp - batch), (0, Ip - inputs)))

    operands = [x_pad]
    in_specs = [_full_block(x_pad.shape)]
    for l, lp in enumerate(lstm_p):
        in_dim = inputs if l == 0 else hidden
        in_pad = Ip if l == 0 else Hp
        w_ih_p = _pad_gate_weight(lp["w_ih"], hidden, Hp, in_dim, in_pad)
        w_hh_p = _pad_gate_weight(lp["w_hh"], hidden, Hp, hidden, Hp)
        b_p = _pad_gate_bias(lp["b_ih"], lp["b_hh"], hidden, Hp)
        operands += [w_ih_p, w_hh_p, b_p]
        in_specs += [_full_block(w_ih_p.shape), _full_block(w_hh_p.shape),
                     _full_block(b_p.shape)]

    w_fc_p = jnp.pad(params["fc"]["w"],
                     ((0, Op - outputs), (0, Hp - hidden))).T.astype(jnp.bfloat16)
    b_fc_p = jnp.pad(params["fc"]["b"], ((0, Op - outputs),)).reshape(1, Op)
    b_fc_p = b_fc_p.astype(jnp.float32)
    operands += [w_fc_p, b_fc_p]
    in_specs += [_full_block(w_fc_p.shape), _full_block(b_fc_p.shape)]

    kernel = functools.partial(_lstm_model_kernel, seq=seq, batch_p=Bp,
                               in_p=Ip, hidden_p=Hp, layers=layers)

    out_pad = pl.pallas_call(
        kernel,
        out_shape=jax.ShapeDtypeStruct((Bp, Op), jnp.float32),
        in_specs=in_specs,
        out_specs=_full_block((Bp, Op)),
        scratch_shapes=[
            pltpu.VMEM((seq, Bp, Hp), jnp.float32),       # inter-layer h sequence
            pltpu.VMEM((seq, Bp, 4 * Hp), jnp.float32),   # hoisted gate projections
        ],
        compiler_params=pltpu.CompilerParams(
            vmem_limit_bytes=32 * 1024 * 1024),
    )(*operands)

    return out_pad[:batch, :outputs]


def init_params(key, inputs, hidden, layers, outputs):
    """PyTorch-style U(-1/sqrt(hidden), 1/sqrt(hidden)) init; values are rounded
    to bf16-representable numbers so the bf16 kernel and f32 reference agree."""
    def u(k, shape, bound):
        w = jax.random.uniform(k, shape, jnp.float32, -bound, bound)
        return w.astype(jnp.bfloat16).astype(jnp.float32)

    params = {"lstm": [], "fc": None}
    bound = 1.0 / float(hidden) ** 0.5
    for layer in range(layers):
        in_feat = inputs if layer == 0 else hidden
        key, k1, k2, k3, k4 = jax.random.split(key, 5)
        params["lstm"].append({
            "w_ih": u(k1, (4 * hidden, in_feat), bound),
            "w_hh": u(k2, (4 * hidden, hidden), bound),
            "b_ih": u(k3, (4 * hidden,), bound),
            "b_hh": u(k4, (4 * hidden,), bound),
        })
    key, k1, k2 = jax.random.split(key, 3)
    params["fc"] = {"w": u(k1, (outputs, hidden), bound),
                    "b": u(k2, (outputs,), bound)}
    return params


def lstm_model_reference(params, x):
    """Pure-JAX reference (lax.scan, PyTorch [i,f,g,o] gate order) for
    correctness sanity check."""
    hidden = params["lstm"][0]["w_hh"].shape[1]
    batch = x.shape[0]
    seq_in = jnp.transpose(x, (1, 0, 2))
    for lp in params["lstm"]:
        w_ih_t = lp["w_ih"].T
        w_hh_t = lp["w_hh"].T
        b = (lp["b_ih"] + lp["b_hh"]).reshape(1, -1)

        def step(carry, x_t, w_ih_t=w_ih_t, w_hh_t=w_hh_t, b=b):
            h_prev, c_prev = carry
            gates = x_t @ w_ih_t + h_prev @ w_hh_t + b
            i_g = jax.nn.sigmoid(gates[:, 0 * hidden:1 * hidden])
            f_g = jax.nn.sigmoid(gates[:, 1 * hidden:2 * hidden])
            g_g = jnp.tanh(gates[:, 2 * hidden:3 * hidden])
            o_g = jax.nn.sigmoid(gates[:, 3 * hidden:4 * hidden])
            c = f_g * c_prev + i_g * g_g
            h = o_g * jnp.tanh(c)
            return (h, c), h

        init = (jnp.zeros((batch, hidden), jnp.float32),
                jnp.zeros((batch, hidden), jnp.float32))
        _, seq_in = lax.scan(step, init, seq_in)
    return seq_in[-1] @ params["fc"]["w"].T + params["fc"]["b"].reshape(1, -1)


if __name__ == "__main__":
    batch, seq, inputs, hidden, layers, outputs = 2, 8, 16, 32, 2, 4

    key = jax.random.PRNGKey(0)
    key, kp, kx = jax.random.split(key, 3)
    params = init_params(kp, inputs, hidden, layers, outputs)
    x = jax.random.normal(kx, (batch, seq, inputs), dtype=jnp.float32)

    out = lstm_model_forward(params, x)
    out = jax.block_until_ready(out)
    assert out.shape == (batch, outputs), out.shape

    ref = lstm_model_reference(params, x)
    # tolerance: bf16 matmul operands + TPU EUP sigmoid/tanh approximations
    assert jnp.allclose(out, ref, atol=3e-2, rtol=3e-2), (out, ref)

    print("KERNEL_OK")
</pallas_src>

<mosaic_0001>
module attributes {stable_mosaic.version = 11 : i64} {
  func.func @_lstm_model_kernel(%arg0: memref<8x8x128xf32, #tpu.memory_space<vmem>>, %arg1: memref<128x512xbf16, #tpu.memory_space<vmem>>, %arg2: memref<128x512xbf16, #tpu.memory_space<vmem>>, %arg3: memref<1x512xf32, #tpu.memory_space<vmem>>, %arg4: memref<128x512xbf16, #tpu.memory_space<vmem>>, %arg5: memref<128x512xbf16, #tpu.memory_space<vmem>>, %arg6: memref<1x512xf32, #tpu.memory_space<vmem>>, %arg7: memref<128x128xbf16, #tpu.memory_space<vmem>>, %arg8: memref<1x128xf32, #tpu.memory_space<vmem>>, %arg9: memref<8x128xf32, #tpu.memory_space<vmem>>, %arg10: memref<8x8x128xf32, #tpu.memory_space<vmem>>, %arg11: memref<8x8x512xf32, #tpu.memory_space<vmem>>) attributes {dimension_semantics = [], scalar_prefetch = 0 : i64, scratch_operands = 2 : i64, tpu.core_type = #tpu.core_type<tc>} {
    %c0 = arith.constant 0 : index
    %c0_0 = arith.constant 0 : index
    %c0_1 = arith.constant 0 : index
    %0 = vector.load %arg0[%c0, %c0_0, %c0_1] : memref<8x8x128xf32, #tpu.memory_space<vmem>>, vector<8x8x128xf32>
    %1 = vector.shape_cast %0 : vector<8x8x128xf32> to vector<64x128xf32>
    %2 = arith.truncf %1 : vector<64x128xf32> to vector<64x128xbf16>
    %c0_2 = arith.constant 0 : index
    %c0_3 = arith.constant 0 : index
    %3 = vector.load %arg1[%c0_2, %c0_3] : memref<128x512xbf16, #tpu.memory_space<vmem>>, vector<128x512xbf16>
    %cst = arith.constant dense<0.000000e+00> : vector<64x512xf32>
    %4 = tpu.matmul %2, %3, %cst {dimension_numbers = #tpu.dot_dimension_numbers<[1], [0], [0], [1], [0, 0, 1, 1], [], []>} : vector<64x128xbf16>, vector<128x512xbf16>, vector<64x512xf32> -> vector<64x512xf32>
    %c0_4 = arith.constant 0 : index
    %c0_5 = arith.constant 0 : index
    %5 = vector.load %arg3[%c0_4, %c0_5] : memref<1x512xf32, #tpu.memory_space<vmem>>, vector<1x512xf32>
    %6 = vector.broadcast %5 : vector<1x512xf32> to vector<64x512xf32>
    %7 = arith.addf %4, %6 : vector<64x512xf32>
    %8 = vector.shape_cast %7 : vector<64x512xf32> to vector<8x8x512xf32>
    %c0_6 = arith.constant 0 : index
    %c0_7 = arith.constant 0 : index
    %c0_8 = arith.constant 0 : index
    %9 = vector.load %arg11[%c0_6, %c0_7, %c0_8] : memref<8x8x512xf32, #tpu.memory_space<vmem>>, vector<8x8x512xf32>
    tpu.vector_store %arg11[%c0_6, %c0_7, %c0_8], %8 {strides = array<i32>} : memref<8x8x512xf32, #tpu.memory_space<vmem>>, vector<8x8x512xf32>,
    %c0_9 = arith.constant 0 : index
    %c0_10 = arith.constant 0 : index
    %10 = vector.load %arg2[%c0_9, %c0_10] : memref<128x512xbf16, #tpu.memory_space<vmem>>, vector<128x512xbf16>
    %cst_11 = arith.constant 0.000000e+00 : f32
    %11 = vector.broadcast %cst_11 : f32 to vector<8x128xf32>
    %cst_12 = arith.constant 0.000000e+00 : f32
    %12 = vector.broadcast %cst_12 : f32 to vector<8x128xf32>
    %c0_i32 = arith.constant 0 : i32
    %13 = arith.index_cast %c0_i32 : i32 to index
    %c0_13 = arith.constant 0 : index
    %c0_14 = arith.constant 0 : index
    %14 = vector.load %arg11[%13, %c0_13, %c0_14] : memref<8x8x512xf32, #tpu.memory_space<vmem>>, vector<1x8x512xf32>
    %15 = vector.shape_cast %14 : vector<1x8x512xf32> to vector<8x512xf32>
    %16 = arith.truncf %11 : vector<8x128xf32> to vector<8x128xbf16>
    %cst_15 = arith.constant dense<0.000000e+00> : vector<8x512xf32>
    %17 = tpu.matmul %16, %10, %cst_15 {dimension_numbers = #tpu.dot_dimension_numbers<[1], [0], [0], [1], [0, 0, 1, 1], [], []>} : vector<8x128xbf16>, vector<128x512xbf16>, vector<8x512xf32> -> vector<8x512xf32>
    %18 = arith.addf %15, %17 : vector<8x512xf32>
    %19 = vector.extract_strided_slice %18 {offsets = [0, 0], sizes = [8, 384], strides = [1, 1]} : vector<8x512xf32> to vector<8x384xf32>
    %20 = arith.negf %19 : vector<8x384xf32>
    %21 = math.exp %20 : vector<8x384xf32>
    %cst_16 = arith.constant 1.000000e+00 : f32
    %22 = vector.broadcast %cst_16 : f32 to vector<8x384xf32>
    %23 = arith.addf %22, %21 : vector<8x384xf32>
    %24 = arith.divf %22, %23 : vector<8x384xf32>
    %25 = vector.extract_strided_slice %24 {offsets = [0, 0], sizes = [8, 128], strides = [1, 1]} : vector<8x384xf32> to vector<8x128xf32>
    %26 = vector.extract_strided_slice %24 {offsets = [0, 128], sizes = [8, 128], strides = [1, 1]} : vector<8x384xf32> to vector<8x128xf32>
    %27 = vector.extract_strided_slice %24 {offsets = [0, 256], sizes = [8, 128], strides = [1, 1]} : vector<8x384xf32> to vector<8x128xf32>
    %28 = vector.extract_strided_slice %18 {offsets = [0, 384], sizes = [8, 128], strides = [1, 1]} : vector<8x512xf32> to vector<8x128xf32>
    %29 = math.tanh %28 : vector<8x128xf32>
    %30 = arith.mulf %26, %12 : vector<8x128xf32>
    %31 = arith.mulf %25, %29 : vector<8x128xf32>
    %32 = arith.addf %30, %31 : vector<8x128xf32>
    %33 = math.tanh %32 : vector<8x128xf32>
    %34 = arith.mulf %27, %33 : vector<8x128xf32>
    %35 = arith.index_cast %c0_i32 : i32 to index
    %c0_17 = arith.constant 0 : index
    %c0_18 = arith.constant 0 : index
    %36 = vector.load %arg10[%35, %c0_17, %c0_18] : memref<8x8x128xf32, #tpu.memory_space<vmem>>, vector<1x8x128xf32>
    %37 = vector.shape_cast %36 : vector<1x8x128xf32> to vector<8x128xf32>
    %38 = vector.shape_cast %34 : vector<8x128xf32> to vector<1x8x128xf32>
    tpu.vector_store %arg10[%35, %c0_17, %c0_18], %38 {strides = array<i32>} : memref<8x8x128xf32, #tpu.memory_space<vmem>>, vector<1x8x128xf32>,
    %c1_i32 = arith.constant 1 : i32
    %39 = arith.index_cast %c1_i32 : i32 to index
    %c0_19 = arith.constant 0 : index
    %c0_20 = arith.constant 0 : index
    %40 = vector.load %arg11[%39, %c0_19, %c0_20] : memref<8x8x512xf32, #tpu.memory_space<vmem>>, vector<1x8x512xf32>
    %41 = vector.shape_cast %40 : vector<1x8x512xf32> to vector<8x512xf32>
    %42 = arith.truncf %34 : vector<8x128xf32> to vector<8x128xbf16>
    %cst_21 = arith.constant dense<0.000000e+00> : vector<8x512xf32>
    %43 = tpu.matmul %42, %10, %cst_21 {dimension_numbers = #tpu.dot_dimension_numbers<[1], [0], [0], [1], [0, 0, 1, 1], [], []>} : vector<8x128xbf16>, vector<128x512xbf16>, vector<8x512xf32> -> vector<8x512xf32>
    %44 = arith.addf %41, %43 : vector<8x512xf32>
    %45 = vector.extract_strided_slice %44 {offsets = [0, 0], sizes = [8, 384], strides = [1, 1]} : vector<8x512xf32> to vector<8x384xf32>
    %46 = arith.negf %45 : vector<8x384xf32>
    %47 = math.exp %46 : vector<8x384xf32>
    %cst_22 = arith.constant 1.000000e+00 : f32
    %48 = vector.broadcast %cst_22 : f32 to vector<8x384xf32>
    %49 = arith.addf %48, %47 : vector<8x384xf32>
    %50 = arith.divf %48, %49 : vector<8x384xf32>
    %51 = vector.extract_strided_slice %50 {offsets = [0, 0], sizes = [8, 128], strides = [1, 1]} : vector<8x384xf32> to vector<8x128xf32>
    %52 = vector.extract_strided_slice %50 {offsets = [0, 128], sizes = [8, 128], strides = [1, 1]} : vector<8x384xf32> to vector<8x128xf32>
    %53 = vector.extract_strided_slice %50 {offsets = [0, 256], sizes = [8, 128], strides = [1, 1]} : vector<8x384xf32> to vector<8x128xf32>
    %54 = vector.extract_strided_slice %44 {offsets = [0, 384], sizes = [8, 128], strides = [1, 1]} : vector<8x512xf32> to vector<8x128xf32>
    %55 = math.tanh %54 : vector<8x128xf32>
    %56 = arith.mulf %52, %32 : vector<8x128xf32>
    %57 = arith.mulf %51, %55 : vector<8x128xf32>
    %58 = arith.addf %56, %57 : vector<8x128xf32>
    %59 = math.tanh %58 : vector<8x128xf32>
    %60 = arith.mulf %53, %59 : vector<8x128xf32>
    %61 = arith.index_cast %c1_i32 : i32 to index
    %c0_23 = arith.constant 0 : index
    %c0_24 = arith.constant 0 : index
    %62 = vector.load %arg10[%61, %c0_23, %c0_24] : memref<8x8x128xf32, #tpu.memory_space<vmem>>, vector<1x8x128xf32>
    %63 = vector.shape_cast %62 : vector<1x8x128xf32> to vector<8x128xf32>
    %64 = vector.shape_cast %60 : vector<8x128xf32> to vector<1x8x128xf32>
    tpu.vector_store %arg10[%61, %c0_23, %c0_24], %64 {strides = array<i32>} : memref<8x8x128xf32, #tpu.memory_space<vmem>>, vector<1x8x128xf32>,
    %c2_i32 = arith.constant 2 : i32
    %65 = arith.index_cast %c2_i32 : i32 to index
    %c0_25 = arith.constant 0 : index
    %c0_26 = arith.constant 0 : index
    %66 = vector.load %arg11[%65, %c0_25, %c0_26] : memref<8x8x512xf32, #tpu.memory_space<vmem>>, vector<1x8x512xf32>
    %67 = vector.shape_cast %66 : vector<1x8x512xf32> to vector<8x512xf32>
    %68 = arith.truncf %60 : vector<8x128xf32> to vector<8x128xbf16>
    %cst_27 = arith.constant dense<0.000000e+00> : vector<8x512xf32>
    %69 = tpu.matmul %68, %10, %cst_27 {dimension_numbers = #tpu.dot_dimension_numbers<[1], [0], [0], [1], [0, 0, 1, 1], [], []>} : vector<8x128xbf16>, vector<128x512xbf16>, vector<8x512xf32> -> vector<8x512xf32>
    %70 = arith.addf %67, %69 : vector<8x512xf32>
    %71 = vector.extract_strided_slice %70 {offsets = [0, 0], sizes = [8, 384], strides = [1, 1]} : vector<8x512xf32> to vector<8x384xf32>
    %72 = arith.negf %71 : vector<8x384xf32>
    %73 = math.exp %72 : vector<8x384xf32>
    %cst_28 = arith.constant 1.000000e+00 : f32
    %74 = vector.broadcast %cst_28 : f32 to vector<8x384xf32>
    %75 = arith.addf %74, %73 : vector<8x384xf32>
    %76 = arith.divf %74, %75 : vector<8x384xf32>
    %77 = vector.extract_strided_slice %76 {offsets = [0, 0], sizes = [8, 128], strides = [1, 1]} : vector<8x384xf32> to vector<8x128xf32>
    %78 = vector.extract_strided_slice %76 {offsets = [0, 128], sizes = [8, 128], strides = [1, 1]} : vector<8x384xf32> to vector<8x128xf32>
    %79 = vector.extract_strided_slice %76 {offsets = [0, 256], sizes = [8, 128], strides = [1, 1]} : vector<8x384xf32> to vector<8x128xf32>
    %80 = vector.extract_strided_slice %70 {offsets = [0, 384], sizes = [8, 128], strides = [1, 1]} : vector<8x512xf32> to vector<8x128xf32>
    %81 = math.tanh %80 : vector<8x128xf32>
    %82 = arith.mulf %78, %58 : vector<8x128xf32>
    %83 = arith.mulf %77, %81 : vector<8x128xf32>
    %84 = arith.addf %82, %83 : vector<8x128xf32>
    %85 = math.tanh %84 : vector<8x128xf32>
    %86 = arith.mulf %79, %85 : vector<8x128xf32>
    %87 = arith.index_cast %c2_i32 : i32 to index
    %c0_29 = arith.constant 0 : index
    %c0_30 = arith.constant 0 : index
    %88 = vector.load %arg10[%87, %c0_29, %c0_30] : memref<8x8x128xf32, #tpu.memory_space<vmem>>, vector<1x8x128xf32>
    %89 = vector.shape_cast %88 : vector<1x8x128xf32> to vector<8x128xf32>
    %90 = vector.shape_cast %86 : vector<8x128xf32> to vector<1x8x128xf32>
    tpu.vector_store %arg10[%87, %c0_29, %c0_30], %90 {strides = array<i32>} : memref<8x8x128xf32, #tpu.memory_space<vmem>>, vector<1x8x128xf32>,
    %c3_i32 = arith.constant 3 : i32
    %91 = arith.index_cast %c3_i32 : i32 to index
    %c0_31 = arith.constant 0 : index
    %c0_32 = arith.constant 0 : index
    %92 = vector.load %arg11[%91, %c0_31, %c0_32] : memref<8x8x512xf32, #tpu.memory_space<vmem>>, vector<1x8x512xf32>
    %93 = vector.shape_cast %92 : vector<1x8x512xf32> to vector<8x512xf32>
    %94 = arith.truncf %86 : vector<8x128xf32> to vector<8x128xbf16>
    %cst_33 = arith.constant dense<0.000000e+00> : vector<8x512xf32>
    %95 = tpu.matmul %94, %10, %cst_33 {dimension_numbers = #tpu.dot_dimension_numbers<[1], [0], [0], [1], [0, 0, 1, 1], [], []>} : vector<8x128xbf16>, vector<128x512xbf16>, vector<8x512xf32> -> vector<8x512xf32>
    %96 = arith.addf %93, %95 : vector<8x512xf32>
    %97 = vector.extract_strided_slice %96 {offsets = [0, 0], sizes = [8, 384], strides = [1, 1]} : vector<8x512xf32> to vector<8x384xf32>
    %98 = arith.negf %97 : vector<8x384xf32>
    %99 = math.exp %98 : vector<8x384xf32>
    %cst_34 = arith.constant 1.000000e+00 : f32
    %100 = vector.broadcast %cst_34 : f32 to vector<8x384xf32>
    %101 = arith.addf %100, %99 : vector<8x384xf32>
    %102 = arith.divf %100, %101 : vector<8x384xf32>
    %103 = vector.extract_strided_slice %102 {offsets = [0, 0], sizes = [8, 128], strides = [1, 1]} : vector<8x384xf32> to vector<8x128xf32>
    %104 = vector.extract_strided_slice %102 {offsets = [0, 128], sizes = [8, 128], strides = [1, 1]} : vector<8x384xf32> to vector<8x128xf32>
    %105 = vector.extract_strided_slice %102 {offsets = [0, 256], sizes = [8, 128], strides = [1, 1]} : vector<8x384xf32> to vector<8x128xf32>
    %106 = vector.extract_strided_slice %96 {offsets = [0, 384], sizes = [8, 128], strides = [1, 1]} : vector<8x512xf32> to vector<8x128xf32>
    %107 = math.tanh %106 : vector<8x128xf32>
    %108 = arith.mulf %104, %84 : vector<8x128xf32>
    %109 = arith.mulf %103, %107 : vector<8x128xf32>
    %110 = arith.addf %108, %109 : vector<8x128xf32>
    %111 = math.tanh %110 : vector<8x128xf32>
    %112 = arith.mulf %105, %111 : vector<8x128xf32>
    %113 = arith.index_cast %c3_i32 : i32 to index
    %c0_35 = arith.constant 0 : index
    %c0_36 = arith.constant 0 : index
    %114 = vector.load %arg10[%113, %c0_35, %c0_36] : memref<8x8x128xf32, #tpu.memory_space<vmem>>, vector<1x8x128xf32>
    %115 = vector.shape_cast %114 : vector<1x8x128xf32> to vector<8x128xf32>
    %116 = vector.shape_cast %112 : vector<8x128xf32> to vector<1x8x128xf32>
    tpu.vector_store %arg10[%113, %c0_35, %c0_36], %116 {strides = array<i32>} : memref<8x8x128xf32, #tpu.memory_space<vmem>>, vector<1x8x128xf32>,
    %c4_i32 = arith.constant 4 : i32
    %117 = arith.index_cast %c4_i32 : i32 to index
    %c0_37 = arith.constant 0 : index
    %c0_38 = arith.constant 0 : index
    %118 = vector.load %arg11[%117, %c0_37, %c0_38] : memref<8x8x512xf32, #tpu.memory_space<vmem>>, vector<1x8x512xf32>
    %119 = vector.shape_cast %118 : vector<1x8x512xf32> to vector<8x512xf32>
    %120 = arith.truncf %112 : vector<8x128xf32> to vector<8x128xbf16>
    %cst_39 = arith.constant dense<0.000000e+00> : vector<8x512xf32>
    %121 = tpu.matmul %120, %10, %cst_39 {dimension_numbers = #tpu.dot_dimension_numbers<[1], [0], [0], [1], [0, 0, 1, 1], [], []>} : vector<8x128xbf16>, vector<128x512xbf16>, vector<8x512xf32> -> vector<8x512xf32>
    %122 = arith.addf %119, %121 : vector<8x512xf32>
    %123 = vector.extract_strided_slice %122 {offsets = [0, 0], sizes = [8, 384], strides = [1, 1]} : vector<8x512xf32> to vector<8x384xf32>
    %124 = arith.negf %123 : vector<8x384xf32>
    %125 = math.exp %124 : vector<8x384xf32>
    %cst_40 = arith.constant 1.000000e+00 : f32
    %126 = vector.broadcast %cst_40 : f32 to vector<8x384xf32>
    %127 = arith.addf %126, %125 : vector<8x384xf32>
    %128 = arith.divf %126, %127 : vector<8x384xf32>
    %129 = vector.extract_strided_slice %128 {offsets = [0, 0], sizes = [8, 128], strides = [1, 1]} : vector<8x384xf32> to vector<8x128xf32>
    %130 = vector.extract_strided_slice %128 {offsets = [0, 128], sizes = [8, 128], strides = [1, 1]} : vector<8x384xf32> to vector<8x128xf32>
    %131 = vector.extract_strided_slice %128 {offsets = [0, 256], sizes = [8, 128], strides = [1, 1]} : vector<8x384xf32> to vector<8x128xf32>
    %132 = vector.extract_strided_slice %122 {offsets = [0, 384], sizes = [8, 128], strides = [1, 1]} : vector<8x512xf32> to vector<8x128xf32>
    %133 = math.tanh %132 : vector<8x128xf32>
    %134 = arith.mulf %130, %110 : vector<8x128xf32>
    %135 = arith.mulf %129, %133 : vector<8x128xf32>
    %136 = arith.addf %134, %135 : vector<8x128xf32>
    %137 = math.tanh %136 : vector<8x128xf32>
    %138 = arith.mulf %131, %137 : vector<8x128xf32>
    %139 = arith.index_cast %c4_i32 : i32 to index
    %c0_41 = arith.constant 0 : index
    %c0_42 = arith.constant 0 : index
    %140 = vector.load %arg10[%139, %c0_41, %c0_42] : memref<8x8x128xf32, #tpu.memory_space<vmem>>, vector<1x8x128xf32>
    %141 = vector.shape_cast %140 : vector<1x8x128xf32> to vector<8x128xf32>
    %142 = vector.shape_cast %138 : vector<8x128xf32> to vector<1x8x128xf32>
    tpu.vector_store %arg10[%139, %c0_41, %c0_42], %142 {strides = array<i32>} : memref<8x8x128xf32, #tpu.memory_space<vmem>>, vector<1x8x128xf32>,
    %c5_i32 = arith.constant 5 : i32
    %143 = arith.index_cast %c5_i32 : i32 to index
    %c0_43 = arith.constant 0 : index
    %c0_44 = arith.constant 0 : index
    %144 = vector.load %arg11[%143, %c0_43, %c0_44] : memref<8x8x512xf32, #tpu.memory_space<vmem>>, vector<1x8x512xf32>
    %145 = vector.shape_cast %144 : vector<1x8x512xf32> to vector<8x512xf32>
    %146 = arith.truncf %138 : vector<8x128xf32> to vector<8x128xbf16>
    %cst_45 = arith.constant dense<0.000000e+00> : vector<8x512xf32>
    %147 = tpu.matmul %146, %10, %cst_45 {dimension_numbers = #tpu.dot_dimension_numbers<[1], [0], [0], [1], [0, 0, 1, 1], [], []>} : vector<8x128xbf16>, vector<128x512xbf16>, vector<8x512xf32> -> vector<8x512xf32>
    %148 = arith.addf %145, %147 : vector<8x512xf32>
    %149 = vector.extract_strided_slice %148 {offsets = [0, 0], sizes = [8, 384], strides = [1, 1]} : vector<8x512xf32> to vector<8x384xf32>
    %150 = arith.negf %149 : vector<8x384xf32>
    %151 = math.exp %150 : vector<8x384xf32>
    %cst_46 = arith.constant 1.000000e+00 : f32
    %152 = vector.broadcast %cst_46 : f32 to vector<8x384xf32>
    %153 = arith.addf %152, %151 : vector<8x384xf32>
    %154 = arith.divf %152, %153 : vector<8x384xf32>
    %155 = vector.extract_strided_slice %154 {offsets = [0, 0], sizes = [8, 128], strides = [1, 1]} : vector<8x384xf32> to vector<8x128xf32>
    %156 = vector.extract_strided_slice %154 {offsets = [0, 128], sizes = [8, 128], strides = [1, 1]} : vector<8x384xf32> to vector<8x128xf32>
    %157 = vector.extract_strided_slice %154 {offsets = [0, 256], sizes = [8, 128], strides = [1, 1]} : vector<8x384xf32> to vector<8x128xf32>
    %158 = vector.extract_strided_slice %148 {offsets = [0, 384], sizes = [8, 128], strides = [1, 1]} : vector<8x512xf32> to vector<8x128xf32>
    %159 = math.tanh %158 : vector<8x128xf32>
    %160 = arith.mulf %156, %136 : vector<8x128xf32>
    %161 = arith.mulf %155, %159 : vector<8x128xf32>
    %162 = arith.addf %160, %161 : vector<8x128xf32>
    %163 = math.tanh %162 : vector<8x128xf32>
    %164 = arith.mulf %157, %163 : vector<8x128xf32>
    %165 = arith.index_cast %c5_i32 : i32 to index
    %c0_47 = arith.constant 0 : index
    %c0_48 = arith.constant 0 : index
    %166 = vector.load %arg10[%165, %c0_47, %c0_48] : memref<8x8x128xf32, #tpu.memory_space<vmem>>, vector<1x8x128xf32>
    %167 = vector.shape_cast %166 : vector<1x8x128xf32> to vector<8x128xf32>
    %168 = vector.shape_cast %164 : vector<8x128xf32> to vector<1x8x128xf32>
    tpu.vector_store %arg10[%165, %c0_47, %c0_48], %168 {strides = array<i32>} : memref<8x8x128xf32, #tpu.memory_space<vmem>>, vector<1x8x128xf32>,
    %c6_i32 = arith.constant 6 : i32
    %169 = arith.index_cast %c6_i32 : i32 to index
    %c0_49 = arith.constant 0 : index
    %c0_50 = arith.constant 0 : index
    %170 = vector.load %arg11[%169, %c0_49, %c0_50] : memref<8x8x512xf32, #tpu.memory_space<vmem>>, vector<1x8x512xf32>
    %171 = vector.shape_cast %170 : vector<1x8x512xf32> to vector<8x512xf32>
    %172 = arith.truncf %164 : vector<8x128xf32> to vector<8x128xbf16>
    %cst_51 = arith.constant dense<0.000000e+00> : vector<8x512xf32>
    %173 = tpu.matmul %172, %10, %cst_51 {dimension_numbers = #tpu.dot_dimension_numbers<[1], [0], [0], [1], [0, 0, 1, 1], [], []>} : vector<8x128xbf16>, vector<128x512xbf16>, vector<8x512xf32> -> vector<8x512xf32>
    %174 = arith.addf %171, %173 : vector<8x512xf32>
    %175 = vector.extract_strided_slice %174 {offsets = [0, 0], sizes = [8, 384], strides = [1, 1]} : vector<8x512xf32> to vector<8x384xf32>
    %176 = arith.negf %175 : vector<8x384xf32>
    %177 = math.exp %176 : vector<8x384xf32>
    %cst_52 = arith.constant 1.000000e+00 : f32
    %178 = vector.broadcast %cst_52 : f32 to vector<8x384xf32>
    %179 = arith.addf %178, %177 : vector<8x384xf32>
    %180 = arith.divf %178, %179 : vector<8x384xf32>
    %181 = vector.extract_strided_slice %180 {offsets = [0, 0], sizes = [8, 128], strides = [1, 1]} : vector<8x384xf32> to vector<8x128xf32>
    %182 = vector.extract_strided_slice %180 {offsets = [0, 128], sizes = [8, 128], strides = [1, 1]} : vector<8x384xf32> to vector<8x128xf32>
    %183 = vector.extract_strided_slice %180 {offsets = [0, 256], sizes = [8, 128], strides = [1, 1]} : vector<8x384xf32> to vector<8x128xf32>
    %184 = vector.extract_strided_slice %174 {offsets = [0, 384], sizes = [8, 128], strides = [1, 1]} : vector<8x512xf32> to vector<8x128xf32>
    %185 = math.tanh %184 : vector<8x128xf32>
    %186 = arith.mulf %182, %162 : vector<8x128xf32>
    %187 = arith.mulf %181, %185 : vector<8x128xf32>
    %188 = arith.addf %186, %187 : vector<8x128xf32>
    %189 = math.tanh %188 : vector<8x128xf32>
    %190 = arith.mulf %183, %189 : vector<8x128xf32>
    %191 = arith.index_cast %c6_i32 : i32 to index
    %c0_53 = arith.constant 0 : index
    %c0_54 = arith.constant 0 : index
    %192 = vector.load %arg10[%191, %c0_53, %c0_54] : memref<8x8x128xf32, #tpu.memory_space<vmem>>, vector<1x8x128xf32>
    %193 = vector.shape_cast %192 : vector<1x8x128xf32> to vector<8x128xf32>
    %194 = vector.shape_cast %190 : vector<8x128xf32> to vector<1x8x128xf32>
    tpu.vector_store %arg10[%191, %c0_53, %c0_54], %194 {strides = array<i32>} : memref<8x8x128xf32, #tpu.memory_space<vmem>>, vector<1x8x128xf32>,
    %c7_i32 = arith.constant 7 : i32
    %195 = arith.index_cast %c7_i32 : i32 to index
    %c0_55 = arith.constant 0 : index
    %c0_56 = arith.constant 0 : index
    %196 = vector.load %arg11[%195, %c0_55, %c0_56] : memref<8x8x512xf32, #tpu.memory_space<vmem>>, vector<1x8x512xf32>
    %197 = vector.shape_cast %196 : vector<1x8x512xf32> to vector<8x512xf32>
    %198 = arith.truncf %190 : vector<8x128xf32> to vector<8x128xbf16>
    %cst_57 = arith.constant dense<0.000000e+00> : vector<8x512xf32>
    %199 = tpu.matmul %198, %10, %cst_57 {dimension_numbers = #tpu.dot_dimension_numbers<[1], [0], [0], [1], [0, 0, 1, 1], [], []>} : vector<8x128xbf16>, vector<128x512xbf16>, vector<8x512xf32> -> vector<8x512xf32>
    %200 = arith.addf %197, %199 : vector<8x512xf32>
    %201 = vector.extract_strided_slice %200 {offsets = [0, 0], sizes = [8, 384], strides = [1, 1]} : vector<8x512xf32> to vector<8x384xf32>
    %202 = arith.negf %201 : vector<8x384xf32>
    %203 = math.exp %202 : vector<8x384xf32>
    %cst_58 = arith.constant 1.000000e+00 : f32
    %204 = vector.broadcast %cst_58 : f32 to vector<8x384xf32>
    %205 = arith.addf %204, %203 : vector<8x384xf32>
    %206 = arith.divf %204, %205 : vector<8x384xf32>
    %207 = vector.extract_strided_slice %206 {offsets = [0, 0], sizes = [8, 128], strides = [1, 1]} : vector<8x384xf32> to vector<8x128xf32>
    %208 = vector.extract_strided_slice %206 {offsets = [0, 128], sizes = [8, 128], strides = [1, 1]} : vector<8x384xf32> to vector<8x128xf32>
    %209 = vector.extract_strided_slice %206 {offsets = [0, 256], sizes = [8, 128], strides = [1, 1]} : vector<8x384xf32> to vector<8x128xf32>
    %210 = vector.extract_strided_slice %200 {offsets = [0, 384], sizes = [8, 128], strides = [1, 1]} : vector<8x512xf32> to vector<8x128xf32>
    %211 = math.tanh %210 : vector<8x128xf32>
    %212 = arith.mulf %208, %188 : vector<8x128xf32>
    %213 = arith.mulf %207, %211 : vector<8x128xf32>
    %214 = arith.addf %212, %213 : vector<8x128xf32>
    %215 = math.tanh %214 : vector<8x128xf32>
    %216 = arith.mulf %209, %215 : vector<8x128xf32>
    %217 = arith.index_cast %c7_i32 : i32 to index
    %c0_59 = arith.constant 0 : index
    %c0_60 = arith.constant 0 : index
    %218 = vector.load %arg10[%217, %c0_59, %c0_60] : memref<8x8x128xf32, #tpu.memory_space<vmem>>, vector<1x8x128xf32>
    %219 = vector.shape_cast %218 : vector<1x8x128xf32> to vector<8x128xf32>
    %220 = vector.shape_cast %216 : vector<8x128xf32> to vector<1x8x128xf32>
    tpu.vector_store %arg10[%217, %c0_59, %c0_60], %220 {strides = array<i32>} : memref<8x8x128xf32, #tpu.memory_space<vmem>>, vector<1x8x128xf32>,
    %c8_i32 = arith.constant 8 : i32
    %c0_61 = arith.constant 0 : index
    %c0_62 = arith.constant 0 : index
    %c0_63 = arith.constant 0 : index
    %221 = vector.load %arg10[%c0_61, %c0_62, %c0_63] : memref<8x8x128xf32, #tpu.memory_space<vmem>>, vector<8x8x128xf32>
    %222 = vector.shape_cast %221 : vector<8x8x128xf32> to vector<64x128xf32>
    %223 = arith.truncf %222 : vector<64x128xf32> to vector<64x128xbf16>
    %c0_64 = arith.constant 0 : index
    %c0_65 = arith.constant 0 : index
    %224 = vector.load %arg4[%c0_64, %c0_65] : memref<128x512xbf16, #tpu.memory_space<vmem>>, vector<128x512xbf16>
    %cst_66 = arith.constant dense<0.000000e+00> : vector<64x512xf32>
    %225 = tpu.matmul %223, %224, %cst_66 {dimension_numbers = #tpu.dot_dimension_numbers<[1], [0], [0], [1], [0, 0, 1, 1], [], []>} : vector<64x128xbf16>, vector<128x512xbf16>, vector<64x512xf32> -> vector<64x512xf32>
    %c0_67 = arith.constant 0 : index
    %c0_68 = arith.constant 0 : index
    %226 = vector.load %arg6[%c0_67, %c0_68] : memref<1x512xf32, #tpu.memory_space<vmem>>, vector<1x512xf32>
    %227 = vector.broadcast %226 : vector<1x512xf32> to vector<64x512xf32>
    %228 = arith.addf %225, %227 : vector<64x512xf32>
    %229 = vector.shape_cast %228 : vector<64x512xf32> to vector<8x8x512xf32>
    %c0_69 = arith.constant 0 : index
    %c0_70 = arith.constant 0 : index
    %c0_71 = arith.constant 0 : index
    %230 = vector.load %arg11[%c0_69, %c0_70, %c0_71] : memref<8x8x512xf32, #tpu.memory_space<vmem>>, vector<8x8x512xf32>
    tpu.vector_store %arg11[%c0_69, %c0_70, %c0_71], %229 {strides = array<i32>} : memref<8x8x512xf32, #tpu.memory_space<vmem>>, vector<8x8x512xf32>,
    %c0_72 = arith.constant 0 : index
    %c0_73 = arith.constant 0 : index
    %231 = vector.load %arg5[%c0_72, %c0_73] : memref<128x512xbf16, #tpu.memory_space<vmem>>, vector<128x512xbf16>
    %cst_74 = arith.constant 0.000000e+00 : f32
    %232 = vector.broadcast %cst_74 : f32 to vector<8x128xf32>
    %cst_75 = arith.constant 0.000000e+00 : f32
    %233 = vector.broadcast %cst_75 : f32 to vector<8x128xf32>
    %c0_i32_76 = arith.constant 0 : i32
    %234 = arith.index_cast %c0_i32_76 : i32 to index
    %c0_77 = arith.constant 0 : index
    %c0_78 = arith.constant 0 : index
    %235 = vector.load %arg11[%234, %c0_77, %c0_78] : memref<8x8x512xf32, #tpu.memory_space<vmem>>, vector<1x8x512xf32>
    %236 = vector.shape_cast %235 : vector<1x8x512xf32> to vector<8x512xf32>
    %237 = arith.truncf %232 : vector<8x128xf32> to vector<8x128xbf16>
    %cst_79 = arith.constant dense<0.000000e+00> : vector<8x512xf32>
    %238 = tpu.matmul %237, %231, %cst_79 {dimension_numbers = #tpu.dot_dimension_numbers<[1], [0], [0], [1], [0, 0, 1, 1], [], []>} : vector<8x128xbf16>, vector<128x512xbf16>, vector<8x512xf32> -> vector<8x512xf32>
    %239 = arith.addf %236, %238 : vector<8x512xf32>
    %240 = vector.extract_strided_slice %239 {offsets = [0, 0], sizes = [8, 384], strides = [1, 1]} : vector<8x512xf32> to vector<8x384xf32>
    %241 = arith.negf %240 : vector<8x384xf32>
    %242 = math.exp %241 : vector<8x384xf32>
    %cst_80 = arith.constant 1.000000e+00 : f32
    %243 = vector.broadcast %cst_80 : f32 to vector<8x384xf32>
    %244 = arith.addf %243, %242 : vector<8x384xf32>
    %245 = arith.divf %243, %244 : vector<8x384xf32>
    %246 = vector.extract_strided_slice %245 {offsets = [0, 0], sizes = [8, 128], strides = [1, 1]} : vector<8x384xf32> to vector<8x128xf32>
    %247 = vector.extract_strided_slice %245 {offsets = [0, 128], sizes = [8, 128], strides = [1, 1]} : vector<8x384xf32> to vector<8x128xf32>
    %248 = vector.extract_strided_slice %245 {offsets = [0, 256], sizes = [8, 128], strides = [1, 1]} : vector<8x384xf32> to vector<8x128xf32>
    %249 = vector.extract_strided_slice %239 {offsets = [0, 384], sizes = [8, 128], strides = [1, 1]} : vector<8x512xf32> to vector<8x128xf32>
    %250 = math.tanh %249 : vector<8x128xf32>
    %251 = arith.mulf %247, %233 : vector<8x128xf32>
    %252 = arith.mulf %246, %250 : vector<8x128xf32>
    %253 = arith.addf %251, %252 : vector<8x128xf32>
    %254 = math.tanh %253 : vector<8x128xf32>
    %255 = arith.mulf %248, %254 : vector<8x128xf32>
    %c1_i32_81 = arith.constant 1 : i32
    %256 = arith.index_cast %c1_i32_81 : i32 to index
    %c0_82 = arith.constant 0 : index
    %c0_83 = arith.constant 0 : index
    %257 = vector.load %arg11[%256, %c0_82, %c0_83] : memref<8x8x512xf32, #tpu.memory_space<vmem>>, vector<1x8x512xf32>
    %258 = vector.shape_cast %257 : vector<1x8x512xf32> to vector<8x512xf32>
    %259 = arith.truncf %255 : vector<8x128xf32> to vector<8x128xbf16>
    %cst_84 = arith.constant dense<0.000000e+00> : vector<8x512xf32>
    %260 = tpu.matmul %259, %231, %cst_84 {dimension_numbers = #tpu.dot_dimension_numbers<[1], [0], [0], [1], [0, 0, 1, 1], [], []>} : vector<8x128xbf16>, vector<128x512xbf16>, vector<8x512xf32> -> vector<8x512xf32>
    %261 = arith.addf %258, %260 : vector<8x512xf32>
    %262 = vector.extract_strided_slice %261 {offsets = [0, 0], sizes = [8, 384], strides = [1, 1]} : vector<8x512xf32> to vector<8x384xf32>
    %263 = arith.negf %262 : vector<8x384xf32>
    %264 = math.exp %263 : vector<8x384xf32>
    %cst_85 = arith.constant 1.000000e+00 : f32
    %265 = vector.broadcast %cst_85 : f32 to vector<8x384xf32>
    %266 = arith.addf %265, %264 : vector<8x384xf32>
    %267 = arith.divf %265, %266 : vector<8x384xf32>
    %268 = vector.extract_strided_slice %267 {offsets = [0, 0], sizes = [8, 128], strides = [1, 1]} : vector<8x384xf32> to vector<8x128xf32>
    %269 = vector.extract_strided_slice %267 {offsets = [0, 128], sizes = [8, 128], strides = [1, 1]} : vector<8x384xf32> to vector<8x128xf32>
    %270 = vector.extract_strided_slice %267 {offsets = [0, 256], sizes = [8, 128], strides = [1, 1]} : vector<8x384xf32> to vector<8x128xf32>
    %271 = vector.extract_strided_slice %261 {offsets = [0, 384], sizes = [8, 128], strides = [1, 1]} : vector<8x512xf32> to vector<8x128xf32>
    %272 = math.tanh %271 : vector<8x128xf32>
    %273 = arith.mulf %269, %253 : vector<8x128xf32>
    %274 = arith.mulf %268, %272 : vector<8x128xf32>
    %275 = arith.addf %273, %274 : vector<8x128xf32>
    %276 = math.tanh %275 : vector<8x128xf32>
    %277 = arith.mulf %270, %276 : vector<8x128xf32>
    %c2_i32_86 = arith.constant 2 : i32
    %278 = arith.index_cast %c2_i32_86 : i32 to index
    %c0_87 = arith.constant 0 : index
    %c0_88 = arith.constant 0 : index
    %279 = vector.load %arg11[%278, %c0_87, %c0_88] : memref<8x8x512xf32, #tpu.memory_space<vmem>>, vector<1x8x512xf32>
    %280 = vector.shape_cast %279 : vector<1x8x512xf32> to vector<8x512xf32>
    %281 = arith.truncf %277 : vector<8x128xf32> to vector<8x128xbf16>
    %cst_89 = arith.constant dense<0.000000e+00> : vector<8x512xf32>
    %282 = tpu.matmul %281, %231, %cst_89 {dimension_numbers = #tpu.dot_dimension_numbers<[1], [0], [0], [1], [0, 0, 1, 1], [], []>} : vector<8x128xbf16>, vector<128x512xbf16>, vector<8x512xf32> -> vector<8x512xf32>
    %283 = arith.addf %280, %282 : vector<8x512xf32>
    %284 = vector.extract_strided_slice %283 {offsets = [0, 0], sizes = [8, 384], strides = [1, 1]} : vector<8x512xf32> to vector<8x384xf32>
    %285 = arith.negf %284 : vector<8x384xf32>
    %286 = math.exp %285 : vector<8x384xf32>
    %cst_90 = arith.constant 1.000000e+00 : f32
    %287 = vector.broadcast %cst_90 : f32 to vector<8x384xf32>
    %288 = arith.addf %287, %286 : vector<8x384xf32>
    %289 = arith.divf %287, %288 : vector<8x384xf32>
    %290 = vector.extract_strided_slice %289 {offsets = [0, 0], sizes = [8, 128], strides = [1, 1]} : vector<8x384xf32> to vector<8x128xf32>
    %291 = vector.extract_strided_slice %289 {offsets = [0, 128], sizes = [8, 128], strides = [1, 1]} : vector<8x384xf32> to vector<8x128xf32>
    %292 = vector.extract_strided_slice %289 {offsets = [0, 256], sizes = [8, 128], strides = [1, 1]} : vector<8x384xf32> to vector<8x128xf32>
    %293 = vector.extract_strided_slice %283 {offsets = [0, 384], sizes = [8, 128], strides = [1, 1]} : vector<8x512xf32> to vector<8x128xf32>
    %294 = math.tanh %293 : vector<8x128xf32>
    %295 = arith.mulf %291, %275 : vector<8x128xf32>
    %296 = arith.mulf %290, %294 : vector<8x128xf32>
    %297 = arith.addf %295, %296 : vector<8x128xf32>
    %298 = math.tanh %297 : vector<8x128xf32>
    %299 = arith.mulf %292, %298 : vector<8x128xf32>
    %c3_i32_91 = arith.constant 3 : i32
    %300 = arith.index_cast %c3_i32_91 : i32 to index
    %c0_92 = arith.constant 0 : index
    %c0_93 = arith.constant 0 : index
    %301 = vector.load %arg11[%300, %c0_92, %c0_93] : memref<8x8x512xf32, #tpu.memory_space<vmem>>, vector<1x8x512xf32>
    %302 = vector.shape_cast %301 : vector<1x8x512xf32> to vector<8x512xf32>
    %303 = arith.truncf %299 : vector<8x128xf32> to vector<8x128xbf16>
    %cst_94 = arith.constant dense<0.000000e+00> : vector<8x512xf32>
    %304 = tpu.matmul %303, %231, %cst_94 {dimension_numbers = #tpu.dot_dimension_numbers<[1], [0], [0], [1], [0, 0, 1, 1], [], []>} : vector<8x128xbf16>, vector<128x512xbf16>, vector<8x512xf32> -> vector<8x512xf32>
    %305 = arith.addf %302, %304 : vector<8x512xf32>
    %306 = vector.extract_strided_slice %305 {offsets = [0, 0], sizes = [8, 384], strides = [1, 1]} : vector<8x512xf32> to vector<8x384xf32>
    %307 = arith.negf %306 : vector<8x384xf32>
    %308 = math.exp %307 : vector<8x384xf32>
    %cst_95 = arith.constant 1.000000e+00 : f32
    %309 = vector.broadcast %cst_95 : f32 to vector<8x384xf32>
    %310 = arith.addf %309, %308 : vector<8x384xf32>
    %311 = arith.divf %309, %310 : vector<8x384xf32>
    %312 = vector.extract_strided_slice %311 {offsets = [0, 0], sizes = [8, 128], strides = [1, 1]} : vector<8x384xf32> to vector<8x128xf32>
    %313 = vector.extract_strided_slice %311 {offsets = [0, 128], sizes = [8, 128], strides = [1, 1]} : vector<8x384xf32> to vector<8x128xf32>
    %314 = vector.extract_strided_slice %311 {offsets = [0, 256], sizes = [8, 128], strides = [1, 1]} : vector<8x384xf32> to vector<8x128xf32>
    %315 = vector.extract_strided_slice %305 {offsets = [0, 384], sizes = [8, 128], strides = [1, 1]} : vector<8x512xf32> to vector<8x128xf32>
    %316 = math.tanh %315 : vector<8x128xf32>
    %317 = arith.mulf %313, %297 : vector<8x128xf32>
    %318 = arith.mulf %312, %316 : vector<8x128xf32>
    %319 = arith.addf %317, %318 : vector<8x128xf32>
    %320 = math.tanh %319 : vector<8x128xf32>
    %321 = arith.mulf %314, %320 : vector<8x128xf32>
    %c4_i32_96 = arith.constant 4 : i32
    %322 = arith.index_cast %c4_i32_96 : i32 to index
    %c0_97 = arith.constant 0 : index
    %c0_98 = arith.constant 0 : index
    %323 = vector.load %arg11[%322, %c0_97, %c0_98] : memref<8x8x512xf32, #tpu.memory_space<vmem>>, vector<1x8x512xf32>
    %324 = vector.shape_cast %323 : vector<1x8x512xf32> to vector<8x512xf32>
    %325 = arith.truncf %321 : vector<8x128xf32> to vector<8x128xbf16>
    %cst_99 = arith.constant dense<0.000000e+00> : vector<8x512xf32>
    %326 = tpu.matmul %325, %231, %cst_99 {dimension_numbers = #tpu.dot_dimension_numbers<[1], [0], [0], [1], [0, 0, 1, 1], [], []>} : vector<8x128xbf16>, vector<128x512xbf16>, vector<8x512xf32> -> vector<8x512xf32>
    %327 = arith.addf %324, %326 : vector<8x512xf32>
    %328 = vector.extract_strided_slice %327 {offsets = [0, 0], sizes = [8, 384], strides = [1, 1]} : vector<8x512xf32> to vector<8x384xf32>
    %329 = arith.negf %328 : vector<8x384xf32>
    %330 = math.exp %329 : vector<8x384xf32>
    %cst_100 = arith.constant 1.000000e+00 : f32
    %331 = vector.broadcast %cst_100 : f32 to vector<8x384xf32>
    %332 = arith.addf %331, %330 : vector<8x384xf32>
    %333 = arith.divf %331, %332 : vector<8x384xf32>
    %334 = vector.extract_strided_slice %333 {offsets = [0, 0], sizes = [8, 128], strides = [1, 1]} : vector<8x384xf32> to vector<8x128xf32>
    %335 = vector.extract_strided_slice %333 {offsets = [0, 128], sizes = [8, 128], strides = [1, 1]} : vector<8x384xf32> to vector<8x128xf32>
    %336 = vector.extract_strided_slice %333 {offsets = [0, 256], sizes = [8, 128], strides = [1, 1]} : vector<8x384xf32> to vector<8x128xf32>
    %337 = vector.extract_strided_slice %327 {offsets = [0, 384], sizes = [8, 128], strides = [1, 1]} : vector<8x512xf32> to vector<8x128xf32>
    %338 = math.tanh %337 : vector<8x128xf32>
    %339 = arith.mulf %335, %319 : vector<8x128xf32>
    %340 = arith.mulf %334, %338 : vector<8x128xf32>
    %341 = arith.addf %339, %340 : vector<8x128xf32>
    %342 = math.tanh %341 : vector<8x128xf32>
    %343 = arith.mulf %336, %342 : vector<8x128xf32>
    %c5_i32_101 = arith.constant 5 : i32
    %344 = arith.index_cast %c5_i32_101 : i32 to index
    %c0_102 = arith.constant 0 : index
    %c0_103 = arith.constant 0 : index
    %345 = vector.load %arg11[%344, %c0_102, %c0_103] : memref<8x8x512xf32, #tpu.memory_space<vmem>>, vector<1x8x512xf32>
    %346 = vector.shape_cast %345 : vector<1x8x512xf32> to vector<8x512xf32>
    %347 = arith.truncf %343 : vector<8x128xf32> to vector<8x128xbf16>
    %cst_104 = arith.constant dense<0.000000e+00> : vector<8x512xf32>
    %348 = tpu.matmul %347, %231, %cst_104 {dimension_numbers = #tpu.dot_dimension_numbers<[1], [0], [0], [1], [0, 0, 1, 1], [], []>} : vector<8x128xbf16>, vector<128x512xbf16>, vector<8x512xf32> -> vector<8x512xf32>
    %349 = arith.addf %346, %348 : vector<8x512xf32>
    %350 = vector.extract_strided_slice %349 {offsets = [0, 0], sizes = [8, 384], strides = [1, 1]} : vector<8x512xf32> to vector<8x384xf32>
    %351 = arith.negf %350 : vector<8x384xf32>
    %352 = math.exp %351 : vector<8x384xf32>
    %cst_105 = arith.constant 1.000000e+00 : f32
    %353 = vector.broadcast %cst_105 : f32 to vector<8x384xf32>
    %354 = arith.addf %353, %352 : vector<8x384xf32>
    %355 = arith.divf %353, %354 : vector<8x384xf32>
    %356 = vector.extract_strided_slice %355 {offsets = [0, 0], sizes = [8, 128], strides = [1, 1]} : vector<8x384xf32> to vector<8x128xf32>
    %357 = vector.extract_strided_slice %355 {offsets = [0, 128], sizes = [8, 128], strides = [1, 1]} : vector<8x384xf32> to vector<8x128xf32>
    %358 = vector.extract_strided_slice %355 {offsets = [0, 256], sizes = [8, 128], strides = [1, 1]} : vector<8x384xf32> to vector<8x128xf32>
    %359 = vector.extract_strided_slice %349 {offsets = [0, 384], sizes = [8, 128], strides = [1, 1]} : vector<8x512xf32> to vector<8x128xf32>
    %360 = math.tanh %359 : vector<8x128xf32>
    %361 = arith.mulf %357, %341 : vector<8x128xf32>
    %362 = arith.mulf %356, %360 : vector<8x128xf32>
    %363 = arith.addf %361, %362 : vector<8x128xf32>
    %364 = math.tanh %363 : vector<8x128xf32>
    %365 = arith.mulf %358, %364 : vector<8x128xf32>
    %c6_i32_106 = arith.constant 6 : i32
    %366 = arith.index_cast %c6_i32_106 : i32 to index
    %c0_107 = arith.constant 0 : index
    %c0_108 = arith.constant 0 : index
    %367 = vector.load %arg11[%366, %c0_107, %c0_108] : memref<8x8x512xf32, #tpu.memory_space<vmem>>, vector<1x8x512xf32>
    %368 = vector.shape_cast %367 : vector<1x8x512xf32> to vector<8x512xf32>
    %369 = arith.truncf %365 : vector<8x128xf32> to vector<8x128xbf16>
    %cst_109 = arith.constant dense<0.000000e+00> : vector<8x512xf32>
    %370 = tpu.matmul %369, %231, %cst_109 {dimension_numbers = #tpu.dot_dimension_numbers<[1], [0], [0], [1], [0, 0, 1, 1], [], []>} : vector<8x128xbf16>, vector<128x512xbf16>, vector<8x512xf32> -> vector<8x512xf32>
    %371 = arith.addf %368, %370 : vector<8x512xf32>
    %372 = vector.extract_strided_slice %371 {offsets = [0, 0], sizes = [8, 384], strides = [1, 1]} : vector<8x512xf32> to vector<8x384xf32>
    %373 = arith.negf %372 : vector<8x384xf32>
    %374 = math.exp %373 : vector<8x384xf32>
    %cst_110 = arith.constant 1.000000e+00 : f32
    %375 = vector.broadcast %cst_110 : f32 to vector<8x384xf32>
    %376 = arith.addf %375, %374 : vector<8x384xf32>
    %377 = arith.divf %375, %376 : vector<8x384xf32>
    %378 = vector.extract_strided_slice %377 {offsets = [0, 0], sizes = [8, 128], strides = [1, 1]} : vector<8x384xf32> to vector<8x128xf32>
    %379 = vector.extract_strided_slice %377 {offsets = [0, 128], sizes = [8, 128], strides = [1, 1]} : vector<8x384xf32> to vector<8x128xf32>
    %380 = vector.extract_strided_slice %377 {offsets = [0, 256], sizes = [8, 128], strides = [1, 1]} : vector<8x384xf32> to vector<8x128xf32>
    %381 = vector.extract_strided_slice %371 {offsets = [0, 384], sizes = [8, 128], strides = [1, 1]} : vector<8x512xf32> to vector<8x128xf32>
    %382 = math.tanh %381 : vector<8x128xf32>
    %383 = arith.mulf %379, %363 : vector<8x128xf32>
    %384 = arith.mulf %378, %382 : vector<8x128xf32>
    %385 = arith.addf %383, %384 : vector<8x128xf32>
    %386 = math.tanh %385 : vector<8x128xf32>
    %387 = arith.mulf %380, %386 : vector<8x128xf32>
    %c7_i32_111 = arith.constant 7 : i32
    %388 = arith.index_cast %c7_i32_111 : i32 to index
    %c0_112 = arith.constant 0 : index
    %c0_113 = arith.constant 0 : index
    %389 = vector.load %arg11[%388, %c0_112, %c0_113] : memref<8x8x512xf32, #tpu.memory_space<vmem>>, vector<1x8x512xf32>
    %390 = vector.shape_cast %389 : vector<1x8x512xf32> to vector<8x512xf32>
    %391 = arith.truncf %387 : vector<8x128xf32> to vector<8x128xbf16>
    %cst_114 = arith.constant dense<0.000000e+00> : vector<8x512xf32>
    %392 = tpu.matmul %391, %231, %cst_114 {dimension_numbers = #tpu.dot_dimension_numbers<[1], [0], [0], [1], [0, 0, 1, 1], [], []>} : vector<8x128xbf16>, vector<128x512xbf16>, vector<8x512xf32> -> vector<8x512xf32>
    %393 = arith.addf %390, %392 : vector<8x512xf32>
    %394 = vector.extract_strided_slice %393 {offsets = [0, 0], sizes = [8, 384], strides = [1, 1]} : vector<8x512xf32> to vector<8x384xf32>
    %395 = arith.negf %394 : vector<8x384xf32>
    %396 = math.exp %395 : vector<8x384xf32>
    %cst_115 = arith.constant 1.000000e+00 : f32
    %397 = vector.broadcast %cst_115 : f32 to vector<8x384xf32>
    %398 = arith.addf %397, %396 : vector<8x384xf32>
    %399 = arith.divf %397, %398 : vector<8x384xf32>
    %400 = vector.extract_strided_slice %399 {offsets = [0, 0], sizes = [8, 128], strides = [1, 1]} : vector<8x384xf32> to vector<8x128xf32>
    %401 = vector.extract_strided_slice %399 {offsets = [0, 128], sizes = [8, 128], strides = [1, 1]} : vector<8x384xf32> to vector<8x128xf32>
    %402 = vector.extract_strided_slice %399 {offsets = [0, 256], sizes = [8, 128], strides = [1, 1]} : vector<8x384xf32> to vector<8x128xf32>
    %403 = vector.extract_strided_slice %393 {offsets = [0, 384], sizes = [8, 128], strides = [1, 1]} : vector<8x512xf32> to vector<8x128xf32>
    %404 = math.tanh %403 : vector<8x128xf32>
    %405 = arith.mulf %401, %385 : vector<8x128xf32>
    %406 = arith.mulf %400, %404 : vector<8x128xf32>
    %407 = arith.addf %405, %406 : vector<8x128xf32>
    %408 = math.tanh %407 : vector<8x128xf32>
    %409 = arith.mulf %402, %408 : vector<8x128xf32>
    %c8_i32_116 = arith.constant 8 : i32
    %410 = arith.truncf %409 : vector<8x128xf32> to vector<8x128xbf16>
    %c0_117 = arith.constant 0 : index
    %c0_118 = arith.constant 0 : index
    %411 = vector.load %arg7[%c0_117, %c0_118] : memref<128x128xbf16, #tpu.memory_space<vmem>>, vector<128x128xbf16>
    %cst_119 = arith.constant dense<0.000000e+00> : vector<8x128xf32>
    %412 = tpu.matmul %410, %411, %cst_119 {dimension_numbers = #tpu.dot_dimension_numbers<[1], [0], [0], [1], [0, 0, 1, 1], [], []>} : vector<8x128xbf16>, vector<128x128xbf16>, vector<8x128xf32> -> vector<8x128xf32>
    %c0_120 = arith.constant 0 : index
    %c0_121 = arith.constant 0 : index
    %413 = vector.load %arg8[%c0_120, %c0_121] : memref<1x128xf32, #tpu.memory_space<vmem>>, vector<1x128xf32>
    %414 = vector.broadcast %413 : vector<1x128xf32> to vector<8x128xf32>
    %415 = arith.addf %412, %414 : vector<8x128xf32>
    %c0_122 = arith.constant 0 : index
    %c0_123 = arith.constant 0 : index
    %416 = vector.load %arg9[%c0_122, %c0_123] : memref<8x128xf32, #tpu.memory_space<vmem>>, vector<8x128xf32>
    tpu.vector_store %arg9[%c0_122, %c0_123], %415 {strides = array<i32>} : memref<8x128xf32, #tpu.memory_space<vmem>>, vector<8x128xf32>,
    return
  }
}

</mosaic_0001>

<llo_original>
// kernel: lstm_model_forward.1
$region0: #{lstm_model_forward.1}
  #allocation0 [shape = 'u32[]', space=smem, size = 0x4, offset = 0x4, fixed_abs, tag = 'smem constant byte address 0x4 - core index']
  #allocation1 [shape = 'u32[144,128]{1,0:T(1,128)}', space=vmem, size = 0x12000, scoped, tag = 'internal scratch']
  #allocation2 [shape = 'f32[8,8,128]{2,1,0:T(8,128)}', space=vmem, size = 0x8000, scoped, tag = 'scratch operand']
  #allocation3 [shape = 'f32[8,8,512]{2,1,0:T(8,128)}', space=vmem, size = 0x20000, scoped, tag = 'scratch operand']
  %s0 = inlined_call_operand.vmem [shape: f32[8,8,128], index: 0, kind: input, shape index: {}]
  %s1 = inlined_call_operand.vmem [shape: bf16[128,512], index: 1, kind: input, shape index: {}]
  %s2 = inlined_call_operand.vmem [shape: bf16[128,512], index: 2, kind: input, shape index: {}]
  %s3 = inlined_call_operand.vmem [shape: f32[1,512], index: 3, kind: input, shape index: {}]
  %s4 = inlined_call_operand.vmem [shape: bf16[128,512], index: 4, kind: input, shape index: {}]
  %s5 = inlined_call_operand.vmem [shape: bf16[128,512], index: 5, kind: input, shape index: {}]
  %s6 = inlined_call_operand.vmem [shape: f32[1,512], index: 6, kind: input, shape index: {}]
  %s7 = inlined_call_operand.vmem [shape: bf16[128,128], index: 7, kind: input, shape index: {}]
  %s8 = inlined_call_operand.vmem [shape: f32[1,128], index: 8, kind: input, shape index: {}]
  %s9 = inlined_call_operand.vmem [shape: f32[8,128], index: 9, kind: output, shape index: {}]
  %s10 = sld [smem:[#allocation0]]
  $region46: #{lstm_model_forward.1} parent=0
    _
  %s12 = ssub.s32 1, %s10
  %s13 = scalar_select 0, %s12, %s10
  // Predicated region
  $region2: #{lstm_model_forward.1} parent=0 // pred_check
    _
  $region3: #{lstm_model_forward.1} parent=0 // pred_check_branch
    %15 = sbr.rel (0) target = $region5
  $region4: #{lstm_model_forward.1} parent=0 // pred_region
    _
  $region5: #{lstm_model_forward.1} parent=0 // pred_fallthru
    _
  // Predicated region
  $region6: #{lstm_model_forward.1} parent=0 // pred_check
    _
  $region7: #{lstm_model_forward.1} parent=0 // pred_check_branch
    %17 = sbr.rel (0) target = $region9
  $region8: #{lstm_model_forward.1} parent=0 // pred_region
    _
  $region9: #{lstm_model_forward.1} parent=0 // pred_fallthru
    _
  // Predicated region
  $region10: #{lstm_model_forward.1} parent=0 // pred_check
    _
  $region11: #{lstm_model_forward.1} parent=0 // pred_check_branch
    %19 = sbr.rel (0) target = $region13
  $region12: #{lstm_model_forward.1} parent=0 // pred_region
    _
  $region13: #{lstm_model_forward.1} parent=0 // pred_fallthru
    _
  // Predicated region
  $region14: #{lstm_model_forward.1} parent=0 // pred_check
    _
  $region15: #{lstm_model_forward.1} parent=0 // pred_check_branch
    %21 = sbr.rel (0) target = $region17
  $region16: #{lstm_model_forward.1} parent=0 // pred_region
    _
  $region17: #{lstm_model_forward.1} parent=0 // pred_fallthru
    _
  // Predicated region
  $region18: #{lstm_model_forward.1} parent=0 // pred_check
    _
  $region19: #{lstm_model_forward.1} parent=0 // pred_check_branch
    %23 = sbr.rel (0) target = $region21
  $region20: #{lstm_model_forward.1} parent=0 // pred_region
    _
  $region21: #{lstm_model_forward.1} parent=0 // pred_fallthru
    _
  // Predicated region
  $region22: #{lstm_model_forward.1} parent=0 // pred_check
    _
  $region23: #{lstm_model_forward.1} parent=0 // pred_check_branch
    %25 = sbr.rel (0) target = $region25
  $region24: #{lstm_model_forward.1} parent=0 // pred_region
    _
  $region25: #{lstm_model_forward.1} parent=0 // pred_fallthru
    _
  // Predicated region
  $region26: #{lstm_model_forward.1} parent=0 // pred_check
    _
  $region27: #{lstm_model_forward.1} parent=0 // pred_check_branch
    %27 = sbr.rel (0) target = $region29
  $region28: #{lstm_model_forward.1} parent=0 // pred_region
    _
  $region29: #{lstm_model_forward.1} parent=0 // pred_fallthru
    _
  // Predicated region
  $region30: #{lstm_model_forward.1} parent=0 // pred_check
    _
  $region31: #{lstm_model_forward.1} parent=0 // pred_check_branch
    %29 = sbr.rel (0) target = $region33
  $region32: #{lstm_model_forward.1} parent=0 // pred_region
    _
  $region33: #{lstm_model_forward.1} parent=0 // pred_fallthru
    _
  // Predicated region
  $region34: #{lstm_model_forward.1} parent=0 // pred_check
    _
  $region35: #{lstm_model_forward.1} parent=0 // pred_check_branch
    %31 = sbr.rel (0) target = $region37
  $region36: #{lstm_model_forward.1} parent=0 // pred_region
    _
  $region37: #{lstm_model_forward.1} parent=0 // pred_fallthru
    _
  %v33 = vld [vmem:[%s0] sm:$0xff]
  %v34 = vld [vmem:[%s0 + $0x8] sm:$0xff]
  %v35 = vld [vmem:[%s0 + $0x10] sm:$0xff]
  %v36 = vld [vmem:[%s0 + $0x18] sm:$0xff]
  %v37 = vld [vmem:[%s0 + $0x20] sm:$0xff]
  %v38 = vld [vmem:[%s0 + $0x28] sm:$0xff]
  %v39 = vld [vmem:[%s0 + $0x30] sm:$0xff]
  %v40 = vld [vmem:[%s0 + $0x38] sm:$0xff]
  %v41 = vpack.c.bf16 %v34, %v33
  %v42 = vpack.c.bf16 %v36, %v35
  %v43 = vpack.c.bf16 %v38, %v37
  %v44 = vpack.c.bf16 %v40, %v39
  %v45 = vld [vmem:[%s1] sm:$0xff]
  %v46 = vld [vmem:[%s1 + $0x8] sm:$0xff]
  %v47 = vld [vmem:[%s1 + $0x10] sm:$0xff]
  %v48 = vld [vmem:[%s1 + $0x18] sm:$0xff]
  %v49 = vld [vmem:[%s1 + $0x20] sm:$0xff]
  %v50 = vld [vmem:[%s1 + $0x28] sm:$0xff]
  %v51 = vld [vmem:[%s1 + $0x30] sm:$0xff]
  %v52 = vld [vmem:[%s1 + $0x38] sm:$0xff]
  %v53 = vld [vmem:[%s1 + $0x40] sm:$0xff]
  %v54 = vld [vmem:[%s1 + $0x48] sm:$0xff]
  %v55 = vld [vmem:[%s1 + $0x50] sm:$0xff]
  %v56 = vld [vmem:[%s1 + $0x58] sm:$0xff]
  %v57 = vld [vmem:[%s1 + $0x60] sm:$0xff]
  %v58 = vld [vmem:[%s1 + $0x68] sm:$0xff]
  %v59 = vld [vmem:[%s1 + $0x70] sm:$0xff]
  %v60 = vld [vmem:[%s1 + $0x78] sm:$0xff]
  %v61 = vld [vmem:[%s1 + $0x80] sm:$0xff]
  %v62 = vld [vmem:[%s1 + $0x88] sm:$0xff]
  %v63 = vld [vmem:[%s1 + $0x90] sm:$0xff]
  %v64 = vld [vmem:[%s1 + $0x98] sm:$0xff]
  %v65 = vld [vmem:[%s1 + $0xa0] sm:$0xff]
  %v66 = vld [vmem:[%s1 + $0xa8] sm:$0xff]
  %v67 = vld [vmem:[%s1 + $0xb0] sm:$0xff]
  %v68 = vld [vmem:[%s1 + $0xb8] sm:$0xff]
  %v69 = vld [vmem:[%s1 + $0xc0] sm:$0xff]
  %v70 = vld [vmem:[%s1 + $0xc8] sm:$0xff]
  %v71 = vld [vmem:[%s1 + $0xd0] sm:$0xff]
  %v72 = vld [vmem:[%s1 + $0xd8] sm:$0xff]
  %v73 = vld [vmem:[%s1 + $0xe0] sm:$0xff]
  %v74 = vld [vmem:[%s1 + $0xe8] sm:$0xff]
  %v75 = vld [vmem:[%s1 + $0xf0] sm:$0xff]
  %v76 = vld [vmem:[%s1 + $0xf8] sm:$0xff]
  %v77 = vld [vmem:[%s3] sm:$0xf]
  %v79 = vlaneseq
  %v80 = vshrl.u32 %v79, 7
  %v81 = vsub.s32 0, %v80
  %v82 = vrot.slane %v77, %v81
  %v83 = vlaneseq
  %v84 = vshrl.u32 %v83, 7
  %v85 = vsub.s32 1, %v84
  %v86 = vrot.slane %v77, %v85
  %v87 = vlaneseq
  %v88 = vshrl.u32 %v87, 7
  %v89 = vsub.s32 2, %v88
  %v90 = vrot.slane %v77, %v89
  %v91 = vlaneseq
  %v92 = vshrl.u32 %v91, 7
  %v93 = vsub.s32 3, %v92
  %v94 = vrot.slane %v77, %v93
  %v131 = vunpack.c.l.b16 %v45
  %v132 = vunpack.c.h.b16 %v45
  %v133 = vunpack.c.l.b16 %v46
  %v134 = vunpack.c.h.b16 %v46
  %v135 = vunpack.c.l.b16 %v47
  %v136 = vunpack.c.h.b16 %v47
  %v137 = vunpack.c.l.b16 %v48
  %v138 = vunpack.c.h.b16 %v48
  %v139 = vunpack.c.l.b16 %v49
  %v140 = vunpack.c.h.b16 %v49
  %v141 = vunpack.c.l.b16 %v50
  %v142 = vunpack.c.h.b16 %v50
  %v143 = vunpack.c.l.b16 %v51
  %v144 = vunpack.c.h.b16 %v51
  %v145 = vunpack.c.l.b16 %v52
  %v146 = vunpack.c.h.b16 %v52
  %v147 = vunpack.c.l.b16 %v53
  %v148 = vunpack.c.h.b16 %v53
  %v149 = vunpack.c.l.b16 %v54
  %v150 = vunpack.c.h.b16 %v54
  %v151 = vunpack.c.l.b16 %v55
  %v152 = vunpack.c.h.b16 %v55
  %v153 = vunpack.c.l.b16 %v56
  %v154 = vunpack.c.h.b16 %v56
  %v155 = vunpack.c.l.b16 %v57
  %v156 = vunpack.c.h.b16 %v57
  %v157 = vunpack.c.l.b16 %v58
  %v158 = vunpack.c.h.b16 %v58
  %v159 = vunpack.c.l.b16 %v59
  %v160 = vunpack.c.h.b16 %v59
  %v161 = vunpack.c.l.b16 %v60
  %v162 = vunpack.c.h.b16 %v60
  %v163 = vunpack.c.l.b16 %v61
  %v164 = vunpack.c.h.b16 %v61
  %v165 = vunpack.c.l.b16 %v62
  %v166 = vunpack.c.h.b16 %v62
  %v167 = vunpack.c.l.b16 %v63
  %v168 = vunpack.c.h.b16 %v63
  %v169 = vunpack.c.l.b16 %v64
  %v170 = vunpack.c.h.b16 %v64
  %v171 = vunpack.c.l.b16 %v65
  %v172 = vunpack.c.h.b16 %v65
  %v173 = vunpack.c.l.b16 %v66
  %v174 = vunpack.c.h.b16 %v66
  %v175 = vunpack.c.l.b16 %v67
  %v176 = vunpack.c.h.b16 %v67
  %v177 = vunpack.c.l.b16 %v68
  %v178 = vunpack.c.h.b16 %v68
  %v179 = vunpack.c.l.b16 %v69
  %v180 = vunpack.c.h.b16 %v69
  %v181 = vunpack.c.l.b16 %v70
  %v182 = vunpack.c.h.b16 %v70
  %v183 = vunpack.c.l.b16 %v71
  %v184 = vunpack.c.h.b16 %v71
  %v185 = vunpack.c.l.b16 %v72
  %v186 = vunpack.c.h.b16 %v72
  %v187 = vunpack.c.l.b16 %v73
  %v188 = vunpack.c.h.b16 %v73
  %v189 = vunpack.c.l.b16 %v74
  %v190 = vunpack.c.h.b16 %v74
  %v191 = vunpack.c.l.b16 %v75
  %v192 = vunpack.c.h.b16 %v75
  %v193 = vunpack.c.l.b16 %v76
  %v194 = vunpack.c.h.b16 %v76
  %v195 = vpack.c.b16 %v135, %v131
  %v196 = vpack.c.b16 %v136, %v132
  %v197 = vpack.c.b16 %v137, %v133
  %v198 = vpack.c.b16 %v138, %v134
  %v199 = vpack.c.b16 %v143, %v139
  %v200 = vpack.c.b16 %v144, %v140
  %v201 = vpack.c.b16 %v145, %v141
  %v202 = vpack.c.b16 %v146, %v142
  %v203 = vpack.c.b16 %v151, %v147
  %v204 = vpack.c.b16 %v152, %v148
  %v205 = vpack.c.b16 %v153, %v149
  %v206 = vpack.c.b16 %v154, %v150
  %v207 = vpack.c.b16 %v159, %v155
  %v208 = vpack.c.b16 %v160, %v156
  %v209 = vpack.c.b16 %v161, %v157
  %v210 = vpack.c.b16 %v162, %v158
  %v211 = vpack.c.b16 %v167, %v163
  %v212 = vpack.c.b16 %v168, %v164
  %v213 = vpack.c.b16 %v169, %v165
  %v214 = vpack.c.b16 %v170, %v166
  %v215 = vpack.c.b16 %v175, %v171
  %v216 = vpack.c.b16 %v176, %v172
  %v217 = vpack.c.b16 %v177, %v173
  %v218 = vpack.c.b16 %v178, %v174
  %v219 = vpack.c.b16 %v183, %v179
  %v220 = vpack.c.b16 %v184, %v180
  %v221 = vpack.c.b16 %v185, %v181
  %v222 = vpack.c.b16 %v186, %v182
  %v223 = vpack.c.b16 %v191, %v187
  %v224 = vpack.c.b16 %v192, %v188
  %v225 = vpack.c.b16 %v193, %v189
  %v226 = vpack.c.b16 %v194, %v190
  %259 = vmatprep.subr.bf16.mxu0 %v196
  %260 = vmatpush1.bf16.msra.mxu0 %v195
  %261 = vmatprep.subr.bf16.mxu0 %v200
  %262 = vmatpush1.bf16.msra.mxu0 %v199
  %263 = vmatprep.subr.bf16.mxu0 %v204
  %264 = vmatpush1.bf16.msra.mxu0 %v203
  %265 = vmatprep.subr.bf16.mxu0 %v208
  %266 = vmatpush1.bf16.msra.mxu0 %v207
  %267 = vmatprep.subr.bf16.mxu0 %v212
  %268 = vmatpush1.bf16.msra.mxu0 %v211
  %269 = vmatprep.subr.bf16.mxu0 %v216
  %270 = vmatpush1.bf16.msra.mxu0 %v215
  %271 = vmatprep.subr.bf16.mxu0 %v220
  %272 = vmatpush1.bf16.msra.mxu0 %v219
  %273 = vmatprep.subr.bf16.mxu0 %v224
  %274 = vmatpush1.bf16.msra.mxu0 %v223
  %275 = vmatprep.subr.bf16.mxu0 0
  %276 = vmatpush1.bf16.msra.mxu0 0
  %277 = vmatprep.subr.bf16.mxu0 0
  %278 = vmatpush1.bf16.msra.mxu0 0
  %279 = vmatprep.subr.bf16.mxu0 0
  %280 = vmatpush1.bf16.msra.mxu0 0
  %281 = vmatprep.subr.bf16.mxu0 0
  %282 = vmatpush1.bf16.msra.mxu0 0
  %283 = vmatprep.subr.bf16.mxu0 0
  %284 = vmatpush1.bf16.msra.mxu0 0
  %285 = vmatprep.subr.bf16.mxu0 0
  %286 = vmatpush1.bf16.msra.mxu0 0
  %287 = vmatprep.subr.bf16.mxu0 0
  %288 = vmatpush1.bf16.msra.mxu0 0
  %289 = vmatprep.subr.bf16.mxu0 0
  %290 = vmatpush1.bf16.msra.mxu0 0
  %291 = vmatprep.mubr.bf16.mxu0 0
  %292 = vmatmul.mubr.bf16.gmra.mrb[0].mxu0 %v41
  %v293 = vpop.f32.mrb[0].mxu0
  %v294 = vadd.f32 %v82, %v293
  %v295 = vpop.f32.mrb[0].mxu0
  %v296 = vadd.f32 %v86, %v295
  %v297 = vpop.f32.mrb[0].mxu0
  %v298 = vadd.f32 %v82, %v297
  %v299 = vpop.f32.mrb[0].mxu0
  %v300 = vadd.f32 %v86, %v299
  %301 = vmatprep.mubr.bf16.mxu0 0
  %302 = vmatmul.mubr.bf16.gmra.mrb[0].mxu0 %v42
  %v303 = vpop.f32.mrb[0].mxu0
  %v304 = vadd.f32 %v82, %v303
  %v305 = vpop.f32.mrb[0].mxu0
  %v306 = vadd.f32 %v86, %v305
  %v307 = vpop.f32.mrb[0].mxu0
  %v308 = vadd.f32 %v82, %v307
  %v309 = vpop.f32.mrb[0].mxu0
  %v310 = vadd.f32 %v86, %v309
  %311 = vmatprep.mubr.bf16.mxu0 0
  %312 = vmatmul.mubr.bf16.gmra.mrb[0].mxu0 %v43
  %v313 = vpop.f32.mrb[0].mxu0
  %v314 = vadd.f32 %v82, %v313
  %v315 = vpop.f32.mrb[0].mxu0
  %v316 = vadd.f32 %v86, %v315
  %v317 = vpop.f32.mrb[0].mxu0
  %v318 = vadd.f32 %v82, %v317
  %v319 = vpop.f32.mrb[0].mxu0
  %v320 = vadd.f32 %v86, %v319
  %321 = vmatprep.mubr.bf16.mxu0 0
  %322 = vmatmul.mubr.bf16.gmra.mrb[0].mxu0 %v44
  %v323 = vpop.f32.mrb[0].mxu0
  %v324 = vadd.f32 %v82, %v323
  %v325 = vpop.f32.mrb[0].mxu0
  %v326 = vadd.f32 %v86, %v325
  %v327 = vpop.f32.mrb[0].mxu0
  %v328 = vadd.f32 %v82, %v327
  %v329 = vpop.f32.mrb[0].mxu0
  %v330 = vadd.f32 %v86, %v329
  %331 = vdwg.mxu0
  %332 = vmatprep.subr.bf16.mxu0 %v198
  %333 = vmatpush1.bf16.msra.mxu0 %v197
  %334 = vmatprep.subr.bf16.mxu0 %v202
  %335 = vmatpush1.bf16.msra.mxu0 %v201
  %336 = vmatprep.subr.bf16.mxu0 %v206
  %337 = vmatpush1.bf16.msra.mxu0 %v205
  %338 = vmatprep.subr.bf16.mxu0 %v210
  %339 = vmatpush1.bf16.msra.mxu0 %v209
  %340 = vmatprep.subr.bf16.mxu0 %v214
  %341 = vmatpush1.bf16.msra.mxu0 %v213
  %342 = vmatprep.subr.bf16.mxu0 %v218
  %343 = vmatpush1.bf16.msra.mxu0 %v217
  %344 = vmatprep.subr.bf16.mxu0 %v222
  %345 = vmatpush1.bf16.msra.mxu0 %v221
  %346 = vmatprep.subr.bf16.mxu0 %v226
  %347 = vmatpush1.bf16.msra.mxu0 %v225
  %348 = vmatprep.subr.bf16.mxu0 0
  %349 = vmatpush1.bf16.msra.mxu0 0
  %350 = vmatprep.subr.bf16.mxu0 0
  %351 = vmatpush1.bf16.msra.mxu0 0
  %352 = vmatprep.subr.bf16.mxu0 0
  %353 = vmatpush1.bf16.msra.mxu0 0
  %354 = vmatprep.subr.bf16.mxu0 0
  %355 = vmatpush1.bf16.msra.mxu0 0
  %356 = vmatprep.subr.bf16.mxu0 0
  %357 = vmatpush1.bf16.msra.mxu0 0
  %358 = vmatprep.subr.bf16.mxu0 0
  %359 = vmatpush1.bf16.msra.mxu0 0
  %360 = vmatprep.subr.bf16.mxu0 0
  %361 = vmatpush1.bf16.msra.mxu0 0
  %362 = vmatprep.subr.bf16.mxu0 0
  %363 = vmatpush1.bf16.msra.mxu0 0
  %364 = vmatprep.mubr.bf16.mxu0 0
  %365 = vmatmul.mubr.bf16.gmra.mrb[0].mxu0 %v41
  %v366 = vpop.f32.mrb[0].mxu0
  %v367 = vadd.f32 %v90, %v366
  %v368 = vpop.f32.mrb[0].mxu0
  %v369 = vadd.f32 %v94, %v368
  %v370 = vpop.f32.mrb[0].mxu0
  %v371 = vadd.f32 %v90, %v370
  %v372 = vpop.f32.mrb[0].mxu0
  %v373 = vadd.f32 %v94, %v372
  %374 = vmatprep.mubr.bf16.mxu0 0
  %375 = vmatmul.mubr.bf16.gmra.mrb[0].mxu0 %v42
  %v376 = vpop.f32.mrb[0].mxu0
  %v377 = vadd.f32 %v90, %v376
  %v378 = vpop.f32.mrb[0].mxu0
  %v379 = vadd.f32 %v94, %v378
  %v380 = vpop.f32.mrb[0].mxu0
  %v381 = vadd.f32 %v90, %v380
  %v382 = vpop.f32.mrb[0].mxu0
  %v383 = vadd.f32 %v94, %v382
  %384 = vmatprep.mubr.bf16.mxu0 0
  %385 = vmatmul.mubr.bf16.gmra.mrb[0].mxu0 %v43
  %v386 = vpop.f32.mrb[0].mxu0
  %v387 = vadd.f32 %v90, %v386
  %v388 = vpop.f32.mrb[0].mxu0
  %v389 = vadd.f32 %v94, %v388
  %v390 = vpop.f32.mrb[0].mxu0
  %v391 = vadd.f32 %v90, %v390
  %v392 = vpop.f32.mrb[0].mxu0
  %v393 = vadd.f32 %v94, %v392
  %394 = vmatprep.mubr.bf16.mxu0 0
  %395 = vmatmul.mubr.bf16.gmra.mrb[0].mxu0 %v44
  %v396 = vpop.f32.mrb[0].mxu0
  %v397 = vadd.f32 %v90, %v396
  %v398 = vpop.f32.mrb[0].mxu0
  %v399 = vadd.f32 %v94, %v398
  %v400 = vpop.f32.mrb[0].mxu0
  %v401 = vadd.f32 %v90, %v400
  %v402 = vpop.f32.mrb[0].mxu0
  %v403 = vadd.f32 %v94, %v402
  %404 = vdwg.mxu0
  %405 = vst [vmem:[#allocation3] sm:$0xff] %v294
  %406 = vst [vmem:[#allocation3 + $0x8] sm:$0xff] %v296
  %407 = vst [vmem:[#allocation3 + $0x10] sm:$0xff] %v367
  %408 = vst [vmem:[#allocation3 + $0x18] sm:$0xff] %v369
  %409 = vst [vmem:[#allocation3 + $0x20] sm:$0xff] %v298
  %410 = vst [vmem:[#allocation3 + $0x28] sm:$0xff] %v300
  %411 = vst [vmem:[#allocation3 + $0x30] sm:$0xff] %v371
  %412 = vst [vmem:[#allocation3 + $0x38] sm:$0xff] %v373
  %413 = vst [vmem:[#allocation3 + $0x40] sm:$0xff] %v304
  %414 = vst [vmem:[#allocation3 + $0x48] sm:$0xff] %v306
  %415 = vst [vmem:[#allocation3 + $0x50] sm:$0xff] %v377
  %416 = vst [vmem:[#allocation3 + $0x58] sm:$0xff] %v379
  %417 = vst [vmem:[#allocation3 + $0x60] sm:$0xff] %v308
  %418 = vst [vmem:[#allocation3 + $0x68] sm:$0xff] %v310
  %419 = vst [vmem:[#allocation3 + $0x70] sm:$0xff] %v381
  %420 = vst [vmem:[#allocation3 + $0x78] sm:$0xff] %v383
  %421 = vst [vmem:[#allocation3 + $0x80] sm:$0xff] %v314
  %422 = vst [vmem:[#allocation3 + $0x88] sm:$0xff] %v316
  %423 = vst [vmem:[#allocation3 + $0x90] sm:$0xff] %v387
  %424 = vst [vmem:[#allocation3 + $0x98] sm:$0xff] %v389
  %425 = vst [vmem:[#allocation3 + $0xa0] sm:$0xff] %v318
  %426 = vst [vmem:[#allocation3 + $0xa8] sm:$0xff] %v320
  %427 = vst [vmem:[#allocation3 + $0xb0] sm:$0xff] %v391
  %428 = vst [vmem:[#allocation3 + $0xb8] sm:$0xff] %v393
  %429 = vst [vmem:[#allocation3 + $0xc0] sm:$0xff] %v324
  %430 = vst [vmem:[#allocation3 + $0xc8] sm:$0xff] %v326
  %431 = vst [vmem:[#allocation3 + $0xd0] sm:$0xff] %v397
  %432 = vst [vmem:[#allocation3 + $0xd8] sm:$0xff] %v399
  %433 = vst [vmem:[#allocation3 + $0xe0] sm:$0xff] %v328
  %434 = vst [vmem:[#allocation3 + $0xe8] sm:$0xff] %v330
  %435 = vst [vmem:[#allocation3 + $0xf0] sm:$0xff] %v401
  %436 = vst [vmem:[#allocation3 + $0xf8] sm:$0xff] %v403
  %v437 = vld [vmem:[%s2] sm:$0xff]
  %v438 = vld [vmem:[%s2 + $0x8] sm:$0xff]
  %v439 = vld [vmem:[%s2 + $0x10] sm:$0xff]
  %v440 = vld [vmem:[%s2 + $0x18] sm:$0xff]
  %v441 = vld [vmem:[%s2 + $0x20] sm:$0xff]
  %v442 = vld [vmem:[%s2 + $0x28] sm:$0xff]
  %v443 = vld [vmem:[%s2 + $0x30] sm:$0xff]
  %v444 = vld [vmem:[%s2 + $0x38] sm:$0xff]
  %v445 = vld [vmem:[%s2 + $0x40] sm:$0xff]
  %v446 = vld [vmem:[%s2 + $0x48] sm:$0xff]
  %v447 = vld [vmem:[%s2 + $0x50] sm:$0xff]
  %v448 = vld [vmem:[%s2 + $0x58] sm:$0xff]
  %v449 = vld [vmem:[%s2 + $0x60] sm:$0xff]
  %v450 = vld [vmem:[%s2 + $0x68] sm:$0xff]
  %v451 = vld [vmem:[%s2 + $0x70] sm:$0xff]
  %v452 = vld [vmem:[%s2 + $0x78] sm:$0xff]
  %v453 = vld [vmem:[%s2 + $0x80] sm:$0xff]
  %v454 = vld [vmem:[%s2 + $0x88] sm:$0xff]
  %v455 = vld [vmem:[%s2 + $0x90] sm:$0xff]
  %v456 = vld [vmem:[%s2 + $0x98] sm:$0xff]
  %v457 = vld [vmem:[%s2 + $0xa0] sm:$0xff]
  %v458 = vld [vmem:[%s2 + $0xa8] sm:$0xff]
  %v459 = vld [vmem:[%s2 + $0xb0] sm:$0xff]
  %v460 = vld [vmem:[%s2 + $0xb8] sm:$0xff]
  %v461 = vld [vmem:[%s2 + $0xc0] sm:$0xff]
  %v462 = vld [vmem:[%s2 + $0xc8] sm:$0xff]
  %v463 = vld [vmem:[%s2 + $0xd0] sm:$0xff]
  %v464 = vld [vmem:[%s2 + $0xd8] sm:$0xff]
  %v465 = vld [vmem:[%s2 + $0xe0] sm:$0xff]
  %v466 = vld [vmem:[%s2 + $0xe8] sm:$0xff]
  %v467 = vld [vmem:[%s2 + $0xf0] sm:$0xff]
  %v468 = vld [vmem:[%s2 + $0xf8] sm:$0xff]
  %v469 = vld [vmem:[#allocation3] sm:$0xff]
  %v470 = vld [vmem:[#allocation3 + $0x8] sm:$0xff]
  %v471 = vld [vmem:[#allocation3 + $0x10] sm:$0xff]
  %v472 = vld [vmem:[#allocation3 + $0x18] sm:$0xff]
  %v505 = vunpack.c.l.b16 %v437
  %v506 = vunpack.c.h.b16 %v437
  %v507 = vunpack.c.l.b16 %v438
  %v508 = vunpack.c.h.b16 %v438
  %v509 = vunpack.c.l.b16 %v439
  %v510 = vunpack.c.h.b16 %v439
  %v511 = vunpack.c.l.b16 %v440
  %v512 = vunpack.c.h.b16 %v440
  %v513 = vunpack.c.l.b16 %v441
  %v514 = vunpack.c.h.b16 %v441
  %v515 = vunpack.c.l.b16 %v442
  %v516 = vunpack.c.h.b16 %v442
  %v517 = vunpack.c.l.b16 %v443
  %v518 = vunpack.c.h.b16 %v443
  %v519 = vunpack.c.l.b16 %v444
  %v520 = vunpack.c.h.b16 %v444
  %v521 = vunpack.c.l.b16 %v445
  %v522 = vunpack.c.h.b16 %v445
  %v523 = vunpack.c.l.b16 %v446
  %v524 = vunpack.c.h.b16 %v446
  %v525 = vunpack.c.l.b16 %v447
  %v526 = vunpack.c.h.b16 %v447
  %v527 = vunpack.c.l.b16 %v448
  %v528 = vunpack.c.h.b16 %v448
  %v529 = vunpack.c.l.b16 %v449
  %v530 = vunpack.c.h.b16 %v449
  %v531 = vunpack.c.l.b16 %v450
  %v532 = vunpack.c.h.b16 %v450
  %v533 = vunpack.c.l.b16 %v451
  %v534 = vunpack.c.h.b16 %v451
  %v535 = vunpack.c.l.b16 %v452
  %v536 = vunpack.c.h.b16 %v452
  %v537 = vunpack.c.l.b16 %v453
  %v538 = vunpack.c.h.b16 %v453
  %v539 = vunpack.c.l.b16 %v454
  %v540 = vunpack.c.h.b16 %v454
  %v541 = vunpack.c.l.b16 %v455
  %v542 = vunpack.c.h.b16 %v455
  %v543 = vunpack.c.l.b16 %v456
  %v544 = vunpack.c.h.b16 %v456
  %v545 = vunpack.c.l.b16 %v457
  %v546 = vunpack.c.h.b16 %v457
  %v547 = vunpack.c.l.b16 %v458
  %v548 = vunpack.c.h.b16 %v458
  %v549 = vunpack.c.l.b16 %v459
  %v550 = vunpack.c.h.b16 %v459
  %v551 = vunpack.c.l.b16 %v460
  %v552 = vunpack.c.h.b16 %v460
  %v553 = vunpack.c.l.b16 %v461
  %v554 = vunpack.c.h.b16 %v461
  %v555 = vunpack.c.l.b16 %v462
  %v556 = vunpack.c.h.b16 %v462
  %v557 = vunpack.c.l.b16 %v463
  %v558 = vunpack.c.h.b16 %v463
  %v559 = vunpack.c.l.b16 %v464
  %v560 = vunpack.c.h.b16 %v464
  %v561 = vunpack.c.l.b16 %v465
  %v562 = vunpack.c.h.b16 %v465
  %v563 = vunpack.c.l.b16 %v466
  %v564 = vunpack.c.h.b16 %v466
  %v565 = vunpack.c.l.b16 %v467
  %v566 = vunpack.c.h.b16 %v467
  %v567 = vunpack.c.l.b16 %v468
  %v568 = vunpack.c.h.b16 %v468
  %v569 = vpack.c.b16 %v509, %v505
  %v570 = vpack.c.b16 %v510, %v506
  %v571 = vpack.c.b16 %v511, %v507
  %v572 = vpack.c.b16 %v512, %v508
  %v573 = vpack.c.b16 %v517, %v513
  %v574 = vpack.c.b16 %v518, %v514
  %v575 = vpack.c.b16 %v519, %v515
  %v576 = vpack.c.b16 %v520, %v516
  %v577 = vpack.c.b16 %v525, %v521
  %v578 = vpack.c.b16 %v526, %v522
  %v579 = vpack.c.b16 %v527, %v523
  %v580 = vpack.c.b16 %v528, %v524
  %v581 = vpack.c.b16 %v533, %v529
  %v582 = vpack.c.b16 %v534, %v530
  %v583 = vpack.c.b16 %v535, %v531
  %v584 = vpack.c.b16 %v536, %v532
  %v585 = vpack.c.b16 %v541, %v537
  %v586 = vpack.c.b16 %v542, %v538
  %v587 = vpack.c.b16 %v543, %v539
  %v588 = vpack.c.b16 %v544, %v540
  %v589 = vpack.c.b16 %v549, %v545
  %v590 = vpack.c.b16 %v550, %v546
  %v591 = vpack.c.b16 %v551, %v547
  %v592 = vpack.c.b16 %v552, %v548
  %v593 = vpack.c.b16 %v557, %v553
  %v594 = vpack.c.b16 %v558, %v554
  %v595 = vpack.c.b16 %v559, %v555
  %v596 = vpack.c.b16 %v560, %v556
  %v597 = vpack.c.b16 %v565, %v561
  %v598 = vpack.c.b16 %v566, %v562
  %v599 = vpack.c.b16 %v567, %v563
  %v600 = vpack.c.b16 %v568, %v564
  %633 = vmatprep.subr.bf16.mxu0 %v570
  %634 = vmatpush1.bf16.msra.mxu0 %v569
  %635 = vmatprep.subr.bf16.mxu0 %v574
  %636 = vmatpush1.bf16.msra.mxu0 %v573
  %637 = vmatprep.subr.bf16.mxu0 %v578
  %638 = vmatpush1.bf16.msra.mxu0 %v577
  %639 = vmatprep.subr.bf16.mxu0 %v582
  %640 = vmatpush1.bf16.msra.mxu0 %v581
  %641 = vmatprep.subr.bf16.mxu0 %v586
  %642 = vmatpush1.bf16.msra.mxu0 %v585
  %643 = vmatprep.subr.bf16.mxu0 %v590
  %644 = vmatpush1.bf16.msra.mxu0 %v589
  %645 = vmatprep.subr.bf16.mxu0 %v594
  %646 = vmatpush1.bf16.msra.mxu0 %v593
  %647 = vmatprep.subr.bf16.mxu0 %v598
  %648 = vmatpush1.bf16.msra.mxu0 %v597
  %649 = vmatprep.subr.bf16.mxu0 0
  %650 = vmatpush1.bf16.msra.mxu0 0
  %651 = vmatprep.subr.bf16.mxu0 0
  %652 = vmatpush1.bf16.msra.mxu0 0
  %653 = vmatprep.subr.bf16.mxu0 0
  %654 = vmatpush1.bf16.msra.mxu0 0
  %655 = vmatprep.subr.bf16.mxu0 0
  %656 = vmatpush1.bf16.msra.mxu0 0
  %657 = vmatprep.subr.bf16.mxu0 0
  %658 = vmatpush1.bf16.msra.mxu0 0
  %659 = vmatprep.subr.bf16.mxu0 0
  %660 = vmatpush1.bf16.msra.mxu0 0
  %661 = vmatprep.subr.bf16.mxu0 0
  %662 = vmatpush1.bf16.msra.mxu0 0
  %663 = vmatprep.subr.bf16.mxu0 0
  %664 = vmatpush1.bf16.msra.mxu0 0
  %665 = vmatprep.mubr.bf16.mxu0 0
  %666 = vmatmul.mubr.bf16.gmra.mrb[0].mxu0 0
  %v667 = vpop.f32.mrb[0].mxu0
  %v668 = vadd.f32 0.0, %v667
  %v669 = vpop.f32.mrb[0].mxu0
  %v670 = vadd.f32 0.0, %v669
  %v671 = vpop.f32.mrb[0].mxu0
  %v672 = vpop.f32.mrb[0].mxu0
  %673 = vdwg.mxu0
  %674 = vmatprep.subr.bf16.mxu0 %v572
  %675 = vmatpush1.bf16.msra.mxu0 %v571
  %676 = vmatprep.subr.bf16.mxu0 %v576
  %677 = vmatpush1.bf16.msra.mxu0 %v575
  %678 = vmatprep.subr.bf16.mxu0 %v580
  %679 = vmatpush1.bf16.msra.mxu0 %v579
  %680 = vmatprep.subr.bf16.mxu0 %v584
  %681 = vmatpush1.bf16.msra.mxu0 %v583
  %682 = vmatprep.subr.bf16.mxu0 %v588
  %683 = vmatpush1.bf16.msra.mxu0 %v587
  %684 = vmatprep.subr.bf16.mxu0 %v592
  %685 = vmatpush1.bf16.msra.mxu0 %v591
  %686 = vmatprep.subr.bf16.mxu0 %v596
  %687 = vmatpush1.bf16.msra.mxu0 %v595
  %688 = vmatprep.subr.bf16.mxu0 %v600
  %689 = vmatpush1.bf16.msra.mxu0 %v599
  %690 = vmatprep.subr.bf16.mxu0 0
  %691 = vmatpush1.bf16.msra.mxu0 0
  %692 = vmatprep.subr.bf16.mxu0 0
  %693 = vmatpush1.bf16.msra.mxu0 0
  %694 = vmatprep.subr.bf16.mxu0 0
  %695 = vmatpush1.bf16.msra.mxu0 0
  %696 = vmatprep.subr.bf16.mxu0 0
  %697 = vmatpush1.bf16.msra.mxu0 0
  %698 = vmatprep.subr.bf16.mxu0 0
  %699 = vmatpush1.bf16.msra.mxu0 0
  %700 = vmatprep.subr.bf16.mxu0 0
  %701 = vmatpush1.bf16.msra.mxu0 0
  %702 = vmatprep.subr.bf16.mxu0 0
  %703 = vmatpush1.bf16.msra.mxu0 0
  %704 = vmatprep.subr.bf16.mxu0 0
  %705 = vmatpush1.bf16.msra.mxu0 0
  %706 = vmatprep.mubr.bf16.mxu0 0
  %707 = vmatmul.mubr.bf16.gmra.mrb[0].mxu0 0
  %v708 = vpop.f32.mrb[0].mxu0
  %v709 = vadd.f32 0.0, %v708
  %v710 = vpop.f32.mrb[0].mxu0
  %v711 = vadd.f32 0.0, %v710
  %v712 = vpop.f32.mrb[0].mxu0
  %v713 = vpop.f32.mrb[0].mxu0
  %714 = vdwg.mxu0
  %v715 = vadd.f32 %v469, %v668
  %v716 = vadd.f32 %v470, %v670
  %v717 = vadd.f32 %v471, %v709
  %v718 = vadd.f32 %v472, %v711
  %v719 = vxor.u32 %v715, 2147483648
  %v720 = vxor.u32 %v716, 2147483648
  %v721 = vxor.u32 %v717, 2147483648
  %v722 = vmul.f32 %v719, 1.442695
  %v723 = vpow.pop %v722
  %v724 = vmul.f32 %v720, 1.442695
  %v725 = vpow.pop %v724
  %v726 = vmul.f32 %v721, 1.442695
  %v727 = vpow.pop %v726
  %v728 = vadd.f32 %v723, 1.0
  %v729 = vadd.f32 %v725, 1.0
  %v730 = vadd.f32 %v727, 1.0
  %v731 = vrcp.pop %v728
  %v732 = vmul.f32 1.0, %v731
  %v733 = vrcp.pop %v729
  %v734 = vmul.f32 1.0, %v733
  %v735 = vrcp.pop %v730
  %v736 = vmul.f32 1.0, %v735
  %v737 = vtanh.pop %v718
  %v738 = vmul.f32 %v734, 0.0
  %v739 = vmul.f32 %v732, %v737
  %v740 = vadd.f32 %v738, %v739
  %v741 = vtanh.pop %v740
  %v742 = vmul.f32 %v736, %v741
  %743 = vst [vmem:[#allocation2] sm:$0xff] %v742
  %s744 = scalar_lea.vmem [#allocation3], 32
  %v745 = vld [vmem:[%s744] sm:$0xff]
  %v746 = vld [vmem:[%s744 + $0x8] sm:$0xff]
  %v747 = vld [vmem:[%s744 + $0x10] sm:$0xff]
  %v748 = vld [vmem:[%s744 + $0x18] sm:$0xff]
  %v749 = vpack.c.bf16 %v742, %v742
  %750 = vmatprep.subr.bf16.mxu0 %v570
  %751 = vmatpush1.bf16.msra.mxu0 %v569
  %752 = vmatprep.subr.bf16.mxu0 %v574
  %753 = vmatpush1.bf16.msra.mxu0 %v573
  %754 = vmatprep.subr.bf16.mxu0 %v578
  %755 = vmatpush1.bf16.msra.mxu0 %v577
  %756 = vmatprep.subr.bf16.mxu0 %v582
  %757 = vmatpush1.bf16.msra.mxu0 %v581
  %758 = vmatprep.subr.bf16.mxu0 %v586
  %759 = vmatpush1.bf16.msra.mxu0 %v585
  %760 = vmatprep.subr.bf16.mxu0 %v590
  %761 = vmatpush1.bf16.msra.mxu0 %v589
  %762 = vmatprep.subr.bf16.mxu0 %v594
  %763 = vmatpush1.bf16.msra.mxu0 %v593
  %764 = vmatprep.subr.bf16.mxu0 %v598
  %765 = vmatpush1.bf16.msra.mxu0 %v597
  %766 = vmatprep.subr.bf16.mxu0 0
  %767 = vmatpush1.bf16.msra.mxu0 0
  %768 = vmatprep.subr.bf16.mxu0 0
  %769 = vmatpush1.bf16.msra.mxu0 0
  %770 = vmatprep.subr.bf16.mxu0 0
  %771 = vmatpush1.bf16.msra.mxu0 0
  %772 = vmatprep.subr.bf16.mxu0 0
  %773 = vmatpush1.bf16.msra.mxu0 0
  %774 = vmatprep.subr.bf16.mxu0 0
  %775 = vmatpush1.bf16.msra.mxu0 0
  %776 = vmatprep.subr.bf16.mxu0 0
  %777 = vmatpush1.bf16.msra.mxu0 0
  %778 = vmatprep.subr.bf16.mxu0 0
  %779 = vmatpush1.bf16.msra.mxu0 0
  %780 = vmatprep.subr.bf16.mxu0 0
  %781 = vmatpush1.bf16.msra.mxu0 0
  %782 = vmatprep.mubr.bf16.mxu0 0
  %783 = vmatmul.mubr.bf16.gmra.mrb[0].mxu0 %v749
  %v784 = vpop.f32.mrb[0].mxu0
  %v785 = vadd.f32 0.0, %v784
  %v786 = vpop.f32.mrb[0].mxu0
  %v787 = vadd.f32 0.0, %v786
  %v788 = vpop.f32.mrb[0].mxu0
  %v789 = vpop.f32.mrb[0].mxu0
  %790 = vdwg.mxu0
  %791 = vmatprep.subr.bf16.mxu0 %v572
  %792 = vmatpush1.bf16.msra.mxu0 %v571
  %793 = vmatprep.subr.bf16.mxu0 %v576
  %794 = vmatpush1.bf16.msra.mxu0 %v575
  %795 = vmatprep.subr.bf16.mxu0 %v580
  %796 = vmatpush1.bf16.msra.mxu0 %v579
  %797 = vmatprep.subr.bf16.mxu0 %v584
  %798 = vmatpush1.bf16.msra.mxu0 %v583
  %799 = vmatprep.subr.bf16.mxu0 %v588
  %800 = vmatpush1.bf16.msra.mxu0 %v587
  %801 = vmatprep.subr.bf16.mxu0 %v592
  %802 = vmatpush1.bf16.msra.mxu0 %v591
  %803 = vmatprep.subr.bf16.mxu0 %v596
  %804 = vmatpush1.bf16.msra.mxu0 %v595
  %805 = vmatprep.subr.bf16.mxu0 %v600
  %806 = vmatpush1.bf16.msra.mxu0 %v599
  %807 = vmatprep.subr.bf16.mxu0 0
  %808 = vmatpush1.bf16.msra.mxu0 0
  %809 = vmatprep.subr.bf16.mxu0 0
  %810 = vmatpush1.bf16.msra.mxu0 0
  %811 = vmatprep.subr.bf16.mxu0 0
  %812 = vmatpush1.bf16.msra.mxu0 0
  %813 = vmatprep.subr.bf16.mxu0 0
  %814 = vmatpush1.bf16.msra.mxu0 0
  %815 = vmatprep.subr.bf16.mxu0 0
  %816 = vmatpush1.bf16.msra.mxu0 0
  %817 = vmatprep.subr.bf16.mxu0 0
  %818 = vmatpush1.bf16.msra.mxu0 0
  %819 = vmatprep.subr.bf16.mxu0 0
  %820 = vmatpush1.bf16.msra.mxu0 0
  %821 = vmatprep.subr.bf16.mxu0 0
  %822 = vmatpush1.bf16.msra.mxu0 0
  %823 = vmatprep.mubr.bf16.mxu0 0
  %824 = vmatmul.mubr.bf16.gmra.mrb[0].mxu0 %v749
  %v825 = vpop.f32.mrb[0].mxu0
  %v826 = vadd.f32 0.0, %v825
  %v827 = vpop.f32.mrb[0].mxu0
  %v828 = vadd.f32 0.0, %v827
  %v829 = vpop.f32.mrb[0].mxu0
  %v830 = vpop.f32.mrb[0].mxu0
  %831 = vdwg.mxu0
  %v832 = vadd.f32 %v745, %v785
  %v833 = vadd.f32 %v746, %v787
  %v834 = vadd.f32 %v747, %v826
  %v835 = vadd.f32 %v748, %v828
  %v836 = vxor.u32 %v832, 2147483648
  %v837 = vxor.u32 %v833, 2147483648
  %v838 = vxor.u32 %v834, 2147483648
  %v839 = vmul.f32 %v836, 1.442695
  %v840 = vpow.pop %v839
  %v841 = vmul.f32 %v837, 1.442695
  %v842 = vpow.pop %v841
  %v843 = vmul.f32 %v838, 1.442695
  %v844 = vpow.pop %v843
  %v845 = vadd.f32 %v840, 1.0
  %v846 = vadd.f32 %v842, 1.0
  %v847 = vadd.f32 %v844, 1.0
  %v848 = vrcp.pop %v845
  %v849 = vmul.f32 1.0, %v848
  %v850 = vrcp.pop %v846
  %v851 = vmul.f32 1.0, %v850
  %v852 = vrcp.pop %v847
  %v853 = vmul.f32 1.0, %v852
  %v854 = vtanh.pop %v835
  %v855 = vmul.f32 %v851, %v740
  %v856 = vmul.f32 %v849, %v854
  %v857 = vadd.f32 %v855, %v856
  %v858 = vtanh.pop %v857
  %v859 = vmul.f32 %v853, %v858
  %s860 = scalar_lea.vmem [#allocation2], 8
  %861 = vst [vmem:[%s860] sm:$0xff] %v859
  %s862 = scalar_lea.vmem [#allocation3], 64
  %v863 = vld [vmem:[%s862] sm:$0xff]
  %v864 = vld [vmem:[%s862 + $0x8] sm:$0xff]
  %v865 = vld [vmem:[%s862 + $0x10] sm:$0xff]
  %v866 = vld [vmem:[%s862 + $0x18] sm:$0xff]
  %v867 = vpack.c.bf16 %v859, %v859
  %868 = vmatprep.subr.bf16.mxu0 %v570
  %869 = vmatpush1.bf16.msra.mxu0 %v569
  %870 = vmatprep.subr.bf16.mxu0 %v574
  %871 = vmatpush1.bf16.msra.mxu0 %v573
  %872 = vmatprep.subr.bf16.mxu0 %v578
  %873 = vmatpush1.bf16.msra.mxu0 %v577
  %874 = vmatprep.subr.bf16.mxu0 %v582
  %875 = vmatpush1.bf16.msra.mxu0 %v581
  %876 = vmatprep.subr.bf16.mxu0 %v586
  %877 = vmatpush1.bf16.msra.mxu0 %v585
  %878 = vmatprep.subr.bf16.mxu0 %v590
  %879 = vmatpush1.bf16.msra.mxu0 %v589
  %880 = vmatprep.subr.bf16.mxu0 %v594
  %881 = vmatpush1.bf16.msra.mxu0 %v593
  %882 = vmatprep.subr.bf16.mxu0 %v598
  %883 = vmatpush1.bf16.msra.mxu0 %v597
  %884 = vmatprep.subr.bf16.mxu0 0
  %885 = vmatpush1.bf16.msra.mxu0 0
  %886 = vmatprep.subr.bf16.mxu0 0
  %887 = vmatpush1.bf16.msra.mxu0 0
  %888 = vmatprep.subr.bf16.mxu0 0
  %889 = vmatpush1.bf16.msra.mxu0 0
  %890 = vmatprep.subr.bf16.mxu0 0
  %891 = vmatpush1.bf16.msra.mxu0 0
  %892 = vmatprep.subr.bf16.mxu0 0
  %893 = vmatpush1.bf16.msra.mxu0 0
  %894 = vmatprep.subr.bf16.mxu0 0
  %895 = vmatpush1.bf16.msra.mxu0 0
  %896 = vmatprep.subr.bf16.mxu0 0
  %897 = vmatpush1.bf16.msra.mxu0 0
  %898 = vmatprep.subr.bf16.mxu0 0
  %899 = vmatpush1.bf16.msra.mxu0 0
  %900 = vmatprep.mubr.bf16.mxu0 0
  %901 = vmatmul.mubr.bf16.gmra.mrb[0].mxu0 %v867
  %v902 = vpop.f32.mrb[0].mxu0
  %v903 = vadd.f32 0.0, %v902
  %v904 = vpop.f32.mrb[0].mxu0
  %v905 = vadd.f32 0.0, %v904
  %v906 = vpop.f32.mrb[0].mxu0
  %v907 = vpop.f32.mrb[0].mxu0
  %908 = vdwg.mxu0
  %909 = vmatprep.subr.bf16.mxu0 %v572
  %910 = vmatpush1.bf16.msra.mxu0 %v571
  %911 = vmatprep.subr.bf16.mxu0 %v576
  %912 = vmatpush1.bf16.msra.mxu0 %v575
  %913 = vmatprep.subr.bf16.mxu0 %v580
  %914 = vmatpush1.bf16.msra.mxu0 %v579
  %915 = vmatprep.subr.bf16.mxu0 %v584
  %916 = vmatpush1.bf16.msra.mxu0 %v583
  %917 = vmatprep.subr.bf16.mxu0 %v588
  %918 = vmatpush1.bf16.msra.mxu0 %v587
  %919 = vmatprep.subr.bf16.mxu0 %v592
  %920 = vmatpush1.bf16.msra.mxu0 %v591
  %921 = vmatprep.subr.bf16.mxu0 %v596
  %922 = vmatpush1.bf16.msra.mxu0 %v595
  %923 = vmatprep.subr.bf16.mxu0 %v600
  %924 = vmatpush1.bf16.msra.mxu0 %v599
  %925 = vmatprep.subr.bf16.mxu0 0
  %926 = vmatpush1.bf16.msra.mxu0 0
  %927 = vmatprep.subr.bf16.mxu0 0
  %928 = vmatpush1.bf16.msra.mxu0 0
  %929 = vmatprep.subr.bf16.mxu0 0
  %930 = vmatpush1.bf16.msra.mxu0 0
  %931 = vmatprep.subr.bf16.mxu0 0
  %932 = vmatpush1.bf16.msra.mxu0 0
  %933 = vmatprep.subr.bf16.mxu0 0
  %934 = vmatpush1.bf16.msra.mxu0 0
  %935 = vmatprep.subr.bf16.mxu0 0
  %936 = vmatpush1.bf16.msra.mxu0 0
  %937 = vmatprep.subr.bf16.mxu0 0
  %938 = vmatpush1.bf16.msra.mxu0 0
  %939 = vmatprep.subr.bf16.mxu0 0
  %940 = vmatpush1.bf16.msra.mxu0 0
  %941 = vmatprep.mubr.bf16.mxu0 0
  %942 = vmatmul.mubr.bf16.gmra.mrb[0].mxu0 %v867
  %v943 = vpop.f32.mrb[0].mxu0
  %v944 = vadd.f32 0.0, %v943
  %v945 = vpop.f32.mrb[0].mxu0
  %v946 = vadd.f32 0.0, %v945
  %v947 = vpop.f32.mrb[0].mxu0
  %v948 = vpop.f32.mrb[0].mxu0
  %949 = vdwg.mxu0
  %v950 = vadd.f32 %v863, %v903
  %v951 = vadd.f32 %v864, %v905
  %v952 = vadd.f32 %v865, %v944
  %v953 = vadd.f32 %v866, %v946
  %v954 = vxor.u32 %v950, 2147483648
  %v955 = vxor.u32 %v951, 2147483648
  %v956 = vxor.u32 %v952, 2147483648
  %v957 = vmul.f32 %v954, 1.442695
  %v958 = vpow.pop %v957
  %v959 = vmul.f32 %v955, 1.442695
  %v960 = vpow.pop %v959
  %v961 = vmul.f32 %v956, 1.442695
  %v962 = vpow.pop %v961
  %v963 = vadd.f32 %v958, 1.0
  %v964 = vadd.f32 %v960, 1.0
  %v965 = vadd.f32 %v962, 1.0
  %v966 = vrcp.pop %v963
  %v967 = vmul.f32 1.0, %v966
  %v968 = vrcp.pop %v964
  %v969 = vmul.f32 1.0, %v968
  %v970 = vrcp.pop %v965
  %v971 = vmul.f32 1.0, %v970
  %v972 = vtanh.pop %v953
  %v973 = vmul.f32 %v969, %v857
  %v974 = vmul.f32 %v967, %v972
  %v975 = vadd.f32 %v973, %v974
  %v976 = vtanh.pop %v975
  %v977 = vmul.f32 %v971, %v976
  %s978 = scalar_lea.vmem [#allocation2], 16
  %979 = vst [vmem:[%s978] sm:$0xff] %v977
  %s980 = scalar_lea.vmem [#allocation3], 96
  %v981 = vld [vmem:[%s980] sm:$0xff]
  %v982 = vld [vmem:[%s980 + $0x8] sm:$0xff]
  %v983 = vld [vmem:[%s980 + $0x10] sm:$0xff]
  %v984 = vld [vmem:[%s980 + $0x18] sm:$0xff]
  %v985 = vpack.c.bf16 %v977, %v977
  %986 = vmatprep.subr.bf16.mxu0 %v570
  %987 = vmatpush1.bf16.msra.mxu0 %v569
  %988 = vmatprep.subr.bf16.mxu0 %v574
  %989 = vmatpush1.bf16.msra.mxu0 %v573
  %990 = vmatprep.subr.bf16.mxu0 %v578
  %991 = vmatpush1.bf16.msra.mxu0 %v577
  %992 = vmatprep.subr.bf16.mxu0 %v582
  %993 = vmatpush1.bf16.msra.mxu0 %v581
  %994 = vmatprep.subr.bf16.mxu0 %v586
  %995 = vmatpush1.bf16.msra.mxu0 %v585
  %996 = vmatprep.subr.bf16.mxu0 %v590
  %997 = vmatpush1.bf16.msra.mxu0 %v589
  %998 = vmatprep.subr.bf16.mxu0 %v594
  %999 = vmatpush1.bf16.msra.mxu0 %v593
  %1000 = vmatprep.subr.bf16.mxu0 %v598
  %1001 = vmatpush1.bf16.msra.mxu0 %v597
  %1002 = vmatprep.subr.bf16.mxu0 0
  %1003 = vmatpush1.bf16.msra.mxu0 0
  %1004 = vmatprep.subr.bf16.mxu0 0
  %1005 = vmatpush1.bf16.msra.mxu0 0
  %1006 = vmatprep.subr.bf16.mxu0 0
  %1007 = vmatpush1.bf16.msra.mxu0 0
  %1008 = vmatprep.subr.bf16.mxu0 0
  %1009 = vmatpush1.bf16.msra.mxu0 0
  %1010 = vmatprep.subr.bf16.mxu0 0
  %1011 = vmatpush1.bf16.msra.mxu0 0
  %1012 = vmatprep.subr.bf16.mxu0 0
  %1013 = vmatpush1.bf16.msra.mxu0 0
  %1014 = vmatprep.subr.bf16.mxu0 0
  %1015 = vmatpush1.bf16.msra.mxu0 0
  %1016 = vmatprep.subr.bf16.mxu0 0
  %1017 = vmatpush1.bf16.msra.mxu0 0
  %1018 = vmatprep.mubr.bf16.mxu0 0
  %1019 = vmatmul.mubr.bf16.gmra.mrb[0].mxu0 %v985
  %v1020 = vpop.f32.mrb[0].mxu0
  %v1021 = vadd.f32 0.0, %v1020
  %v1022 = vpop.f32.mrb[0].mxu0
  %v1023 = vadd.f32 0.0, %v1022
  %v1024 = vpop.f32.mrb[0].mxu0
  %v1025 = vpop.f32.mrb[0].mxu0
  %1026 = vdwg.mxu0
  %1027 = vmatprep.subr.bf16.mxu0 %v572
  %1028 = vmatpush1.bf16.msra.mxu0 %v571
  %1029 = vmatprep.subr.bf16.mxu0 %v576
  %1030 = vmatpush1.bf16.msra.mxu0 %v575
  %1031 = vmatprep.subr.bf16.mxu0 %v580
  %1032 = vmatpush1.bf16.msra.mxu0 %v579
  %1033 = vmatprep.subr.bf16.mxu0 %v584
  %1034 = vmatpush1.bf16.msra.mxu0 %v583
  %1035 = vmatprep.subr.bf16.mxu0 %v588
  %1036 = vmatpush1.bf16.msra.mxu0 %v587
  %1037 = vmatprep.subr.bf16.mxu0 %v592
  %1038 = vmatpush1.bf16.msra.mxu0 %v591
  %1039 = vmatprep.subr.bf16.mxu0 %v596
  %1040 = vmatpush1.bf16.msra.mxu0 %v595
  %1041 = vmatprep.subr.bf16.mxu0 %v600
  %1042 = vmatpush1.bf16.msra.mxu0 %v599
  %1043 = vmatprep.subr.bf16.mxu0 0
  %1044 = vmatpush1.bf16.msra.mxu0 0
  %1045 = vmatprep.subr.bf16.mxu0 0
  %1046 = vmatpush1.bf16.msra.mxu0 0
  %1047 = vmatprep.subr.bf16.mxu0 0
  %1048 = vmatpush1.bf16.msra.mxu0 0
  %1049 = vmatprep.subr.bf16.mxu0 0
  %1050 = vmatpush1.bf16.msra.mxu0 0
  %1051 = vmatprep.subr.bf16.mxu0 0
  %1052 = vmatpush1.bf16.msra.mxu0 0
  %1053 = vmatprep.subr.bf16.mxu0 0
  %1054 = vmatpush1.bf16.msra.mxu0 0
  %1055 = vmatprep.subr.bf16.mxu0 0
  %1056 = vmatpush1.bf16.msra.mxu0 0
  %1057 = vmatprep.subr.bf16.mxu0 0
  %1058 = vmatpush1.bf16.msra.mxu0 0
  %1059 = vmatprep.mubr.bf16.mxu0 0
  %1060 = vmatmul.mubr.bf16.gmra.mrb[0].mxu0 %v985
  %v1061 = vpop.f32.mrb[0].mxu0
  %v1062 = vadd.f32 0.0, %v1061
  %v1063 = vpop.f32.mrb[0].mxu0
  %v1064 = vadd.f32 0.0, %v1063
  %v1065 = vpop.f32.mrb[0].mxu0
  %v1066 = vpop.f32.mrb[0].mxu0
  %1067 = vdwg.mxu0
  %v1068 = vadd.f32 %v981, %v1021
  %v1069 = vadd.f32 %v982, %v1023
  %v1070 = vadd.f32 %v983, %v1062
  %v1071 = vadd.f32 %v984, %v1064
  %v1072 = vxor.u32 %v1068, 2147483648
  %v1073 = vxor.u32 %v1069, 2147483648
  %v1074 = vxor.u32 %v1070, 2147483648
  %v1075 = vmul.f32 %v1072, 1.442695
  %v1076 = vpow.pop %v1075
  %v1077 = vmul.f32 %v1073, 1.442695
  %v1078 = vpow.pop %v1077
  %v1079 = vmul.f32 %v1074, 1.442695
  %v1080 = vpow.pop %v1079
  %v1081 = vadd.f32 %v1076, 1.0
  %v1082 = vadd.f32 %v1078, 1.0
  %v1083 = vadd.f32 %v1080, 1.0
  %v1084 = vrcp.pop %v1081
  %v1085 = vmul.f32 1.0, %v1084
  %v1086 = vrcp.pop %v1082
  %v1087 = vmul.f32 1.0, %v1086
  %v1088 = vrcp.pop %v1083
  %v1089 = vmul.f32 1.0, %v1088
  %v1090 = vtanh.pop %v1071
  %v1091 = vmul.f32 %v1087, %v975
  %v1092 = vmul.f32 %v1085, %v1090
  %v1093 = vadd.f32 %v1091, %v1092
  %v1094 = vtanh.pop %v1093
  %v1095 = vmul.f32 %v1089, %v1094
  %s1096 = scalar_lea.vmem [#allocation2], 24
  %1097 = vst [vmem:[%s1096] sm:$0xff] %v1095
  %s1098 = scalar_lea.vmem [#allocation3], 128
  %v1099 = vld [vmem:[%s1098] sm:$0xff]
  %v1100 = vld [vmem:[%s1098 + $0x8] sm:$0xff]
  %v1101 = vld [vmem:[%s1098 + $0x10] sm:$0xff]
  %v1102 = vld [vmem:[%s1098 + $0x18] sm:$0xff]
  %v1103 = vpack.c.bf16 %v1095, %v1095
  %1104 = vmatprep.subr.bf16.mxu0 %v570
  %1105 = vmatpush1.bf16.msra.mxu0 %v569
  %1106 = vmatprep.subr.bf16.mxu0 %v574
  %1107 = vmatpush1.bf16.msra.mxu0 %v573
  %1108 = vmatprep.subr.bf16.mxu0 %v578
  %1109 = vmatpush1.bf16.msra.mxu0 %v577
  %1110 = vmatprep.subr.bf16.mxu0 %v582
  %1111 = vmatpush1.bf16.msra.mxu0 %v581
  %1112 = vmatprep.subr.bf16.mxu0 %v586
  %1113 = vmatpush1.bf16.msra.mxu0 %v585
  %1114 = vmatprep.subr.bf16.mxu0 %v590
  %1115 = vmatpush1.bf16.msra.mxu0 %v589
  %1116 = vmatprep.subr.bf16.mxu0 %v594
  %1117 = vmatpush1.bf16.msra.mxu0 %v593
  %1118 = vmatprep.subr.bf16.mxu0 %v598
  %1119 = vmatpush1.bf16.msra.mxu0 %v597
  %1120 = vmatprep.subr.bf16.mxu0 0
  %1121 = vmatpush1.bf16.msra.mxu0 0
  %1122 = vmatprep.subr.bf16.mxu0 0
  %1123 = vmatpush1.bf16.msra.mxu0 0
  %1124 = vmatprep.subr.bf16.mxu0 0
  %1125 = vmatpush1.bf16.msra.mxu0 0
  %1126 = vmatprep.subr.bf16.mxu0 0
  %1127 = vmatpush1.bf16.msra.mxu0 0
  %1128 = vmatprep.subr.bf16.mxu0 0
  %1129 = vmatpush1.bf16.msra.mxu0 0
  %1130 = vmatprep.subr.bf16.mxu0 0
  %1131 = vmatpush1.bf16.msra.mxu0 0
  %1132 = vmatprep.subr.bf16.mxu0 0
  %1133 = vmatpush1.bf16.msra.mxu0 0
  %1134 = vmatprep.subr.bf16.mxu0 0
  %1135 = vmatpush1.bf16.msra.mxu0 0
  %1136 = vmatprep.mubr.bf16.mxu0 0
  %1137 = vmatmul.mubr.bf16.gmra.mrb[0].mxu0 %v1103
  %v1138 = vpop.f32.mrb[0].mxu0
  %v1139 = vadd.f32 0.0, %v1138
  %v1140 = vpop.f32.mrb[0].mxu0
  %v1141 = vadd.f32 0.0, %v1140
  %v1142 = vpop.f32.mrb[0].mxu0
  %v1143 = vpop.f32.mrb[0].mxu0
  %1144 = vdwg.mxu0
  %1145 = vmatprep.subr.bf16.mxu0 %v572
  %1146 = vmatpush1.bf16.msra.mxu0 %v571
  %1147 = vmatprep.subr.bf16.mxu0 %v576
  %1148 = vmatpush1.bf16.msra.mxu0 %v575
  %1149 = vmatprep.subr.bf16.mxu0 %v580
  %1150 = vmatpush1.bf16.msra.mxu0 %v579
  %1151 = vmatprep.subr.bf16.mxu0 %v584
  %1152 = vmatpush1.bf16.msra.mxu0 %v583
  %1153 = vmatprep.subr.bf16.mxu0 %v588
  %1154 = vmatpush1.bf16.msra.mxu0 %v587
  %1155 = vmatprep.subr.bf16.mxu0 %v592
  %1156 = vmatpush1.bf16.msra.mxu0 %v591
  %1157 = vmatprep.subr.bf16.mxu0 %v596
  %1158 = vmatpush1.bf16.msra.mxu0 %v595
  %1159 = vmatprep.subr.bf16.mxu0 %v600
  %1160 = vmatpush1.bf16.msra.mxu0 %v599
  %1161 = vmatprep.subr.bf16.mxu0 0
  %1162 = vmatpush1.bf16.msra.mxu0 0
  %1163 = vmatprep.subr.bf16.mxu0 0
  %1164 = vmatpush1.bf16.msra.mxu0 0
  %1165 = vmatprep.subr.bf16.mxu0 0
  %1166 = vmatpush1.bf16.msra.mxu0 0
  %1167 = vmatprep.subr.bf16.mxu0 0
  %1168 = vmatpush1.bf16.msra.mxu0 0
  %1169 = vmatprep.subr.bf16.mxu0 0
  %1170 = vmatpush1.bf16.msra.mxu0 0
  %1171 = vmatprep.subr.bf16.mxu0 0
  %1172 = vmatpush1.bf16.msra.mxu0 0
  %1173 = vmatprep.subr.bf16.mxu0 0
  %1174 = vmatpush1.bf16.msra.mxu0 0
  %1175 = vmatprep.subr.bf16.mxu0 0
  %1176 = vmatpush1.bf16.msra.mxu0 0
  %1177 = vmatprep.mubr.bf16.mxu0 0
  %1178 = vmatmul.mubr.bf16.gmra.mrb[0].mxu0 %v1103
  %v1179 = vpop.f32.mrb[0].mxu0
  %v1180 = vadd.f32 0.0, %v1179
  %v1181 = vpop.f32.mrb[0].mxu0
  %v1182 = vadd.f32 0.0, %v1181
  %v1183 = vpop.f32.mrb[0].mxu0
  %v1184 = vpop.f32.mrb[0].mxu0
  %1185 = vdwg.mxu0
  %v1186 = vadd.f32 %v1099, %v1139
  %v1187 = vadd.f32 %v1100, %v1141
  %v1188 = vadd.f32 %v1101, %v1180
  %v1189 = vadd.f32 %v1102, %v1182
  %v1190 = vxor.u32 %v1186, 2147483648
  %v1191 = vxor.u32 %v1187, 2147483648
  %v1192 = vxor.u32 %v1188, 2147483648
  %v1193 = vmul.f32 %v1190, 1.442695
  %v1194 = vpow.pop %v1193
  %v1195 = vmul.f32 %v1191, 1.442695
  %v1196 = vpow.pop %v1195
  %v1197 = vmul.f32 %v1192, 1.442695
  %v1198 = vpow.pop %v1197
  %v1199 = vadd.f32 %v1194, 1.0
  %v1200 = vadd.f32 %v1196, 1.0
  %v1201 = vadd.f32 %v1198, 1.0
  %v1202 = vrcp.pop %v1199
  %v1203 = vmul.f32 1.0, %v1202
  %v1204 = vrcp.pop %v1200
  %v1205 = vmul.f32 1.0, %v1204
  %v1206 = vrcp.pop %v1201
  %v1207 = vmul.f32 1.0, %v1206
  %v1208 = vtanh.pop %v1189
  %v1209 = vmul.f32 %v1205, %v1093
  %v1210 = vmul.f32 %v1203, %v1208
  %v1211 = vadd.f32 %v1209, %v1210
  %v1212 = vtanh.pop %v1211
  %v1213 = vmul.f32 %v1207, %v1212
  %s1214 = scalar_lea.vmem [#allocation2], 32
  %1215 = vst [vmem:[%s1214] sm:$0xff] %v1213
  %s1216 = scalar_lea.vmem [#allocation3], 160
  %v1217 = vld [vmem:[%s1216] sm:$0xff]
  %v1218 = vld [vmem:[%s1216 + $0x8] sm:$0xff]
  %v1219 = vld [vmem:[%s1216 + $0x10] sm:$0xff]
  %v1220 = vld [vmem:[%s1216 + $0x18] sm:$0xff]
  %v1221 = vpack.c.bf16 %v1213, %v1213
  %1222 = vmatprep.subr.bf16.mxu0 %v570
  %1223 = vmatpush1.bf16.msra.mxu0 %v569
  %1224 = vmatprep.subr.bf16.mxu0 %v574
  %1225 = vmatpush1.bf16.msra.mxu0 %v573
  %1226 = vmatprep.subr.bf16.mxu0 %v578
  %1227 = vmatpush1.bf16.msra.mxu0 %v577
  %1228 = vmatprep.subr.bf16.mxu0 %v582
  %1229 = vmatpush1.bf16.msra.mxu0 %v581
  %1230 = vmatprep.subr.bf16.mxu0 %v586
  %1231 = vmatpush1.bf16.msra.mxu0 %v585
  %1232 = vmatprep.subr.bf16.mxu0 %v590
  %1233 = vmatpush1.bf16.msra.mxu0 %v589
  %1234 = vmatprep.subr.bf16.mxu0 %v594
  %1235 = vmatpush1.bf16.msra.mxu0 %v593
  %1236 = vmatprep.subr.bf16.mxu0 %v598
  %1237 = vmatpush1.bf16.msra.mxu0 %v597
  %1238 = vmatprep.subr.bf16.mxu0 0
  %1239 = vmatpush1.bf16.msra.mxu0 0
  %1240 = vmatprep.subr.bf16.mxu0 0
  %1241 = vmatpush1.bf16.msra.mxu0 0
  %1242 = vmatprep.subr.bf16.mxu0 0
  %1243 = vmatpush1.bf16.msra.mxu0 0
  %1244 = vmatprep.subr.bf16.mxu0 0
  %1245 = vmatpush1.bf16.msra.mxu0 0
  %1246 = vmatprep.subr.bf16.mxu0 0
  %1247 = vmatpush1.bf16.msra.mxu0 0
  %1248 = vmatprep.subr.bf16.mxu0 0
  %1249 = vmatpush1.bf16.msra.mxu0 0
  %1250 = vmatprep.subr.bf16.mxu0 0
  %1251 = vmatpush1.bf16.msra.mxu0 0
  %1252 = vmatprep.subr.bf16.mxu0 0
  %1253 = vmatpush1.bf16.msra.mxu0 0
  %1254 = vmatprep.mubr.bf16.mxu0 0
  %1255 = vmatmul.mubr.bf16.gmra.mrb[0].mxu0 %v1221
  %v1256 = vpop.f32.mrb[0].mxu0
  %v1257 = vadd.f32 0.0, %v1256
  %v1258 = vpop.f32.mrb[0].mxu0
  %v1259 = vadd.f32 0.0, %v1258
  %v1260 = vpop.f32.mrb[0].mxu0
  %v1261 = vpop.f32.mrb[0].mxu0
  %1262 = vdwg.mxu0
  %1263 = vmatprep.subr.bf16.mxu0 %v572
  %1264 = vmatpush1.bf16.msra.mxu0 %v571
  %1265 = vmatprep.subr.bf16.mxu0 %v576
  %1266 = vmatpush1.bf16.msra.mxu0 %v575
  %1267 = vmatprep.subr.bf16.mxu0 %v580
  %1268 = vmatpush1.bf16.msra.mxu0 %v579
  %1269 = vmatprep.subr.bf16.mxu0 %v584
  %1270 = vmatpush1.bf16.msra.mxu0 %v583
  %1271 = vmatprep.subr.bf16.mxu0 %v588
  %1272 = vmatpush1.bf16.msra.mxu0 %v587
  %1273 = vmatprep.subr.bf16.mxu0 %v592
  %1274 = vmatpush1.bf16.msra.mxu0 %v591
  %1275 = vmatprep.subr.bf16.mxu0 %v596
  %1276 = vmatpush1.bf16.msra.mxu0 %v595
  %1277 = vmatprep.subr.bf16.mxu0 %v600
  %1278 = vmatpush1.bf16.msra.mxu0 %v599
  %1279 = vmatprep.subr.bf16.mxu0 0
  %1280 = vmatpush1.bf16.msra.mxu0 0
  %1281 = vmatprep.subr.bf16.mxu0 0
  %1282 = vmatpush1.bf16.msra.mxu0 0
  %1283 = vmatprep.subr.bf16.mxu0 0
  %1284 = vmatpush1.bf16.msra.mxu0 0
  %1285 = vmatprep.subr.bf16.mxu0 0
  %1286 = vmatpush1.bf16.msra.mxu0 0
  %1287 = vmatprep.subr.bf16.mxu0 0
  %1288 = vmatpush1.bf16.msra.mxu0 0
  %1289 = vmatprep.subr.bf16.mxu0 0
  %1290 = vmatpush1.bf16.msra.mxu0 0
  %1291 = vmatprep.subr.bf16.mxu0 0
  %1292 = vmatpush1.bf16.msra.mxu0 0
  %1293 = vmatprep.subr.bf16.mxu0 0
  %1294 = vmatpush1.bf16.msra.mxu0 0
  %1295 = vmatprep.mubr.bf16.mxu0 0
  %1296 = vmatmul.mubr.bf16.gmra.mrb[0].mxu0 %v1221
  %v1297 = vpop.f32.mrb[0].mxu0
  %v1298 = vadd.f32 0.0, %v1297
  %v1299 = vpop.f32.mrb[0].mxu0
  %v1300 = vadd.f32 0.0, %v1299
  %v1301 = vpop.f32.mrb[0].mxu0
  %v1302 = vpop.f32.mrb[0].mxu0
  %1303 = vdwg.mxu0
  %v1304 = vadd.f32 %v1217, %v1257
  %v1305 = vadd.f32 %v1218, %v1259
  %v1306 = vadd.f32 %v1219, %v1298
  %v1307 = vadd.f32 %v1220, %v1300
  %v1308 = vxor.u32 %v1304, 2147483648
  %v1309 = vxor.u32 %v1305, 2147483648
  %v1310 = vxor.u32 %v1306, 2147483648
  %v1311 = vmul.f32 %v1308, 1.442695
  %v1312 = vpow.pop %v1311
  %v1313 = vmul.f32 %v1309, 1.442695
  %v1314 = vpow.pop %v1313
  %v1315 = vmul.f32 %v1310, 1.442695
  %v1316 = vpow.pop %v1315
  %v1317 = vadd.f32 %v1312, 1.0
  %v1318 = vadd.f32 %v1314, 1.0
  %v1319 = vadd.f32 %v1316, 1.0
  %v1320 = vrcp.pop %v1317
  %v1321 = vmul.f32 1.0, %v1320
  %v1322 = vrcp.pop %v1318
  %v1323 = vmul.f32 1.0, %v1322
  %v1324 = vrcp.pop %v1319
  %v1325 = vmul.f32 1.0, %v1324
  %v1326 = vtanh.pop %v1307
  %v1327 = vmul.f32 %v1323, %v1211
  %v1328 = vmul.f32 %v1321, %v1326
  %v1329 = vadd.f32 %v1327, %v1328
  %v1330 = vtanh.pop %v1329
  %v1331 = vmul.f32 %v1325, %v1330
  %s1332 = scalar_lea.vmem [#allocation2], 40
  %1333 = vst [vmem:[%s1332] sm:$0xff] %v1331
  %s1334 = scalar_lea.vmem [#allocation3], 192
  %v1335 = vld [vmem:[%s1334] sm:$0xff]
  %v1336 = vld [vmem:[%s1334 + $0x8] sm:$0xff]
  %v1337 = vld [vmem:[%s1334 + $0x10] sm:$0xff]
  %v1338 = vld [vmem:[%s1334 + $0x18] sm:$0xff]
  %v1339 = vpack.c.bf16 %v1331, %v1331
  %1340 = vmatprep.subr.bf16.mxu0 %v570
  %1341 = vmatpush1.bf16.msra.mxu0 %v569
  %1342 = vmatprep.subr.bf16.mxu0 %v574
  %1343 = vmatpush1.bf16.msra.mxu0 %v573
  %1344 = vmatprep.subr.bf16.mxu0 %v578
  %1345 = vmatpush1.bf16.msra.mxu0 %v577
  %1346 = vmatprep.subr.bf16.mxu0 %v582
  %1347 = vmatpush1.bf16.msra.mxu0 %v581
  %1348 = vmatprep.subr.bf16.mxu0 %v586
  %1349 = vmatpush1.bf16.msra.mxu0 %v585
  %1350 = vmatprep.subr.bf16.mxu0 %v590
  %1351 = vmatpush1.bf16.msra.mxu0 %v589
  %1352 = vmatprep.subr.bf16.mxu0 %v594
  %1353 = vmatpush1.bf16.msra.mxu0 %v593
  %1354 = vmatprep.subr.bf16.mxu0 %v598
  %1355 = vmatpush1.bf16.msra.mxu0 %v597
  %1356 = vmatprep.subr.bf16.mxu0 0
  %1357 = vmatpush1.bf16.msra.mxu0 0
  %1358 = vmatprep.subr.bf16.mxu0 0
  %1359 = vmatpush1.bf16.msra.mxu0 0
  %1360 = vmatprep.subr.bf16.mxu0 0
  %1361 = vmatpush1.bf16.msra.mxu0 0
  %1362 = vmatprep.subr.bf16.mxu0 0
  %1363 = vmatpush1.bf16.msra.mxu0 0
  %1364 = vmatprep.subr.bf16.mxu0 0
  %1365 = vmatpush1.bf16.msra.mxu0 0
  %1366 = vmatprep.subr.bf16.mxu0 0
  %1367 = vmatpush1.bf16.msra.mxu0 0
  %1368 = vmatprep.subr.bf16.mxu0 0
  %1369 = vmatpush1.bf16.msra.mxu0 0
  %1370 = vmatprep.subr.bf16.mxu0 0
  %1371 = vmatpush1.bf16.msra.mxu0 0
  %1372 = vmatprep.mubr.bf16.mxu0 0
  %1373 = vmatmul.mubr.bf16.gmra.mrb[0].mxu0 %v1339
  %v1374 = vpop.f32.mrb[0].mxu0
  %v1375 = vadd.f32 0.0, %v1374
  %v1376 = vpop.f32.mrb[0].mxu0
  %v1377 = vadd.f32 0.0, %v1376
  %v1378 = vpop.f32.mrb[0].mxu0
  %v1379 = vpop.f32.mrb[0].mxu0
  %1380 = vdwg.mxu0
  %1381 = vmatprep.subr.bf16.mxu0 %v572
  %1382 = vmatpush1.bf16.msra.mxu0 %v571
  %1383 = vmatprep.subr.bf16.mxu0 %v576
  %1384 = vmatpush1.bf16.msra.mxu0 %v575
  %1385 = vmatprep.subr.bf16.mxu0 %v580
  %1386 = vmatpush1.bf16.msra.mxu0 %v579
  %1387 = vmatprep.subr.bf16.mxu0 %v584
  %1388 = vmatpush1.bf16.msra.mxu0 %v583
  %1389 = vmatprep.subr.bf16.mxu0 %v588
  %1390 = vmatpush1.bf16.msra.mxu0 %v587
  %1391 = vmatprep.subr.bf16.mxu0 %v592
  %1392 = vmatpush1.bf16.msra.mxu0 %v591
  %1393 = vmatprep.subr.bf16.mxu0 %v596
  %1394 = vmatpush1.bf16.msra.mxu0 %v595
  %1395 = vmatprep.subr.bf16.mxu0 %v600
  %1396 = vmatpush1.bf16.msra.mxu0 %v599
  %1397 = vmatprep.subr.bf16.mxu0 0
  %1398 = vmatpush1.bf16.msra.mxu0 0
  %1399 = vmatprep.subr.bf16.mxu0 0
  %1400 = vmatpush1.bf16.msra.mxu0 0
  %1401 = vmatprep.subr.bf16.mxu0 0
  %1402 = vmatpush1.bf16.msra.mxu0 0
  %1403 = vmatprep.subr.bf16.mxu0 0
  %1404 = vmatpush1.bf16.msra.mxu0 0
  %1405 = vmatprep.subr.bf16.mxu0 0
  %1406 = vmatpush1.bf16.msra.mxu0 0
  %1407 = vmatprep.subr.bf16.mxu0 0
  %1408 = vmatpush1.bf16.msra.mxu0 0
  %1409 = vmatprep.subr.bf16.mxu0 0
  %1410 = vmatpush1.bf16.msra.mxu0 0
  %1411 = vmatprep.subr.bf16.mxu0 0
  %1412 = vmatpush1.bf16.msra.mxu0 0
  %1413 = vmatprep.mubr.bf16.mxu0 0
  %1414 = vmatmul.mubr.bf16.gmra.mrb[0].mxu0 %v1339
  %v1415 = vpop.f32.mrb[0].mxu0
  %v1416 = vadd.f32 0.0, %v1415
  %v1417 = vpop.f32.mrb[0].mxu0
  %v1418 = vadd.f32 0.0, %v1417
  %v1419 = vpop.f32.mrb[0].mxu0
  %v1420 = vpop.f32.mrb[0].mxu0
  %1421 = vdwg.mxu0
  %v1422 = vadd.f32 %v1335, %v1375
  %v1423 = vadd.f32 %v1336, %v1377
  %v1424 = vadd.f32 %v1337, %v1416
  %v1425 = vadd.f32 %v1338, %v1418
  %v1426 = vxor.u32 %v1422, 2147483648
  %v1427 = vxor.u32 %v1423, 2147483648
  %v1428 = vxor.u32 %v1424, 2147483648
  %v1429 = vmul.f32 %v1426, 1.442695
  %v1430 = vpow.pop %v1429
  %v1431 = vmul.f32 %v1427, 1.442695
  %v1432 = vpow.pop %v1431
  %v1433 = vmul.f32 %v1428, 1.442695
  %v1434 = vpow.pop %v1433
  %v1435 = vadd.f32 %v1430, 1.0
  %v1436 = vadd.f32 %v1432, 1.0
  %v1437 = vadd.f32 %v1434, 1.0
  %v1438 = vrcp.pop %v1435
  %v1439 = vmul.f32 1.0, %v1438
  %v1440 = vrcp.pop %v1436
  %v1441 = vmul.f32 1.0, %v1440
  %v1442 = vrcp.pop %v1437
  %v1443 = vmul.f32 1.0, %v1442
  %v1444 = vtanh.pop %v1425
  %v1445 = vmul.f32 %v1441, %v1329
  %v1446 = vmul.f32 %v1439, %v1444
  %v1447 = vadd.f32 %v1445, %v1446
  %v1448 = vtanh.pop %v1447
  %v1449 = vmul.f32 %v1443, %v1448
  %s1450 = scalar_lea.vmem [#allocation2], 48
  %1451 = vst [vmem:[%s1450] sm:$0xff] %v1449
  %s1452 = scalar_lea.vmem [#allocation3], 224
  %v1453 = vld [vmem:[%s1452] sm:$0xff]
  %v1454 = vld [vmem:[%s1452 + $0x8] sm:$0xff]
  %v1455 = vld [vmem:[%s1452 + $0x10] sm:$0xff]
  %v1456 = vld [vmem:[%s1452 + $0x18] sm:$0xff]
  %v1457 = vpack.c.bf16 %v1449, %v1449
  %1458 = vmatprep.subr.bf16.mxu0 %v570
  %1459 = vmatpush1.bf16.msra.mxu0 %v569
  %1460 = vmatprep.subr.bf16.mxu0 %v574
  %1461 = vmatpush1.bf16.msra.mxu0 %v573
  %1462 = vmatprep.subr.bf16.mxu0 %v578
  %1463 = vmatpush1.bf16.msra.mxu0 %v577
  %1464 = vmatprep.subr.bf16.mxu0 %v582
  %1465 = vmatpush1.bf16.msra.mxu0 %v581
  %1466 = vmatprep.subr.bf16.mxu0 %v586
  %1467 = vmatpush1.bf16.msra.mxu0 %v585
  %1468 = vmatprep.subr.bf16.mxu0 %v590
  %1469 = vmatpush1.bf16.msra.mxu0 %v589
  %1470 = vmatprep.subr.bf16.mxu0 %v594
  %1471 = vmatpush1.bf16.msra.mxu0 %v593
  %1472 = vmatprep.subr.bf16.mxu0 %v598
  %1473 = vmatpush1.bf16.msra.mxu0 %v597
  %1474 = vmatprep.subr.bf16.mxu0 0
  %1475 = vmatpush1.bf16.msra.mxu0 0
  %1476 = vmatprep.subr.bf16.mxu0 0
  %1477 = vmatpush1.bf16.msra.mxu0 0
  %1478 = vmatprep.subr.bf16.mxu0 0
  %1479 = vmatpush1.bf16.msra.mxu0 0
  %1480 = vmatprep.subr.bf16.mxu0 0
  %1481 = vmatpush1.bf16.msra.mxu0 0
  %1482 = vmatprep.subr.bf16.mxu0 0
  %1483 = vmatpush1.bf16.msra.mxu0 0
  %1484 = vmatprep.subr.bf16.mxu0 0
  %1485 = vmatpush1.bf16.msra.mxu0 0
  %1486 = vmatprep.subr.bf16.mxu0 0
  %1487 = vmatpush1.bf16.msra.mxu0 0
  %1488 = vmatprep.subr.bf16.mxu0 0
  %1489 = vmatpush1.bf16.msra.mxu0 0
  %1490 = vmatprep.mubr.bf16.mxu0 0
  %1491 = vmatmul.mubr.bf16.gmra.mrb[0].mxu0 %v1457
  %v1492 = vpop.f32.mrb[0].mxu0
  %v1493 = vadd.f32 0.0, %v1492
  %v1494 = vpop.f32.mrb[0].mxu0
  %v1495 = vadd.f32 0.0, %v1494
  %v1496 = vpop.f32.mrb[0].mxu0
  %v1497 = vpop.f32.mrb[0].mxu0
  %1498 = vdwg.mxu0
  %1499 = vmatprep.subr.bf16.mxu0 %v572
  %1500 = vmatpush1.bf16.msra.mxu0 %v571
  %1501 = vmatprep.subr.bf16.mxu0 %v576
  %1502 = vmatpush1.bf16.msra.mxu0 %v575
  %1503 = vmatprep.subr.bf16.mxu0 %v580
  %1504 = vmatpush1.bf16.msra.mxu0 %v579
  %1505 = vmatprep.subr.bf16.mxu0 %v584
  %1506 = vmatpush1.bf16.msra.mxu0 %v583
  %1507 = vmatprep.subr.bf16.mxu0 %v588
  %1508 = vmatpush1.bf16.msra.mxu0 %v587
  %1509 = vmatprep.subr.bf16.mxu0 %v592
  %1510 = vmatpush1.bf16.msra.mxu0 %v591
  %1511 = vmatprep.subr.bf16.mxu0 %v596
  %1512 = vmatpush1.bf16.msra.mxu0 %v595
  %1513 = vmatprep.subr.bf16.mxu0 %v600
  %1514 = vmatpush1.bf16.msra.mxu0 %v599
  %1515 = vmatprep.subr.bf16.mxu0 0
  %1516 = vmatpush1.bf16.msra.mxu0 0
  %1517 = vmatprep.subr.bf16.mxu0 0
  %1518 = vmatpush1.bf16.msra.mxu0 0
  %1519 = vmatprep.subr.bf16.mxu0 0
  %1520 = vmatpush1.bf16.msra.mxu0 0
  %1521 = vmatprep.subr.bf16.mxu0 0
  %1522 = vmatpush1.bf16.msra.mxu0 0
  %1523 = vmatprep.subr.bf16.mxu0 0
  %1524 = vmatpush1.bf16.msra.mxu0 0
  %1525 = vmatprep.subr.bf16.mxu0 0
  %1526 = vmatpush1.bf16.msra.mxu0 0
  %1527 = vmatprep.subr.bf16.mxu0 0
  %1528 = vmatpush1.bf16.msra.mxu0 0
  %1529 = vmatprep.subr.bf16.mxu0 0
  %1530 = vmatpush1.bf16.msra.mxu0 0
  %1531 = vmatprep.mubr.bf16.mxu0 0
  %1532 = vmatmul.mubr.bf16.gmra.mrb[0].mxu0 %v1457
  %v1533 = vpop.f32.mrb[0].mxu0
  %v1534 = vadd.f32 0.0, %v1533
  %v1535 = vpop.f32.mrb[0].mxu0
  %v1536 = vadd.f32 0.0, %v1535
  %v1537 = vpop.f32.mrb[0].mxu0
  %v1538 = vpop.f32.mrb[0].mxu0
  %1539 = vdwg.mxu0
  %v1540 = vadd.f32 %v1453, %v1493
  %v1541 = vadd.f32 %v1454, %v1495
  %v1542 = vadd.f32 %v1455, %v1534
  %v1543 = vadd.f32 %v1456, %v1536
  %v1544 = vxor.u32 %v1540, 2147483648
  %v1545 = vxor.u32 %v1541, 2147483648
  %v1546 = vxor.u32 %v1542, 2147483648
  %v1547 = vmul.f32 %v1544, 1.442695
  %v1548 = vpow.pop %v1547
  %v1549 = vmul.f32 %v1545, 1.442695
  %v1550 = vpow.pop %v1549
  %v1551 = vmul.f32 %v1546, 1.442695
  %v1552 = vpow.pop %v1551
  %v1553 = vadd.f32 %v1548, 1.0
  %v1554 = vadd.f32 %v1550, 1.0
  %v1555 = vadd.f32 %v1552, 1.0
  %v1556 = vrcp.pop %v1553
  %v1557 = vmul.f32 1.0, %v1556
  %v1558 = vrcp.pop %v1554
  %v1559 = vmul.f32 1.0, %v1558
  %v1560 = vrcp.pop %v1555
  %v1561 = vmul.f32 1.0, %v1560
  %v1562 = vtanh.pop %v1543
  %v1563 = vmul.f32 %v1559, %v1447
  %v1564 = vmul.f32 %v1557, %v1562
  %v1565 = vadd.f32 %v1563, %v1564
  %v1566 = vtanh.pop %v1565
  %v1567 = vmul.f32 %v1561, %v1566
  %s1568 = scalar_lea.vmem [#allocation2], 56
  %1569 = vst [vmem:[%s1568] sm:$0xff] %v1567
  %v1570 = vld [vmem:[#allocation2] sm:$0xff]
  %v1571 = vld [vmem:[#allocation2 + $0x8] sm:$0xff]
  %v1572 = vld [vmem:[#allocation2 + $0x10] sm:$0xff]
  %v1573 = vld [vmem:[#allocation2 + $0x18] sm:$0xff]
  %v1574 = vld [vmem:[#allocation2 + $0x20] sm:$0xff]
  %v1575 = vld [vmem:[#allocation2 + $0x28] sm:$0xff]
  %v1576 = vld [vmem:[#allocation2 + $0x30] sm:$0xff]
  %v1577 = vld [vmem:[#allocation2 + $0x38] sm:$0xff]
  %v1578 = vpack.c.bf16 %v1571, %v1570
  %v1579 = vpack.c.bf16 %v1573, %v1572
  %v1580 = vpack.c.bf16 %v1575, %v1574
  %v1581 = vpack.c.bf16 %v1577, %v1576
  %v1582 = vld [vmem:[%s4] sm:$0xff]
  %v1583 = vld [vmem:[%s4 + $0x8] sm:$0xff]
  %v1584 = vld [vmem:[%s4 + $0x10] sm:$0xff]
  %v1585 = vld [vmem:[%s4 + $0x18] sm:$0xff]
  %v1586 = vld [vmem:[%s4 + $0x20] sm:$0xff]
  %v1587 = vld [vmem:[%s4 + $0x28] sm:$0xff]
  %v1588 = vld [vmem:[%s4 + $0x30] sm:$0xff]
  %v1589 = vld [vmem:[%s4 + $0x38] sm:$0xff]
  %v1590 = vld [vmem:[%s4 + $0x40] sm:$0xff]
  %v1591 = vld [vmem:[%s4 + $0x48] sm:$0xff]
  %v1592 = vld [vmem:[%s4 + $0x50] sm:$0xff]
  %v1593 = vld [vmem:[%s4 + $0x58] sm:$0xff]
  %v1594 = vld [vmem:[%s4 + $0x60] sm:$0xff]
  %v1595 = vld [vmem:[%s4 + $0x68] sm:$0xff]
  %v1596 = vld [vmem:[%s4 + $0x70] sm:$0xff]
  %v1597 = vld [vmem:[%s4 + $0x78] sm:$0xff]
  %v1598 = vld [vmem:[%s4 + $0x80] sm:$0xff]
  %v1599 = vld [vmem:[%s4 + $0x88] sm:$0xff]
  %v1600 = vld [vmem:[%s4 + $0x90] sm:$0xff]
  %v1601 = vld [vmem:[%s4 + $0x98] sm:$0xff]
  %v1602 = vld [vmem:[%s4 + $0xa0] sm:$0xff]
  %v1603 = vld [vmem:[%s4 + $0xa8] sm:$0xff]
  %v1604 = vld [vmem:[%s4 + $0xb0] sm:$0xff]
  %v1605 = vld [vmem:[%s4 + $0xb8] sm:$0xff]
  %v1606 = vld [vmem:[%s4 + $0xc0] sm:$0xff]
  %v1607 = vld [vmem:[%s4 + $0xc8] sm:$0xff]
  %v1608 = vld [vmem:[%s4 + $0xd0] sm:$0xff]
  %v1609 = vld [vmem:[%s4 + $0xd8] sm:$0xff]
  %v1610 = vld [vmem:[%s4 + $0xe0] sm:$0xff]
  %v1611 = vld [vmem:[%s4 + $0xe8] sm:$0xff]
  %v1612 = vld [vmem:[%s4 + $0xf0] sm:$0xff]
  %v1613 = vld [vmem:[%s4 + $0xf8] sm:$0xff]
  %v1614 = vld [vmem:[%s6] sm:$0xf]
  %v1616 = vlaneseq
  %v1617 = vshrl.u32 %v1616, 7
  %v1618 = vsub.s32 0, %v1617
  %v1619 = vrot.slane %v1614, %v1618
  %v1620 = vlaneseq
  %v1621 = vshrl.u32 %v1620, 7
  %v1622 = vsub.s32 1, %v1621
  %v1623 = vrot.slane %v1614, %v1622
  %v1624 = vlaneseq
  %v1625 = vshrl.u32 %v1624, 7
  %v1626 = vsub.s32 2, %v1625
  %v1627 = vrot.slane %v1614, %v1626
  %v1628 = vlaneseq
  %v1629 = vshrl.u32 %v1628, 7
  %v1630 = vsub.s32 3, %v1629
  %v1631 = vrot.slane %v1614, %v1630
  %v1668 = vunpack.c.l.b16 %v1582
  %v1669 = vunpack.c.h.b16 %v1582
  %v1670 = vunpack.c.l.b16 %v1583
  %v1671 = vunpack.c.h.b16 %v1583
  %v1672 = vunpack.c.l.b16 %v1584
  %v1673 = vunpack.c.h.b16 %v1584
  %v1674 = vunpack.c.l.b16 %v1585
  %v1675 = vunpack.c.h.b16 %v1585
  %v1676 = vunpack.c.l.b16 %v1586
  %v1677 = vunpack.c.h.b16 %v1586
  %v1678 = vunpack.c.l.b16 %v1587
  %v1679 = vunpack.c.h.b16 %v1587
  %v1680 = vunpack.c.l.b16 %v1588
  %v1681 = vunpack.c.h.b16 %v1588
  %v1682 = vunpack.c.l.b16 %v1589
  %v1683 = vunpack.c.h.b16 %v1589
  %v1684 = vunpack.c.l.b16 %v1590
  %v1685 = vunpack.c.h.b16 %v1590
  %v1686 = vunpack.c.l.b16 %v1591
  %v1687 = vunpack.c.h.b16 %v1591
  %v1688 = vunpack.c.l.b16 %v1592
  %v1689 = vunpack.c.h.b16 %v1592
  %v1690 = vunpack.c.l.b16 %v1593
  %v1691 = vunpack.c.h.b16 %v1593
  %v1692 = vunpack.c.l.b16 %v1594
  %v1693 = vunpack.c.h.b16 %v1594
  %v1694 = vunpack.c.l.b16 %v1595
  %v1695 = vunpack.c.h.b16 %v1595
  %v1696 = vunpack.c.l.b16 %v1596
  %v1697 = vunpack.c.h.b16 %v1596
  %v1698 = vunpack.c.l.b16 %v1597
  %v1699 = vunpack.c.h.b16 %v1597
  %v1700 = vunpack.c.l.b16 %v1598
  %v1701 = vunpack.c.h.b16 %v1598
  %v1702 = vunpack.c.l.b16 %v1599
  %v1703 = vunpack.c.h.b16 %v1599
  %v1704 = vunpack.c.l.b16 %v1600
  %v1705 = vunpack.c.h.b16 %v1600
  %v1706 = vunpack.c.l.b16 %v1601
  %v1707 = vunpack.c.h.b16 %v1601
  %v1708 = vunpack.c.l.b16 %v1602
  %v1709 = vunpack.c.h.b16 %v1602
  %v1710 = vunpack.c.l.b16 %v1603
  %v1711 = vunpack.c.h.b16 %v1603
  %v1712 = vunpack.c.l.b16 %v1604
  %v1713 = vunpack.c.h.b16 %v1604
  %v1714 = vunpack.c.l.b16 %v1605
  %v1715 = vunpack.c.h.b16 %v1605
  %v1716 = vunpack.c.l.b16 %v1606
  %v1717 = vunpack.c.h.b16 %v1606
  %v1718 = vunpack.c.l.b16 %v1607
  %v1719 = vunpack.c.h.b16 %v1607
  %v1720 = vunpack.c.l.b16 %v1608
  %v1721 = vunpack.c.h.b16 %v1608
  %v1722 = vunpack.c.l.b16 %v1609
  %v1723 = vunpack.c.h.b16 %v1609
  %v1724 = vunpack.c.l.b16 %v1610
  %v1725 = vunpack.c.h.b16 %v1610
  %v1726 = vunpack.c.l.b16 %v1611
  %v1727 = vunpack.c.h.b16 %v1611
  %v1728 = vunpack.c.l.b16 %v1612
  %v1729 = vunpack.c.h.b16 %v1612
  %v1730 = vunpack.c.l.b16 %v1613
  %v1731 = vunpack.c.h.b16 %v1613
  %v1732 = vpack.c.b16 %v1672, %v1668
  %v1733 = vpack.c.b16 %v1673, %v1669
  %v1734 = vpack.c.b16 %v1674, %v1670
  %v1735 = vpack.c.b16 %v1675, %v1671
  %v1736 = vpack.c.b16 %v1680, %v1676
  %v1737 = vpack.c.b16 %v1681, %v1677
  %v1738 = vpack.c.b16 %v1682, %v1678
  %v1739 = vpack.c.b16 %v1683, %v1679
  %v1740 = vpack.c.b16 %v1688, %v1684
  %v1741 = vpack.c.b16 %v1689, %v1685
  %v1742 = vpack.c.b16 %v1690, %v1686
  %v1743 = vpack.c.b16 %v1691, %v1687
  %v1744 = vpack.c.b16 %v1696, %v1692
  %v1745 = vpack.c.b16 %v1697, %v1693
  %v1746 = vpack.c.b16 %v1698, %v1694
  %v1747 = vpack.c.b16 %v1699, %v1695
  %v1748 = vpack.c.b16 %v1704, %v1700
  %v1749 = vpack.c.b16 %v1705, %v1701
  %v1750 = vpack.c.b16 %v1706, %v1702
  %v1751 = vpack.c.b16 %v1707, %v1703
  %v1752 = vpack.c.b16 %v1712, %v1708
  %v1753 = vpack.c.b16 %v1713, %v1709
  %v1754 = vpack.c.b16 %v1714, %v1710
  %v1755 = vpack.c.b16 %v1715, %v1711
  %v1756 = vpack.c.b16 %v1720, %v1716
  %v1757 = vpack.c.b16 %v1721, %v1717
  %v1758 = vpack.c.b16 %v1722, %v1718
  %v1759 = vpack.c.b16 %v1723, %v1719
  %v1760 = vpack.c.b16 %v1728, %v1724
  %v1761 = vpack.c.b16 %v1729, %v1725
  %v1762 = vpack.c.b16 %v1730, %v1726
  %v1763 = vpack.c.b16 %v1731, %v1727
  %1796 = vmatprep.subr.bf16.mxu0 %v1733
  %1797 = vmatpush1.bf16.msra.mxu0 %v1732
  %1798 = vmatprep.subr.bf16.mxu0 %v1737
  %1799 = vmatpush1.bf16.msra.mxu0 %v1736
  %1800 = vmatprep.subr.bf16.mxu0 %v1741
  %1801 = vmatpush1.bf16.msra.mxu0 %v1740
  %1802 = vmatprep.subr.bf16.mxu0 %v1745
  %1803 = vmatpush1.bf16.msra.mxu0 %v1744
  %1804 = vmatprep.subr.bf16.mxu0 %v1749
  %1805 = vmatpush1.bf16.msra.mxu0 %v1748
  %1806 = vmatprep.subr.bf16.mxu0 %v1753
  %1807 = vmatpush1.bf16.msra.mxu0 %v1752
  %1808 = vmatprep.subr.bf16.mxu0 %v1757
  %1809 = vmatpush1.bf16.msra.mxu0 %v1756
  %1810 = vmatprep.subr.bf16.mxu0 %v1761
  %1811 = vmatpush1.bf16.msra.mxu0 %v1760
  %1812 = vmatprep.subr.bf16.mxu0 0
  %1813 = vmatpush1.bf16.msra.mxu0 0
  %1814 = vmatprep.subr.bf16.mxu0 0
  %1815 = vmatpush1.bf16.msra.mxu0 0
  %1816 = vmatprep.subr.bf16.mxu0 0
  %1817 = vmatpush1.bf16.msra.mxu0 0
  %1818 = vmatprep.subr.bf16.mxu0 0
  %1819 = vmatpush1.bf16.msra.mxu0 0
  %1820 = vmatprep.subr.bf16.mxu0 0
  %1821 = vmatpush1.bf16.msra.mxu0 0
  %1822 = vmatprep.subr.bf16.mxu0 0
  %1823 = vmatpush1.bf16.msra.mxu0 0
  %1824 = vmatprep.subr.bf16.mxu0 0
  %1825 = vmatpush1.bf16.msra.mxu0 0
  %1826 = vmatprep.subr.bf16.mxu0 0
  %1827 = vmatpush1.bf16.msra.mxu0 0
  %1828 = vmatprep.mubr.bf16.mxu0 0
  %1829 = vmatmul.mubr.bf16.gmra.mrb[0].mxu0 %v1578
  %v1830 = vpop.f32.mrb[0].mxu0
  %v1831 = vadd.f32 %v1619, %v1830
  %v1832 = vpop.f32.mrb[0].mxu0
  %v1833 = vadd.f32 %v1623, %v1832
  %v1834 = vpop.f32.mrb[0].mxu0
  %v1835 = vadd.f32 %v1619, %v1834
  %v1836 = vpop.f32.mrb[0].mxu0
  %v1837 = vadd.f32 %v1623, %v1836
  %1838 = vmatprep.mubr.bf16.mxu0 0
  %1839 = vmatmul.mubr.bf16.gmra.mrb[0].mxu0 %v1579
  %v1840 = vpop.f32.mrb[0].mxu0
  %v1841 = vadd.f32 %v1619, %v1840
  %v1842 = vpop.f32.mrb[0].mxu0
  %v1843 = vadd.f32 %v1623, %v1842
  %v1844 = vpop.f32.mrb[0].mxu0
  %v1845 = vadd.f32 %v1619, %v1844
  %v1846 = vpop.f32.mrb[0].mxu0
  %v1847 = vadd.f32 %v1623, %v1846
  %1848 = vmatprep.mubr.bf16.mxu0 0
  %1849 = vmatmul.mubr.bf16.gmra.mrb[0].mxu0 %v1580
  %v1850 = vpop.f32.mrb[0].mxu0
  %v1851 = vadd.f32 %v1619, %v1850
  %v1852 = vpop.f32.mrb[0].mxu0
  %v1853 = vadd.f32 %v1623, %v1852
  %v1854 = vpop.f32.mrb[0].mxu0
  %v1855 = vadd.f32 %v1619, %v1854
  %v1856 = vpop.f32.mrb[0].mxu0
  %v1857 = vadd.f32 %v1623, %v1856
  %1858 = vmatprep.mubr.bf16.mxu0 0
  %1859 = vmatmul.mubr.bf16.gmra.mrb[0].mxu0 %v1581
  %v1860 = vpop.f32.mrb[0].mxu0
  %v1861 = vadd.f32 %v1619, %v1860
  %v1862 = vpop.f32.mrb[0].mxu0
  %v1863 = vadd.f32 %v1623, %v1862
  %v1864 = vpop.f32.mrb[0].mxu0
  %v1865 = vadd.f32 %v1619, %v1864
  %v1866 = vpop.f32.mrb[0].mxu0
  %v1867 = vadd.f32 %v1623, %v1866
  %1868 = vdwg.mxu0
  %1869 = vmatprep.subr.bf16.mxu0 %v1735
  %1870 = vmatpush1.bf16.msra.mxu0 %v1734
  %1871 = vmatprep.subr.bf16.mxu0 %v1739
  %1872 = vmatpush1.bf16.msra.mxu0 %v1738
  %1873 = vmatprep.subr.bf16.mxu0 %v1743
  %1874 = vmatpush1.bf16.msra.mxu0 %v1742
  %1875 = vmatprep.subr.bf16.mxu0 %v1747
  %1876 = vmatpush1.bf16.msra.mxu0 %v1746
  %1877 = vmatprep.subr.bf16.mxu0 %v1751
  %1878 = vmatpush1.bf16.msra.mxu0 %v1750
  %1879 = vmatprep.subr.bf16.mxu0 %v1755
  %1880 = vmatpush1.bf16.msra.mxu0 %v1754
  %1881 = vmatprep.subr.bf16.mxu0 %v1759
  %1882 = vmatpush1.bf16.msra.mxu0 %v1758
  %1883 = vmatprep.subr.bf16.mxu0 %v1763
  %1884 = vmatpush1.bf16.msra.mxu0 %v1762
  %1885 = vmatprep.subr.bf16.mxu0 0
  %1886 = vmatpush1.bf16.msra.mxu0 0
  %1887 = vmatprep.subr.bf16.mxu0 0
  %1888 = vmatpush1.bf16.msra.mxu0 0
  %1889 = vmatprep.subr.bf16.mxu0 0
  %1890 = vmatpush1.bf16.msra.mxu0 0
  %1891 = vmatprep.subr.bf16.mxu0 0
  %1892 = vmatpush1.bf16.msra.mxu0 0
  %1893 = vmatprep.subr.bf16.mxu0 0
  %1894 = vmatpush1.bf16.msra.mxu0 0
  %1895 = vmatprep.subr.bf16.mxu0 0
  %1896 = vmatpush1.bf16.msra.mxu0 0
  %1897 = vmatprep.subr.bf16.mxu0 0
  %1898 = vmatpush1.bf16.msra.mxu0 0
  %1899 = vmatprep.subr.bf16.mxu0 0
  %1900 = vmatpush1.bf16.msra.mxu0 0
  %1901 = vmatprep.mubr.bf16.mxu0 0
  %1902 = vmatmul.mubr.bf16.gmra.mrb[0].mxu0 %v1578
  %v1903 = vpop.f32.mrb[0].mxu0
  %v1904 = vadd.f32 %v1627, %v1903
  %v1905 = vpop.f32.mrb[0].mxu0
  %v1906 = vadd.f32 %v1631, %v1905
  %v1907 = vpop.f32.mrb[0].mxu0
  %v1908 = vadd.f32 %v1627, %v1907
  %v1909 = vpop.f32.mrb[0].mxu0
  %v1910 = vadd.f32 %v1631, %v1909
  %1911 = vmatprep.mubr.bf16.mxu0 0
  %1912 = vmatmul.mubr.bf16.gmra.mrb[0].mxu0 %v1579
  %v1913 = vpop.f32.mrb[0].mxu0
  %v1914 = vadd.f32 %v1627, %v1913
  %v1915 = vpop.f32.mrb[0].mxu0
  %v1916 = vadd.f32 %v1631, %v1915
  %v1917 = vpop.f32.mrb[0].mxu0
  %v1918 = vadd.f32 %v1627, %v1917
  %v1919 = vpop.f32.mrb[0].mxu0
  %v1920 = vadd.f32 %v1631, %v1919
  %1921 = vmatprep.mubr.bf16.mxu0 0
  %1922 = vmatmul.mubr.bf16.gmra.mrb[0].mxu0 %v1580
  %v1923 = vpop.f32.mrb[0].mxu0
  %v1924 = vadd.f32 %v1627, %v1923
  %v1925 = vpop.f32.mrb[0].mxu0
  %v1926 = vadd.f32 %v1631, %v1925
  %v1927 = vpop.f32.mrb[0].mxu0
  %v1928 = vadd.f32 %v1627, %v1927
  %v1929 = vpop.f32.mrb[0].mxu0
  %v1930 = vadd.f32 %v1631, %v1929
  %1931 = vmatprep.mubr.bf16.mxu0 0
  %1932 = vmatmul.mubr.bf16.gmra.mrb[0].mxu0 %v1581
  %v1933 = vpop.f32.mrb[0].mxu0
  %v1934 = vadd.f32 %v1627, %v1933
  %v1935 = vpop.f32.mrb[0].mxu0
  %v1936 = vadd.f32 %v1631, %v1935
  %v1937 = vpop.f32.mrb[0].mxu0
  %v1938 = vadd.f32 %v1627, %v1937
  %v1939 = vpop.f32.mrb[0].mxu0
  %v1940 = vadd.f32 %v1631, %v1939
  %1941 = vdwg.mxu0
  %1942 = vst [vmem:[#allocation3] sm:$0xff] %v1831
  %1943 = vst [vmem:[#allocation3 + $0x8] sm:$0xff] %v1833
  %1944 = vst [vmem:[#allocation3 + $0x10] sm:$0xff] %v1904
  %1945 = vst [vmem:[#allocation3 + $0x18] sm:$0xff] %v1906
  %1946 = vst [vmem:[#allocation3 + $0x20] sm:$0xff] %v1835
  %1947 = vst [vmem:[#allocation3 + $0x28] sm:$0xff] %v1837
  %1948 = vst [vmem:[#allocation3 + $0x30] sm:$0xff] %v1908
  %1949 = vst [vmem:[#allocation3 + $0x38] sm:$0xff] %v1910
  %1950 = vst [vmem:[#allocation3 + $0x40] sm:$0xff] %v1841
  %1951 = vst [vmem:[#allocation3 + $0x48] sm:$0xff] %v1843
  %1952 = vst [vmem:[#allocation3 + $0x50] sm:$0xff] %v1914
  %1953 = vst [vmem:[#allocation3 + $0x58] sm:$0xff] %v1916
  %1954 = vst [vmem:[#allocation3 + $0x60] sm:$0xff] %v1845
  %1955 = vst [vmem:[#allocation3 + $0x68] sm:$0xff] %v1847
  %1956 = vst [vmem:[#allocation3 + $0x70] sm:$0xff] %v1918
  %1957 = vst [vmem:[#allocation3 + $0x78] sm:$0xff] %v1920
  %1958 = vst [vmem:[#allocation3 + $0x80] sm:$0xff] %v1851
  %1959 = vst [vmem:[#allocation3 + $0x88] sm:$0xff] %v1853
  %1960 = vst [vmem:[#allocation3 + $0x90] sm:$0xff] %v1924
  %1961 = vst [vmem:[#allocation3 + $0x98] sm:$0xff] %v1926
  %1962 = vst [vmem:[#allocation3 + $0xa0] sm:$0xff] %v1855
  %1963 = vst [vmem:[#allocation3 + $0xa8] sm:$0xff] %v1857
  %1964 = vst [vmem:[#allocation3 + $0xb0] sm:$0xff] %v1928
  %1965 = vst [vmem:[#allocation3 + $0xb8] sm:$0xff] %v1930
  %1966 = vst [vmem:[#allocation3 + $0xc0] sm:$0xff] %v1861
  %1967 = vst [vmem:[#allocation3 + $0xc8] sm:$0xff] %v1863
  %1968 = vst [vmem:[#allocation3 + $0xd0] sm:$0xff] %v1934
  %1969 = vst [vmem:[#allocation3 + $0xd8] sm:$0xff] %v1936
  %1970 = vst [vmem:[#allocation3 + $0xe0] sm:$0xff] %v1865
  %1971 = vst [vmem:[#allocation3 + $0xe8] sm:$0xff] %v1867
  %1972 = vst [vmem:[#allocation3 + $0xf0] sm:$0xff] %v1938
  %1973 = vst [vmem:[#allocation3 + $0xf8] sm:$0xff] %v1940
  %v1974 = vld [vmem:[%s5] sm:$0xff]
  %v1975 = vld [vmem:[%s5 + $0x8] sm:$0xff]
  %v1976 = vld [vmem:[%s5 + $0x10] sm:$0xff]
  %v1977 = vld [vmem:[%s5 + $0x18] sm:$0xff]
  %v1978 = vld [vmem:[%s5 + $0x20] sm:$0xff]
  %v1979 = vld [vmem:[%s5 + $0x28] sm:$0xff]
  %v1980 = vld [vmem:[%s5 + $0x30] sm:$0xff]
  %v1981 = vld [vmem:[%s5 + $0x38] sm:$0xff]
  %v1982 = vld [vmem:[%s5 + $0x40] sm:$0xff]
  %v1983 = vld [vmem:[%s5 + $0x48] sm:$0xff]
  %v1984 = vld [vmem:[%s5 + $0x50] sm:$0xff]
  %v1985 = vld [vmem:[%s5 + $0x58] sm:$0xff]
  %v1986 = vld [vmem:[%s5 + $0x60] sm:$0xff]
  %v1987 = vld [vmem:[%s5 + $0x68] sm:$0xff]
  %v1988 = vld [vmem:[%s5 + $0x70] sm:$0xff]
  %v1989 = vld [vmem:[%s5 + $0x78] sm:$0xff]
  %v1990 = vld [vmem:[%s5 + $0x80] sm:$0xff]
  %v1991 = vld [vmem:[%s5 + $0x88] sm:$0xff]
  %v1992 = vld [vmem:[%s5 + $0x90] sm:$0xff]
  %v1993 = vld [vmem:[%s5 + $0x98] sm:$0xff]
  %v1994 = vld [vmem:[%s5 + $0xa0] sm:$0xff]
  %v1995 = vld [vmem:[%s5 + $0xa8] sm:$0xff]
  %v1996 = vld [vmem:[%s5 + $0xb0] sm:$0xff]
  %v1997 = vld [vmem:[%s5 + $0xb8] sm:$0xff]
  %v1998 = vld [vmem:[%s5 + $0xc0] sm:$0xff]
  %v1999 = vld [vmem:[%s5 + $0xc8] sm:$0xff]
  %v2000 = vld [vmem:[%s5 + $0xd0] sm:$0xff]
  %v2001 = vld [vmem:[%s5 + $0xd8] sm:$0xff]
  %v2002 = vld [vmem:[%s5 + $0xe0] sm:$0xff]
  %v2003 = vld [vmem:[%s5 + $0xe8] sm:$0xff]
  %v2004 = vld [vmem:[%s5 + $0xf0] sm:$0xff]
  %v2005 = vld [vmem:[%s5 + $0xf8] sm:$0xff]
  %v2006 = vld [vmem:[#allocation3] sm:$0xff]
  %v2007 = vld [vmem:[#allocation3 + $0x8] sm:$0xff]
  %v2008 = vld [vmem:[#allocation3 + $0x10] sm:$0xff]
  %v2009 = vld [vmem:[#allocation3 + $0x18] sm:$0xff]
  %v2042 = vunpack.c.l.b16 %v1974
  %v2043 = vunpack.c.h.b16 %v1974
  %v2044 = vunpack.c.l.b16 %v1975
  %v2045 = vunpack.c.h.b16 %v1975
  %v2046 = vunpack.c.l.b16 %v1976
  %v2047 = vunpack.c.h.b16 %v1976
  %v2048 = vunpack.c.l.b16 %v1977
  %v2049 = vunpack.c.h.b16 %v1977
  %v2050 = vunpack.c.l.b16 %v1978
  %v2051 = vunpack.c.h.b16 %v1978
  %v2052 = vunpack.c.l.b16 %v1979
  %v2053 = vunpack.c.h.b16 %v1979
  %v2054 = vunpack.c.l.b16 %v1980
  %v2055 = vunpack.c.h.b16 %v1980
  %v2056 = vunpack.c.l.b16 %v1981
  %v2057 = vunpack.c.h.b16 %v1981
  %v2058 = vunpack.c.l.b16 %v1982
  %v2059 = vunpack.c.h.b16 %v1982
  %v2060 = vunpack.c.l.b16 %v1983
  %v2061 = vunpack.c.h.b16 %v1983
  %v2062 = vunpack.c.l.b16 %v1984
  %v2063 = vunpack.c.h.b16 %v1984
  %v2064 = vunpack.c.l.b16 %v1985
  %v2065 = vunpack.c.h.b16 %v1985
  %v2066 = vunpack.c.l.b16 %v1986
  %v2067 = vunpack.c.h.b16 %v1986
  %v2068 = vunpack.c.l.b16 %v1987
  %v2069 = vunpack.c.h.b16 %v1987
  %v2070 = vunpack.c.l.b16 %v1988
  %v2071 = vunpack.c.h.b16 %v1988
  %v2072 = vunpack.c.l.b16 %v1989
  %v2073 = vunpack.c.h.b16 %v1989
  %v2074 = vunpack.c.l.b16 %v1990
  %v2075 = vunpack.c.h.b16 %v1990
  %v2076 = vunpack.c.l.b16 %v1991
  %v2077 = vunpack.c.h.b16 %v1991
  %v2078 = vunpack.c.l.b16 %v1992
  %v2079 = vunpack.c.h.b16 %v1992
  %v2080 = vunpack.c.l.b16 %v1993
  %v2081 = vunpack.c.h.b16 %v1993
  %v2082 = vunpack.c.l.b16 %v1994
  %v2083 = vunpack.c.h.b16 %v1994
  %v2084 = vunpack.c.l.b16 %v1995
  %v2085 = vunpack.c.h.b16 %v1995
  %v2086 = vunpack.c.l.b16 %v1996
  %v2087 = vunpack.c.h.b16 %v1996
  %v2088 = vunpack.c.l.b16 %v1997
  %v2089 = vunpack.c.h.b16 %v1997
  %v2090 = vunpack.c.l.b16 %v1998
  %v2091 = vunpack.c.h.b16 %v1998
  %v2092 = vunpack.c.l.b16 %v1999
  %v2093 = vunpack.c.h.b16 %v1999
  %v2094 = vunpack.c.l.b16 %v2000
  %v2095 = vunpack.c.h.b16 %v2000
  %v2096 = vunpack.c.l.b16 %v2001
  %v2097 = vunpack.c.h.b16 %v2001
  %v2098 = vunpack.c.l.b16 %v2002
  %v2099 = vunpack.c.h.b16 %v2002
  %v2100 = vunpack.c.l.b16 %v2003
  %v2101 = vunpack.c.h.b16 %v2003
  %v2102 = vunpack.c.l.b16 %v2004
  %v2103 = vunpack.c.h.b16 %v2004
  %v2104 = vunpack.c.l.b16 %v2005
  %v2105 = vunpack.c.h.b16 %v2005
  %v2106 = vpack.c.b16 %v2046, %v2042
  %v2107 = vpack.c.b16 %v2047, %v2043
  %v2108 = vpack.c.b16 %v2048, %v2044
  %v2109 = vpack.c.b16 %v2049, %v2045
  %v2110 = vpack.c.b16 %v2054, %v2050
  %v2111 = vpack.c.b16 %v2055, %v2051
  %v2112 = vpack.c.b16 %v2056, %v2052
  %v2113 = vpack.c.b16 %v2057, %v2053
  %v2114 = vpack.c.b16 %v2062, %v2058
  %v2115 = vpack.c.b16 %v2063, %v2059
  %v2116 = vpack.c.b16 %v2064, %v2060
  %v2117 = vpack.c.b16 %v2065, %v2061
  %v2118 = vpack.c.b16 %v2070, %v2066
  %v2119 = vpack.c.b16 %v2071, %v2067
  %v2120 = vpack.c.b16 %v2072, %v2068
  %v2121 = vpack.c.b16 %v2073, %v2069
  %v2122 = vpack.c.b16 %v2078, %v2074
  %v2123 = vpack.c.b16 %v2079, %v2075
  %v2124 = vpack.c.b16 %v2080, %v2076
  %v2125 = vpack.c.b16 %v2081, %v2077
  %v2126 = vpack.c.b16 %v2086, %v2082
  %v2127 = vpack.c.b16 %v2087, %v2083
  %v2128 = vpack.c.b16 %v2088, %v2084
  %v2129 = vpack.c.b16 %v2089, %v2085
  %v2130 = vpack.c.b16 %v2094, %v2090
  %v2131 = vpack.c.b16 %v2095, %v2091
  %v2132 = vpack.c.b16 %v2096, %v2092
  %v2133 = vpack.c.b16 %v2097, %v2093
  %v2134 = vpack.c.b16 %v2102, %v2098
  %v2135 = vpack.c.b16 %v2103, %v2099
  %v2136 = vpack.c.b16 %v2104, %v2100
  %v2137 = vpack.c.b16 %v2105, %v2101
  %2170 = vmatprep.subr.bf16.mxu0 %v2107
  %2171 = vmatpush1.bf16.msra.mxu0 %v2106
  %2172 = vmatprep.subr.bf16.mxu0 %v2111
  %2173 = vmatpush1.bf16.msra.mxu0 %v2110
  %2174 = vmatprep.subr.bf16.mxu0 %v2115
  %2175 = vmatpush1.bf16.msra.mxu0 %v2114
  %2176 = vmatprep.subr.bf16.mxu0 %v2119
  %2177 = vmatpush1.bf16.msra.mxu0 %v2118
  %2178 = vmatprep.subr.bf16.mxu0 %v2123
  %2179 = vmatpush1.bf16.msra.mxu0 %v2122
  %2180 = vmatprep.subr.bf16.mxu0 %v2127
  %2181 = vmatpush1.bf16.msra.mxu0 %v2126
  %2182 = vmatprep.subr.bf16.mxu0 %v2131
  %2183 = vmatpush1.bf16.msra.mxu0 %v2130
  %2184 = vmatprep.subr.bf16.mxu0 %v2135
  %2185 = vmatpush1.bf16.msra.mxu0 %v2134
  %2186 = vmatprep.subr.bf16.mxu0 0
  %2187 = vmatpush1.bf16.msra.mxu0 0
  %2188 = vmatprep.subr.bf16.mxu0 0
  %2189 = vmatpush1.bf16.msra.mxu0 0
  %2190 = vmatprep.subr.bf16.mxu0 0
  %2191 = vmatpush1.bf16.msra.mxu0 0
  %2192 = vmatprep.subr.bf16.mxu0 0
  %2193 = vmatpush1.bf16.msra.mxu0 0
  %2194 = vmatprep.subr.bf16.mxu0 0
  %2195 = vmatpush1.bf16.msra.mxu0 0
  %2196 = vmatprep.subr.bf16.mxu0 0
  %2197 = vmatpush1.bf16.msra.mxu0 0
  %2198 = vmatprep.subr.bf16.mxu0 0
  %2199 = vmatpush1.bf16.msra.mxu0 0
  %2200 = vmatprep.subr.bf16.mxu0 0
  %2201 = vmatpush1.bf16.msra.mxu0 0
  %2202 = vmatprep.mubr.bf16.mxu0 0
  %2203 = vmatmul.mubr.bf16.gmra.mrb[0].mxu0 0
  %v2204 = vpop.f32.mrb[0].mxu0
  %v2205 = vadd.f32 0.0, %v2204
  %v2206 = vpop.f32.mrb[0].mxu0
  %v2207 = vadd.f32 0.0, %v2206
  %v2208 = vpop.f32.mrb[0].mxu0
  %v2209 = vpop.f32.mrb[0].mxu0
  %2210 = vdwg.mxu0
  %2211 = vmatprep.subr.bf16.mxu0 %v2109
  %2212 = vmatpush1.bf16.msra.mxu0 %v2108
  %2213 = vmatprep.subr.bf16.mxu0 %v2113
  %2214 = vmatpush1.bf16.msra.mxu0 %v2112
  %2215 = vmatprep.subr.bf16.mxu0 %v2117
  %2216 = vmatpush1.bf16.msra.mxu0 %v2116
  %2217 = vmatprep.subr.bf16.mxu0 %v2121
  %2218 = vmatpush1.bf16.msra.mxu0 %v2120
  %2219 = vmatprep.subr.bf16.mxu0 %v2125
  %2220 = vmatpush1.bf16.msra.mxu0 %v2124
  %2221 = vmatprep.subr.bf16.mxu0 %v2129
  %2222 = vmatpush1.bf16.msra.mxu0 %v2128
  %2223 = vmatprep.subr.bf16.mxu0 %v2133
  %2224 = vmatpush1.bf16.msra.mxu0 %v2132
  %2225 = vmatprep.subr.bf16.mxu0 %v2137
  %2226 = vmatpush1.bf16.msra.mxu0 %v2136
  %2227 = vmatprep.subr.bf16.mxu0 0
  %2228 = vmatpush1.bf16.msra.mxu0 0
  %2229 = vmatprep.subr.bf16.mxu0 0
  %2230 = vmatpush1.bf16.msra.mxu0 0
  %2231 = vmatprep.subr.bf16.mxu0 0
  %2232 = vmatpush1.bf16.msra.mxu0 0
  %2233 = vmatprep.subr.bf16.mxu0 0
  %2234 = vmatpush1.bf16.msra.mxu0 0
  %2235 = vmatprep.subr.bf16.mxu0 0
  %2236 = vmatpush1.bf16.msra.mxu0 0
  %2237 = vmatprep.subr.bf16.mxu0 0
  %2238 = vmatpush1.bf16.msra.mxu0 0
  %2239 = vmatprep.subr.bf16.mxu0 0
  %2240 = vmatpush1.bf16.msra.mxu0 0
  %2241 = vmatprep.subr.bf16.mxu0 0
  %2242 = vmatpush1.bf16.msra.mxu0 0
  %2243 = vmatprep.mubr.bf16.mxu0 0
  %2244 = vmatmul.mubr.bf16.gmra.mrb[0].mxu0 0
  %v2245 = vpop.f32.mrb[0].mxu0
  %v2246 = vadd.f32 0.0, %v2245
  %v2247 = vpop.f32.mrb[0].mxu0
  %v2248 = vadd.f32 0.0, %v2247
  %v2249 = vpop.f32.mrb[0].mxu0
  %v2250 = vpop.f32.mrb[0].mxu0
  %2251 = vdwg.mxu0
  %v2252 = vadd.f32 %v2006, %v2205
  %v2253 = vadd.f32 %v2007, %v2207
  %v2254 = vadd.f32 %v2008, %v2246
  %v2255 = vadd.f32 %v2009, %v2248
  %v2256 = vxor.u32 %v2252, 2147483648
  %v2257 = vxor.u32 %v2253, 2147483648
  %v2258 = vxor.u32 %v2254, 2147483648
  %v2259 = vmul.f32 %v2256, 1.442695
  %v2260 = vpow.pop %v2259
  %v2261 = vmul.f32 %v2257, 1.442695
  %v2262 = vpow.pop %v2261
  %v2263 = vmul.f32 %v2258, 1.442695
  %v2264 = vpow.pop %v2263
  %v2265 = vadd.f32 %v2260, 1.0
  %v2266 = vadd.f32 %v2262, 1.0
  %v2267 = vadd.f32 %v2264, 1.0
  %v2268 = vrcp.pop %v2265
  %v2269 = vmul.f32 1.0, %v2268
  %v2270 = vrcp.pop %v2266
  %v2271 = vmul.f32 1.0, %v2270
  %v2272 = vrcp.pop %v2267
  %v2273 = vmul.f32 1.0, %v2272
  %v2274 = vtanh.pop %v2255
  %v2275 = vmul.f32 %v2271, 0.0
  %v2276 = vmul.f32 %v2269, %v2274
  %v2277 = vadd.f32 %v2275, %v2276
  %v2278 = vtanh.pop %v2277
  %v2279 = vmul.f32 %v2273, %v2278
  %v2280 = vld [vmem:[%s744] sm:$0xff]
  %v2281 = vld [vmem:[%s744 + $0x8] sm:$0xff]
  %v2282 = vld [vmem:[%s744 + $0x10] sm:$0xff]
  %v2283 = vld [vmem:[%s744 + $0x18] sm:$0xff]
  %v2284 = vpack.c.bf16 %v2279, %v2279
  %2285 = vmatprep.subr.bf16.mxu0 %v2107
  %2286 = vmatpush1.bf16.msra.mxu0 %v2106
  %2287 = vmatprep.subr.bf16.mxu0 %v2111
  %2288 = vmatpush1.bf16.msra.mxu0 %v2110
  %2289 = vmatprep.subr.bf16.mxu0 %v2115
  %2290 = vmatpush1.bf16.msra.mxu0 %v2114
  %2291 = vmatprep.subr.bf16.mxu0 %v2119
  %2292 = vmatpush1.bf16.msra.mxu0 %v2118
  %2293 = vmatprep.subr.bf16.mxu0 %v2123
  %2294 = vmatpush1.bf16.msra.mxu0 %v2122
  %2295 = vmatprep.subr.bf16.mxu0 %v2127
  %2296 = vmatpush1.bf16.msra.mxu0 %v2126
  %2297 = vmatprep.subr.bf16.mxu0 %v2131
  %2298 = vmatpush1.bf16.msra.mxu0 %v2130
  %2299 = vmatprep.subr.bf16.mxu0 %v2135
  %2300 = vmatpush1.bf16.msra.mxu0 %v2134
  %2301 = vmatprep.subr.bf16.mxu0 0
  %2302 = vmatpush1.bf16.msra.mxu0 0
  %2303 = vmatprep.subr.bf16.mxu0 0
  %2304 = vmatpush1.bf16.msra.mxu0 0
  %2305 = vmatprep.subr.bf16.mxu0 0
  %2306 = vmatpush1.bf16.msra.mxu0 0
  %2307 = vmatprep.subr.bf16.mxu0 0
  %2308 = vmatpush1.bf16.msra.mxu0 0
  %2309 = vmatprep.subr.bf16.mxu0 0
  %2310 = vmatpush1.bf16.msra.mxu0 0
  %2311 = vmatprep.subr.bf16.mxu0 0
  %2312 = vmatpush1.bf16.msra.mxu0 0
  %2313 = vmatprep.subr.bf16.mxu0 0
  %2314 = vmatpush1.bf16.msra.mxu0 0
  %2315 = vmatprep.subr.bf16.mxu0 0
  %2316 = vmatpush1.bf16.msra.mxu0 0
  %2317 = vmatprep.mubr.bf16.mxu0 0
  %2318 = vmatmul.mubr.bf16.gmra.mrb[0].mxu0 %v2284
  %v2319 = vpop.f32.mrb[0].mxu0
  %v2320 = vadd.f32 0.0, %v2319
  %v2321 = vpop.f32.mrb[0].mxu0
  %v2322 = vadd.f32 0.0, %v2321
  %v2323 = vpop.f32.mrb[0].mxu0
  %v2324 = vpop.f32.mrb[0].mxu0
  %2325 = vdwg.mxu0
  %2326 = vmatprep.subr.bf16.mxu0 %v2109
  %2327 = vmatpush1.bf16.msra.mxu0 %v2108
  %2328 = vmatprep.subr.bf16.mxu0 %v2113
  %2329 = vmatpush1.bf16.msra.mxu0 %v2112
  %2330 = vmatprep.subr.bf16.mxu0 %v2117
  %2331 = vmatpush1.bf16.msra.mxu0 %v2116
  %2332 = vmatprep.subr.bf16.mxu0 %v2121
  %2333 = vmatpush1.bf16.msra.mxu0 %v2120
  %2334 = vmatprep.subr.bf16.mxu0 %v2125
  %2335 = vmatpush1.bf16.msra.mxu0 %v2124
  %2336 = vmatprep.subr.bf16.mxu0 %v2129
  %2337 = vmatpush1.bf16.msra.mxu0 %v2128
  %2338 = vmatprep.subr.bf16.mxu0 %v2133
  %2339 = vmatpush1.bf16.msra.mxu0 %v2132
  %2340 = vmatprep.subr.bf16.mxu0 %v2137
  %2341 = vmatpush1.bf16.msra.mxu0 %v2136
  %2342 = vmatprep.subr.bf16.mxu0 0
  %2343 = vmatpush1.bf16.msra.mxu0 0
  %2344 = vmatprep.subr.bf16.mxu0 0
  %2345 = vmatpush1.bf16.msra.mxu0 0
  %2346 = vmatprep.subr.bf16.mxu0 0
  %2347 = vmatpush1.bf16.msra.mxu0 0
  %2348 = vmatprep.subr.bf16.mxu0 0
  %2349 = vmatpush1.bf16.msra.mxu0 0
  %2350 = vmatprep.subr.bf16.mxu0 0
  %2351 = vmatpush1.bf16.msra.mxu0 0
  %2352 = vmatprep.subr.bf16.mxu0 0
  %2353 = vmatpush1.bf16.msra.mxu0 0
  %2354 = vmatprep.subr.bf16.mxu0 0
  %2355 = vmatpush1.bf16.msra.mxu0 0
  %2356 = vmatprep.subr.bf16.mxu0 0
  %2357 = vmatpush1.bf16.msra.mxu0 0
  %2358 = vmatprep.mubr.bf16.mxu0 0
  %2359 = vmatmul.mubr.bf16.gmra.mrb[0].mxu0 %v2284
  %v2360 = vpop.f32.mrb[0].mxu0
  %v2361 = vadd.f32 0.0, %v2360
  %v2362 = vpop.f32.mrb[0].mxu0
  %v2363 = vadd.f32 0.0, %v2362
  %v2364 = vpop.f32.mrb[0].mxu0
  %v2365 = vpop.f32.mrb[0].mxu0
  %2366 = vdwg.mxu0
  %v2367 = vadd.f32 %v2280, %v2320
  %v2368 = vadd.f32 %v2281, %v2322
  %v2369 = vadd.f32 %v2282, %v2361
  %v2370 = vadd.f32 %v2283, %v2363
  %v2371 = vxor.u32 %v2367, 2147483648
  %v2372 = vxor.u32 %v2368, 2147483648
  %v2373 = vxor.u32 %v2369, 2147483648
  %v2374 = vmul.f32 %v2371, 1.442695
  %v2375 = vpow.pop %v2374
  %v2376 = vmul.f32 %v2372, 1.442695
  %v2377 = vpow.pop %v2376
  %v2378 = vmul.f32 %v2373, 1.442695
  %v2379 = vpow.pop %v2378
  %v2380 = vadd.f32 %v2375, 1.0
  %v2381 = vadd.f32 %v2377, 1.0
  %v2382 = vadd.f32 %v2379, 1.0
  %v2383 = vrcp.pop %v2380
  %v2384 = vmul.f32 1.0, %v2383
  %v2385 = vrcp.pop %v2381
  %v2386 = vmul.f32 1.0, %v2385
  %v2387 = vrcp.pop %v2382
  %v2388 = vmul.f32 1.0, %v2387
  %v2389 = vtanh.pop %v2370
  %v2390 = vmul.f32 %v2386, %v2277
  %v2391 = vmul.f32 %v2384, %v2389
  %v2392 = vadd.f32 %v2390, %v2391
  %v2393 = vtanh.pop %v2392
  %v2394 = vmul.f32 %v2388, %v2393
  %v2395 = vld [vmem:[%s862] sm:$0xff]
  %v2396 = vld [vmem:[%s862 + $0x8] sm:$0xff]
  %v2397 = vld [vmem:[%s862 + $0x10] sm:$0xff]
  %v2398 = vld [vmem:[%s862 + $0x18] sm:$0xff]
  %v2399 = vpack.c.bf16 %v2394, %v2394
  %2400 = vmatprep.subr.bf16.mxu0 %v2107
  %2401 = vmatpush1.bf16.msra.mxu0 %v2106
  %2402 = vmatprep.subr.bf16.mxu0 %v2111
  %2403 = vmatpush1.bf16.msra.mxu0 %v2110
  %2404 = vmatprep.subr.bf16.mxu0 %v2115
  %2405 = vmatpush1.bf16.msra.mxu0 %v2114
  %2406 = vmatprep.subr.bf16.mxu0 %v2119
  %2407 = vmatpush1.bf16.msra.mxu0 %v2118
  %2408 = vmatprep.subr.bf16.mxu0 %v2123
  %2409 = vmatpush1.bf16.msra.mxu0 %v2122
  %2410 = vmatprep.subr.bf16.mxu0 %v2127
  %2411 = vmatpush1.bf16.msra.mxu0 %v2126
  %2412 = vmatprep.subr.bf16.mxu0 %v2131
  %2413 = vmatpush1.bf16.msra.mxu0 %v2130
  %2414 = vmatprep.subr.bf16.mxu0 %v2135
  %2415 = vmatpush1.bf16.msra.mxu0 %v2134
  %2416 = vmatprep.subr.bf16.mxu0 0
  %2417 = vmatpush1.bf16.msra.mxu0 0
  %2418 = vmatprep.subr.bf16.mxu0 0
  %2419 = vmatpush1.bf16.msra.mxu0 0
  %2420 = vmatprep.subr.bf16.mxu0 0
  %2421 = vmatpush1.bf16.msra.mxu0 0
  %2422 = vmatprep.subr.bf16.mxu0 0
  %2423 = vmatpush1.bf16.msra.mxu0 0
  %2424 = vmatprep.subr.bf16.mxu0 0
  %2425 = vmatpush1.bf16.msra.mxu0 0
  %2426 = vmatprep.subr.bf16.mxu0 0
  %2427 = vmatpush1.bf16.msra.mxu0 0
  %2428 = vmatprep.subr.bf16.mxu0 0
  %2429 = vmatpush1.bf16.msra.mxu0 0
  %2430 = vmatprep.subr.bf16.mxu0 0
  %2431 = vmatpush1.bf16.msra.mxu0 0
  %2432 = vmatprep.mubr.bf16.mxu0 0
  %2433 = vmatmul.mubr.bf16.gmra.mrb[0].mxu0 %v2399
  %v2434 = vpop.f32.mrb[0].mxu0
  %v2435 = vadd.f32 0.0, %v2434
  %v2436 = vpop.f32.mrb[0].mxu0
  %v2437 = vadd.f32 0.0, %v2436
  %v2438 = vpop.f32.mrb[0].mxu0
  %v2439 = vpop.f32.mrb[0].mxu0
  %2440 = vdwg.mxu0
  %2441 = vmatprep.subr.bf16.mxu0 %v2109
  %2442 = vmatpush1.bf16.msra.mxu0 %v2108
  %2443 = vmatprep.subr.bf16.mxu0 %v2113
  %2444 = vmatpush1.bf16.msra.mxu0 %v2112
  %2445 = vmatprep.subr.bf16.mxu0 %v2117
  %2446 = vmatpush1.bf16.msra.mxu0 %v2116
  %2447 = vmatprep.subr.bf16.mxu0 %v2121
  %2448 = vmatpush1.bf16.msra.mxu0 %v2120
  %2449 = vmatprep.subr.bf16.mxu0 %v2125
  %2450 = vmatpush1.bf16.msra.mxu0 %v2124
  %2451 = vmatprep.subr.bf16.mxu0 %v2129
  %2452 = vmatpush1.bf16.msra.mxu0 %v2128
  %2453 = vmatprep.subr.bf16.mxu0 %v2133
  %2454 = vmatpush1.bf16.msra.mxu0 %v2132
  %2455 = vmatprep.subr.bf16.mxu0 %v2137
  %2456 = vmatpush1.bf16.msra.mxu0 %v2136
  %2457 = vmatprep.subr.bf16.mxu0 0
  %2458 = vmatpush1.bf16.msra.mxu0 0
  %2459 = vmatprep.subr.bf16.mxu0 0
  %2460 = vmatpush1.bf16.msra.mxu0 0
  %2461 = vmatprep.subr.bf16.mxu0 0
  %2462 = vmatpush1.bf16.msra.mxu0 0
  %2463 = vmatprep.subr.bf16.mxu0 0
  %2464 = vmatpush1.bf16.msra.mxu0 0
  %2465 = vmatprep.subr.bf16.mxu0 0
  %2466 = vmatpush1.bf16.msra.mxu0 0
  %2467 = vmatprep.subr.bf16.mxu0 0
  %2468 = vmatpush1.bf16.msra.mxu0 0
  %2469 = vmatprep.subr.bf16.mxu0 0
  %2470 = vmatpush1.bf16.msra.mxu0 0
  %2471 = vmatprep.subr.bf16.mxu0 0
  %2472 = vmatpush1.bf16.msra.mxu0 0
  %2473 = vmatprep.mubr.bf16.mxu0 0
  %2474 = vmatmul.mubr.bf16.gmra.mrb[0].mxu0 %v2399
  %v2475 = vpop.f32.mrb[0].mxu0
  %v2476 = vadd.f32 0.0, %v2475
  %v2477 = vpop.f32.mrb[0].mxu0
  %v2478 = vadd.f32 0.0, %v2477
  %v2479 = vpop.f32.mrb[0].mxu0
  %v2480 = vpop.f32.mrb[0].mxu0
  %2481 = vdwg.mxu0
  %v2482 = vadd.f32 %v2395, %v2435
  %v2483 = vadd.f32 %v2396, %v2437
  %v2484 = vadd.f32 %v2397, %v2476
  %v2485 = vadd.f32 %v2398, %v2478
  %v2486 = vxor.u32 %v2482, 2147483648
  %v2487 = vxor.u32 %v2483, 2147483648
  %v2488 = vxor.u32 %v2484, 2147483648
  %v2489 = vmul.f32 %v2486, 1.442695
  %v2490 = vpow.pop %v2489
  %v2491 = vmul.f32 %v2487, 1.442695
  %v2492 = vpow.pop %v2491
  %v2493 = vmul.f32 %v2488, 1.442695
  %v2494 = vpow.pop %v2493
  %v2495 = vadd.f32 %v2490, 1.0
  %v2496 = vadd.f32 %v2492, 1.0
  %v2497 = vadd.f32 %v2494, 1.0
  %v2498 = vrcp.pop %v2495
  %v2499 = vmul.f32 1.0, %v2498
  %v2500 = vrcp.pop %v2496
  %v2501 = vmul.f32 1.0, %v2500
  %v2502 = vrcp.pop %v2497
  %v2503 = vmul.f32 1.0, %v2502
  %v2504 = vtanh.pop %v2485
  %v2505 = vmul.f32 %v2501, %v2392
  %v2506 = vmul.f32 %v2499, %v2504
  %v2507 = vadd.f32 %v2505, %v2506
  %v2508 = vtanh.pop %v2507
  %v2509 = vmul.f32 %v2503, %v2508
  %v2510 = vld [vmem:[%s980] sm:$0xff]
  %v2511 = vld [vmem:[%s980 + $0x8] sm:$0xff]
  %v2512 = vld [vmem:[%s980 + $0x10] sm:$0xff]
  %v2513 = vld [vmem:[%s980 + $0x18] sm:$0xff]
  %v2514 = vpack.c.bf16 %v2509, %v2509
  %2515 = vmatprep.subr.bf16.mxu0 %v2107
  %2516 = vmatpush1.bf16.msra.mxu0 %v2106
  %2517 = vmatprep.subr.bf16.mxu0 %v2111
  %2518 = vmatpush1.bf16.msra.mxu0 %v2110
  %2519 = vmatprep.subr.bf16.mxu0 %v2115
  %2520 = vmatpush1.bf16.msra.mxu0 %v2114
  %2521 = vmatprep.subr.bf16.mxu0 %v2119
  %2522 = vmatpush1.bf16.msra.mxu0 %v2118
  %2523 = vmatprep.subr.bf16.mxu0 %v2123
  %2524 = vmatpush1.bf16.msra.mxu0 %v2122
  %2525 = vmatprep.subr.bf16.mxu0 %v2127
  %2526 = vmatpush1.bf16.msra.mxu0 %v2126
  %2527 = vmatprep.subr.bf16.mxu0 %v2131
  %2528 = vmatpush1.bf16.msra.mxu0 %v2130
  %2529 = vmatprep.subr.bf16.mxu0 %v2135
  %2530 = vmatpush1.bf16.msra.mxu0 %v2134
  %2531 = vmatprep.subr.bf16.mxu0 0
  %2532 = vmatpush1.bf16.msra.mxu0 0
  %2533 = vmatprep.subr.bf16.mxu0 0
  %2534 = vmatpush1.bf16.msra.mxu0 0
  %2535 = vmatprep.subr.bf16.mxu0 0
  %2536 = vmatpush1.bf16.msra.mxu0 0
  %2537 = vmatprep.subr.bf16.mxu0 0
  %2538 = vmatpush1.bf16.msra.mxu0 0
  %2539 = vmatprep.subr.bf16.mxu0 0
  %2540 = vmatpush1.bf16.msra.mxu0 0
  %2541 = vmatprep.subr.bf16.mxu0 0
  %2542 = vmatpush1.bf16.msra.mxu0 0
  %2543 = vmatprep.subr.bf16.mxu0 0
  %2544 = vmatpush1.bf16.msra.mxu0 0
  %2545 = vmatprep.subr.bf16.mxu0 0
  %2546 = vmatpush1.bf16.msra.mxu0 0
  %2547 = vmatprep.mubr.bf16.mxu0 0
  %2548 = vmatmul.mubr.bf16.gmra.mrb[0].mxu0 %v2514
  %v2549 = vpop.f32.mrb[0].mxu0
  %v2550 = vadd.f32 0.0, %v2549
  %v2551 = vpop.f32.mrb[0].mxu0
  %v2552 = vadd.f32 0.0, %v2551
  %v2553 = vpop.f32.mrb[0].mxu0
  %v2554 = vpop.f32.mrb[0].mxu0
  %2555 = vdwg.mxu0
  %2556 = vmatprep.subr.bf16.mxu0 %v2109
  %2557 = vmatpush1.bf16.msra.mxu0 %v2108
  %2558 = vmatprep.subr.bf16.mxu0 %v2113
  %2559 = vmatpush1.bf16.msra.mxu0 %v2112
  %2560 = vmatprep.subr.bf16.mxu0 %v2117
  %2561 = vmatpush1.bf16.msra.mxu0 %v2116
  %2562 = vmatprep.subr.bf16.mxu0 %v2121
  %2563 = vmatpush1.bf16.msra.mxu0 %v2120
  %2564 = vmatprep.subr.bf16.mxu0 %v2125
  %2565 = vmatpush1.bf16.msra.mxu0 %v2124
  %2566 = vmatprep.subr.bf16.mxu0 %v2129
  %2567 = vmatpush1.bf16.msra.mxu0 %v2128
  %2568 = vmatprep.subr.bf16.mxu0 %v2133
  %2569 = vmatpush1.bf16.msra.mxu0 %v2132
  %2570 = vmatprep.subr.bf16.mxu0 %v2137
  %2571 = vmatpush1.bf16.msra.mxu0 %v2136
  %2572 = vmatprep.subr.bf16.mxu0 0
  %2573 = vmatpush1.bf16.msra.mxu0 0
  %2574 = vmatprep.subr.bf16.mxu0 0
  %2575 = vmatpush1.bf16.msra.mxu0 0
  %2576 = vmatprep.subr.bf16.mxu0 0
  %2577 = vmatpush1.bf16.msra.mxu0 0
  %2578 = vmatprep.subr.bf16.mxu0 0
  %2579 = vmatpush1.bf16.msra.mxu0 0
  %2580 = vmatprep.subr.bf16.mxu0 0
  %2581 = vmatpush1.bf16.msra.mxu0 0
  %2582 = vmatprep.subr.bf16.mxu0 0
  %2583 = vmatpush1.bf16.msra.mxu0 0
  %2584 = vmatprep.subr.bf16.mxu0 0
  %2585 = vmatpush1.bf16.msra.mxu0 0
  %2586 = vmatprep.subr.bf16.mxu0 0
  %2587 = vmatpush1.bf16.msra.mxu0 0
  %2588 = vmatprep.mubr.bf16.mxu0 0
  %2589 = vmatmul.mubr.bf16.gmra.mrb[0].mxu0 %v2514
  %v2590 = vpop.f32.mrb[0].mxu0
  %v2591 = vadd.f32 0.0, %v2590
  %v2592 = vpop.f32.mrb[0].mxu0
  %v2593 = vadd.f32 0.0, %v2592
  %v2594 = vpop.f32.mrb[0].mxu0
  %v2595 = vpop.f32.mrb[0].mxu0
  %2596 = vdwg.mxu0
  %v2597 = vadd.f32 %v2510, %v2550
  %v2598 = vadd.f32 %v2511, %v2552
  %v2599 = vadd.f32 %v2512, %v2591
  %v2600 = vadd.f32 %v2513, %v2593
  %v2601 = vxor.u32 %v2597, 2147483648
  %v2602 = vxor.u32 %v2598, 2147483648
  %v2603 = vxor.u32 %v2599, 2147483648
  %v2604 = vmul.f32 %v2601, 1.442695
  %v2605 = vpow.pop %v2604
  %v2606 = vmul.f32 %v2602, 1.442695
  %v2607 = vpow.pop %v2606
  %v2608 = vmul.f32 %v2603, 1.442695
  %v2609 = vpow.pop %v2608
  %v2610 = vadd.f32 %v2605, 1.0
  %v2611 = vadd.f32 %v2607, 1.0
  %v2612 = vadd.f32 %v2609, 1.0
  %v2613 = vrcp.pop %v2610
  %v2614 = vmul.f32 1.0, %v2613
  %v2615 = vrcp.pop %v2611
  %v2616 = vmul.f32 1.0, %v2615
  %v2617 = vrcp.pop %v2612
  %v2618 = vmul.f32 1.0, %v2617
  %v2619 = vtanh.pop %v2600
  %v2620 = vmul.f32 %v2616, %v2507
  %v2621 = vmul.f32 %v2614, %v2619
  %v2622 = vadd.f32 %v2620, %v2621
  %v2623 = vtanh.pop %v2622
  %v2624 = vmul.f32 %v2618, %v2623
  %v2625 = vld [vmem:[%s1098] sm:$0xff]
  %v2626 = vld [vmem:[%s1098 + $0x8] sm:$0xff]
  %v2627 = vld [vmem:[%s1098 + $0x10] sm:$0xff]
  %v2628 = vld [vmem:[%s1098 + $0x18] sm:$0xff]
  %v2629 = vpack.c.bf16 %v2624, %v2624
  %2630 = vmatprep.subr.bf16.mxu0 %v2107
  %2631 = vmatpush1.bf16.msra.mxu0 %v2106
  %2632 = vmatprep.subr.bf16.mxu0 %v2111
  %2633 = vmatpush1.bf16.msra.mxu0 %v2110
  %2634 = vmatprep.subr.bf16.mxu0 %v2115
  %2635 = vmatpush1.bf16.msra.mxu0 %v2114
  %2636 = vmatprep.subr.bf16.mxu0 %v2119
  %2637 = vmatpush1.bf16.msra.mxu0 %v2118
  %2638 = vmatprep.subr.bf16.mxu0 %v2123
  %2639 = vmatpush1.bf16.msra.mxu0 %v2122
  %2640 = vmatprep.subr.bf16.mxu0 %v2127
  %2641 = vmatpush1.bf16.msra.mxu0 %v2126
  %2642 = vmatprep.subr.bf16.mxu0 %v2131
  %2643 = vmatpush1.bf16.msra.mxu0 %v2130
  %2644 = vmatprep.subr.bf16.mxu0 %v2135
  %2645 = vmatpush1.bf16.msra.mxu0 %v2134
  %2646 = vmatprep.subr.bf16.mxu0 0
  %2647 = vmatpush1.bf16.msra.mxu0 0
  %2648 = vmatprep.subr.bf16.mxu0 0
  %2649 = vmatpush1.bf16.msra.mxu0 0
  %2650 = vmatprep.subr.bf16.mxu0 0
  %2651 = vmatpush1.bf16.msra.mxu0 0
  %2652 = vmatprep.subr.bf16.mxu0 0
  %2653 = vmatpush1.bf16.msra.mxu0 0
  %2654 = vmatprep.subr.bf16.mxu0 0
  %2655 = vmatpush1.bf16.msra.mxu0 0
  %2656 = vmatprep.subr.bf16.mxu0 0
  %2657 = vmatpush1.bf16.msra.mxu0 0
  %2658 = vmatprep.subr.bf16.mxu0 0
  %2659 = vmatpush1.bf16.msra.mxu0 0
  %2660 = vmatprep.subr.bf16.mxu0 0
  %2661 = vmatpush1.bf16.msra.mxu0 0
  %2662 = vmatprep.mubr.bf16.mxu0 0
  %2663 = vmatmul.mubr.bf16.gmra.mrb[0].mxu0 %v2629
  %v2664 = vpop.f32.mrb[0].mxu0
  %v2665 = vadd.f32 0.0, %v2664
  %v2666 = vpop.f32.mrb[0].mxu0
  %v2667 = vadd.f32 0.0, %v2666
  %v2668 = vpop.f32.mrb[0].mxu0
  %v2669 = vpop.f32.mrb[0].mxu0
  %2670 = vdwg.mxu0
  %2671 = vmatprep.subr.bf16.mxu0 %v2109
  %2672 = vmatpush1.bf16.msra.mxu0 %v2108
  %2673 = vmatprep.subr.bf16.mxu0 %v2113
  %2674 = vmatpush1.bf16.msra.mxu0 %v2112
  %2675 = vmatprep.subr.bf16.mxu0 %v2117
  %2676 = vmatpush1.bf16.msra.mxu0 %v2116
  %2677 = vmatprep.subr.bf16.mxu0 %v2121
  %2678 = vmatpush1.bf16.msra.mxu0 %v2120
  %2679 = vmatprep.subr.bf16.mxu0 %v2125
  %2680 = vmatpush1.bf16.msra.mxu0 %v2124
  %2681 = vmatprep.subr.bf16.mxu0 %v2129
  %2682 = vmatpush1.bf16.msra.mxu0 %v2128
  %2683 = vmatprep.subr.bf16.mxu0 %v2133
  %2684 = vmatpush1.bf16.msra.mxu0 %v2132
  %2685 = vmatprep.subr.bf16.mxu0 %v2137
  %2686 = vmatpush1.bf16.msra.mxu0 %v2136
  %2687 = vmatprep.subr.bf16.mxu0 0
  %2688 = vmatpush1.bf16.msra.mxu0 0
  %2689 = vmatprep.subr.bf16.mxu0 0
  %2690 = vmatpush1.bf16.msra.mxu0 0
  %2691 = vmatprep.subr.bf16.mxu0 0
  %2692 = vmatpush1.bf16.msra.mxu0 0
  %2693 = vmatprep.subr.bf16.mxu0 0
  %2694 = vmatpush1.bf16.msra.mxu0 0
  %2695 = vmatprep.subr.bf16.mxu0 0
  %2696 = vmatpush1.bf16.msra.mxu0 0
  %2697 = vmatprep.subr.bf16.mxu0 0
  %2698 = vmatpush1.bf16.msra.mxu0 0
  %2699 = vmatprep.subr.bf16.mxu0 0
  %2700 = vmatpush1.bf16.msra.mxu0 0
  %2701 = vmatprep.subr.bf16.mxu0 0
  %2702 = vmatpush1.bf16.msra.mxu0 0
  %2703 = vmatprep.mubr.bf16.mxu0 0
  %2704 = vmatmul.mubr.bf16.gmra.mrb[0].mxu0 %v2629
  %v2705 = vpop.f32.mrb[0].mxu0
  %v2706 = vadd.f32 0.0, %v2705
  %v2707 = vpop.f32.mrb[0].mxu0
  %v2708 = vadd.f32 0.0, %v2707
  %v2709 = vpop.f32.mrb[0].mxu0
  %v2710 = vpop.f32.mrb[0].mxu0
  %2711 = vdwg.mxu0
  %v2712 = vadd.f32 %v2625, %v2665
  %v2713 = vadd.f32 %v2626, %v2667
  %v2714 = vadd.f32 %v2627, %v2706
  %v2715 = vadd.f32 %v2628, %v2708
  %v2716 = vxor.u32 %v2712, 2147483648
  %v2717 = vxor.u32 %v2713, 2147483648
  %v2718 = vxor.u32 %v2714, 2147483648
  %v2719 = vmul.f32 %v2716, 1.442695
  %v2720 = vpow.pop %v2719
  %v2721 = vmul.f32 %v2717, 1.442695
  %v2722 = vpow.pop %v2721
  %v2723 = vmul.f32 %v2718, 1.442695
  %v2724 = vpow.pop %v2723
  %v2725 = vadd.f32 %v2720, 1.0
  %v2726 = vadd.f32 %v2722, 1.0
  %v2727 = vadd.f32 %v2724, 1.0
  %v2728 = vrcp.pop %v2725
  %v2729 = vmul.f32 1.0, %v2728
  %v2730 = vrcp.pop %v2726
  %v2731 = vmul.f32 1.0, %v2730
  %v2732 = vrcp.pop %v2727
  %v2733 = vmul.f32 1.0, %v2732
  %v2734 = vtanh.pop %v2715
  %v2735 = vmul.f32 %v2731, %v2622
  %v2736 = vmul.f32 %v2729, %v2734
  %v2737 = vadd.f32 %v2735, %v2736
  %v2738 = vtanh.pop %v2737
  %v2739 = vmul.f32 %v2733, %v2738
  %v2740 = vld [vmem:[%s1216] sm:$0xff]
  %v2741 = vld [vmem:[%s1216 + $0x8] sm:$0xff]
  %v2742 = vld [vmem:[%s1216 + $0x10] sm:$0xff]
  %v2743 = vld [vmem:[%s1216 + $0x18] sm:$0xff]
  %v2744 = vpack.c.bf16 %v2739, %v2739
  %2745 = vmatprep.subr.bf16.mxu0 %v2107
  %2746 = vmatpush1.bf16.msra.mxu0 %v2106
  %2747 = vmatprep.subr.bf16.mxu0 %v2111
  %2748 = vmatpush1.bf16.msra.mxu0 %v2110
  %2749 = vmatprep.subr.bf16.mxu0 %v2115
  %2750 = vmatpush1.bf16.msra.mxu0 %v2114
  %2751 = vmatprep.subr.bf16.mxu0 %v2119
  %2752 = vmatpush1.bf16.msra.mxu0 %v2118
  %2753 = vmatprep.subr.bf16.mxu0 %v2123
  %2754 = vmatpush1.bf16.msra.mxu0 %v2122
  %2755 = vmatprep.subr.bf16.mxu0 %v2127
  %2756 = vmatpush1.bf16.msra.mxu0 %v2126
  %2757 = vmatprep.subr.bf16.mxu0 %v2131
  %2758 = vmatpush1.bf16.msra.mxu0 %v2130
  %2759 = vmatprep.subr.bf16.mxu0 %v2135
  %2760 = vmatpush1.bf16.msra.mxu0 %v2134
  %2761 = vmatprep.subr.bf16.mxu0 0
  %2762 = vmatpush1.bf16.msra.mxu0 0
  %2763 = vmatprep.subr.bf16.mxu0 0
  %2764 = vmatpush1.bf16.msra.mxu0 0
  %2765 = vmatprep.subr.bf16.mxu0 0
  %2766 = vmatpush1.bf16.msra.mxu0 0
  %2767 = vmatprep.subr.bf16.mxu0 0
  %2768 = vmatpush1.bf16.msra.mxu0 0
  %2769 = vmatprep.subr.bf16.mxu0 0
  %2770 = vmatpush1.bf16.msra.mxu0 0
  %2771 = vmatprep.subr.bf16.mxu0 0
  %2772 = vmatpush1.bf16.msra.mxu0 0
  %2773 = vmatprep.subr.bf16.mxu0 0
  %2774 = vmatpush1.bf16.msra.mxu0 0
  %2775 = vmatprep.subr.bf16.mxu0 0
  %2776 = vmatpush1.bf16.msra.mxu0 0
  %2777 = vmatprep.mubr.bf16.mxu0 0
  %2778 = vmatmul.mubr.bf16.gmra.mrb[0].mxu0 %v2744
  %v2779 = vpop.f32.mrb[0].mxu0
  %v2780 = vadd.f32 0.0, %v2779
  %v2781 = vpop.f32.mrb[0].mxu0
  %v2782 = vadd.f32 0.0, %v2781
  %v2783 = vpop.f32.mrb[0].mxu0
  %v2784 = vpop.f32.mrb[0].mxu0
  %2785 = vdwg.mxu0
  %2786 = vmatprep.subr.bf16.mxu0 %v2109
  %2787 = vmatpush1.bf16.msra.mxu0 %v2108
  %2788 = vmatprep.subr.bf16.mxu0 %v2113
  %2789 = vmatpush1.bf16.msra.mxu0 %v2112
  %2790 = vmatprep.subr.bf16.mxu0 %v2117
  %2791 = vmatpush1.bf16.msra.mxu0 %v2116
  %2792 = vmatprep.subr.bf16.mxu0 %v2121
  %2793 = vmatpush1.bf16.msra.mxu0 %v2120
  %2794 = vmatprep.subr.bf16.mxu0 %v2125
  %2795 = vmatpush1.bf16.msra.mxu0 %v2124
  %2796 = vmatprep.subr.bf16.mxu0 %v2129
  %2797 = vmatpush1.bf16.msra.mxu0 %v2128
  %2798 = vmatprep.subr.bf16.mxu0 %v2133
  %2799 = vmatpush1.bf16.msra.mxu0 %v2132
  %2800 = vmatprep.subr.bf16.mxu0 %v2137
  %2801 = vmatpush1.bf16.msra.mxu0 %v2136
  %2802 = vmatprep.subr.bf16.mxu0 0
  %2803 = vmatpush1.bf16.msra.mxu0 0
  %2804 = vmatprep.subr.bf16.mxu0 0
  %2805 = vmatpush1.bf16.msra.mxu0 0
  %2806 = vmatprep.subr.bf16.mxu0 0
  %2807 = vmatpush1.bf16.msra.mxu0 0
  %2808 = vmatprep.subr.bf16.mxu0 0
  %2809 = vmatpush1.bf16.msra.mxu0 0
  %2810 = vmatprep.subr.bf16.mxu0 0
  %2811 = vmatpush1.bf16.msra.mxu0 0
  %2812 = vmatprep.subr.bf16.mxu0 0
  %2813 = vmatpush1.bf16.msra.mxu0 0
  %2814 = vmatprep.subr.bf16.mxu0 0
  %2815 = vmatpush1.bf16.msra.mxu0 0
  %2816 = vmatprep.subr.bf16.mxu0 0
  %2817 = vmatpush1.bf16.msra.mxu0 0
  %2818 = vmatprep.mubr.bf16.mxu0 0
  %2819 = vmatmul.mubr.bf16.gmra.mrb[0].mxu0 %v2744
  %v2820 = vpop.f32.mrb[0].mxu0
  %v2821 = vadd.f32 0.0, %v2820
  %v2822 = vpop.f32.mrb[0].mxu0
  %v2823 = vadd.f32 0.0, %v2822
  %v2824 = vpop.f32.mrb[0].mxu0
  %v2825 = vpop.f32.mrb[0].mxu0
  %2826 = vdwg.mxu0
  %v2827 = vadd.f32 %v2740, %v2780
  %v2828 = vadd.f32 %v2741, %v2782
  %v2829 = vadd.f32 %v2742, %v2821
  %v2830 = vadd.f32 %v2743, %v2823
  %v2831 = vxor.u32 %v2827, 2147483648
  %v2832 = vxor.u32 %v2828, 2147483648
  %v2833 = vxor.u32 %v2829, 2147483648
  %v2834 = vmul.f32 %v2831, 1.442695
  %v2835 = vpow.pop %v2834
  %v2836 = vmul.f32 %v2832, 1.442695
  %v2837 = vpow.pop %v2836
  %v2838 = vmul.f32 %v2833, 1.442695
  %v2839 = vpow.pop %v2838
  %v2840 = vadd.f32 %v2835, 1.0
  %v2841 = vadd.f32 %v2837, 1.0
  %v2842 = vadd.f32 %v2839, 1.0
  %v2843 = vrcp.pop %v2840
  %v2844 = vmul.f32 1.0, %v2843
  %v2845 = vrcp.pop %v2841
  %v2846 = vmul.f32 1.0, %v2845
  %v2847 = vrcp.pop %v2842
  %v2848 = vmul.f32 1.0, %v2847
  %v2849 = vtanh.pop %v2830
  %v2850 = vmul.f32 %v2846, %v2737
  %v2851 = vmul.f32 %v2844, %v2849
  %v2852 = vadd.f32 %v2850, %v2851
  %v2853 = vtanh.pop %v2852
  %v2854 = vmul.f32 %v2848, %v2853
  %v2855 = vld [vmem:[%s1334] sm:$0xff]
  %v2856 = vld [vmem:[%s1334 + $0x8] sm:$0xff]
  %v2857 = vld [vmem:[%s1334 + $0x10] sm:$0xff]
  %v2858 = vld [vmem:[%s1334 + $0x18] sm:$0xff]
  %v2859 = vpack.c.bf16 %v2854, %v2854
  %2860 = vmatprep.subr.bf16.mxu0 %v2107
  %2861 = vmatpush1.bf16.msra.mxu0 %v2106
  %2862 = vmatprep.subr.bf16.mxu0 %v2111
  %2863 = vmatpush1.bf16.msra.mxu0 %v2110
  %2864 = vmatprep.subr.bf16.mxu0 %v2115
  %2865 = vmatpush1.bf16.msra.mxu0 %v2114
  %2866 = vmatprep.subr.bf16.mxu0 %v2119
  %2867 = vmatpush1.bf16.msra.mxu0 %v2118
  %2868 = vmatprep.subr.bf16.mxu0 %v2123
  %2869 = vmatpush1.bf16.msra.mxu0 %v2122
  %2870 = vmatprep.subr.bf16.mxu0 %v2127
  %2871 = vmatpush1.bf16.msra.mxu0 %v2126
  %2872 = vmatprep.subr.bf16.mxu0 %v2131
  %2873 = vmatpush1.bf16.msra.mxu0 %v2130
  %2874 = vmatprep.subr.bf16.mxu0 %v2135
  %2875 = vmatpush1.bf16.msra.mxu0 %v2134
  %2876 = vmatprep.subr.bf16.mxu0 0
  %2877 = vmatpush1.bf16.msra.mxu0 0
  %2878 = vmatprep.subr.bf16.mxu0 0
  %2879 = vmatpush1.bf16.msra.mxu0 0
  %2880 = vmatprep.subr.bf16.mxu0 0
  %2881 = vmatpush1.bf16.msra.mxu0 0
  %2882 = vmatprep.subr.bf16.mxu0 0
  %2883 = vmatpush1.bf16.msra.mxu0 0
  %2884 = vmatprep.subr.bf16.mxu0 0
  %2885 = vmatpush1.bf16.msra.mxu0 0
  %2886 = vmatprep.subr.bf16.mxu0 0
  %2887 = vmatpush1.bf16.msra.mxu0 0
  %2888 = vmatprep.subr.bf16.mxu0 0
  %2889 = vmatpush1.bf16.msra.mxu0 0
  %2890 = vmatprep.subr.bf16.mxu0 0
  %2891 = vmatpush1.bf16.msra.mxu0 0
  %2892 = vmatprep.mubr.bf16.mxu0 0
  %2893 = vmatmul.mubr.bf16.gmra.mrb[0].mxu0 %v2859
  %v2894 = vpop.f32.mrb[0].mxu0
  %v2895 = vadd.f32 0.0, %v2894
  %v2896 = vpop.f32.mrb[0].mxu0
  %v2897 = vadd.f32 0.0, %v2896
  %v2898 = vpop.f32.mrb[0].mxu0
  %v2899 = vpop.f32.mrb[0].mxu0
  %2900 = vdwg.mxu0
  %2901 = vmatprep.subr.bf16.mxu0 %v2109
  %2902 = vmatpush1.bf16.msra.mxu0 %v2108
  %2903 = vmatprep.subr.bf16.mxu0 %v2113
  %2904 = vmatpush1.bf16.msra.mxu0 %v2112
  %2905 = vmatprep.subr.bf16.mxu0 %v2117
  %2906 = vmatpush1.bf16.msra.mxu0 %v2116
  %2907 = vmatprep.subr.bf16.mxu0 %v2121
  %2908 = vmatpush1.bf16.msra.mxu0 %v2120
  %2909 = vmatprep.subr.bf16.mxu0 %v2125
  %2910 = vmatpush1.bf16.msra.mxu0 %v2124
  %2911 = vmatprep.subr.bf16.mxu0 %v2129
  %2912 = vmatpush1.bf16.msra.mxu0 %v2128
  %2913 = vmatprep.subr.bf16.mxu0 %v2133
  %2914 = vmatpush1.bf16.msra.mxu0 %v2132
  %2915 = vmatprep.subr.bf16.mxu0 %v2137
  %2916 = vmatpush1.bf16.msra.mxu0 %v2136
  %2917 = vmatprep.subr.bf16.mxu0 0
  %2918 = vmatpush1.bf16.msra.mxu0 0
  %2919 = vmatprep.subr.bf16.mxu0 0
  %2920 = vmatpush1.bf16.msra.mxu0 0
  %2921 = vmatprep.subr.bf16.mxu0 0
  %2922 = vmatpush1.bf16.msra.mxu0 0
  %2923 = vmatprep.subr.bf16.mxu0 0
  %2924 = vmatpush1.bf16.msra.mxu0 0
  %2925 = vmatprep.subr.bf16.mxu0 0
  %2926 = vmatpush1.bf16.msra.mxu0 0
  %2927 = vmatprep.subr.bf16.mxu0 0
  %2928 = vmatpush1.bf16.msra.mxu0 0
  %2929 = vmatprep.subr.bf16.mxu0 0
  %2930 = vmatpush1.bf16.msra.mxu0 0
  %2931 = vmatprep.subr.bf16.mxu0 0
  %2932 = vmatpush1.bf16.msra.mxu0 0
  %2933 = vmatprep.mubr.bf16.mxu0 0
  %2934 = vmatmul.mubr.bf16.gmra.mrb[0].mxu0 %v2859
  %v2935 = vpop.f32.mrb[0].mxu0
  %v2936 = vadd.f32 0.0, %v2935
  %v2937 = vpop.f32.mrb[0].mxu0
  %v2938 = vadd.f32 0.0, %v2937
  %v2939 = vpop.f32.mrb[0].mxu0
  %v2940 = vpop.f32.mrb[0].mxu0
  %2941 = vdwg.mxu0
  %v2942 = vadd.f32 %v2855, %v2895
  %v2943 = vadd.f32 %v2856, %v2897
  %v2944 = vadd.f32 %v2857, %v2936
  %v2945 = vadd.f32 %v2858, %v2938
  %v2946 = vxor.u32 %v2942, 2147483648
  %v2947 = vxor.u32 %v2943, 2147483648
  %v2948 = vxor.u32 %v2944, 2147483648
  %v2949 = vmul.f32 %v2946, 1.442695
  %v2950 = vpow.pop %v2949
  %v2951 = vmul.f32 %v2947, 1.442695
  %v2952 = vpow.pop %v2951
  %v2953 = vmul.f32 %v2948, 1.442695
  %v2954 = vpow.pop %v2953
  %v2955 = vadd.f32 %v2950, 1.0
  %v2956 = vadd.f32 %v2952, 1.0
  %v2957 = vadd.f32 %v2954, 1.0
  %v2958 = vrcp.pop %v2955
  %v2959 = vmul.f32 1.0, %v2958
  %v2960 = vrcp.pop %v2956
  %v2961 = vmul.f32 1.0, %v2960
  %v2962 = vrcp.pop %v2957
  %v2963 = vmul.f32 1.0, %v2962
  %v2964 = vtanh.pop %v2945
  %v2965 = vmul.f32 %v2961, %v2852
  %v2966 = vmul.f32 %v2959, %v2964
  %v2967 = vadd.f32 %v2965, %v2966
  %v2968 = vtanh.pop %v2967
  %v2969 = vmul.f32 %v2963, %v2968
  %v2970 = vld [vmem:[%s1452] sm:$0xff]
  %v2971 = vld [vmem:[%s1452 + $0x8] sm:$0xff]
  %v2972 = vld [vmem:[%s1452 + $0x10] sm:$0xff]
  %v2973 = vld [vmem:[%s1452 + $0x18] sm:$0xff]
  %v2974 = vpack.c.bf16 %v2969, %v2969
  %2975 = vmatprep.subr.bf16.mxu0 %v2107
  %2976 = vmatpush1.bf16.msra.mxu0 %v2106
  %2977 = vmatprep.subr.bf16.mxu0 %v2111
  %2978 = vmatpush1.bf16.msra.mxu0 %v2110
  %2979 = vmatprep.subr.bf16.mxu0 %v2115
  %2980 = vmatpush1.bf16.msra.mxu0 %v2114
  %2981 = vmatprep.subr.bf16.mxu0 %v2119
  %2982 = vmatpush1.bf16.msra.mxu0 %v2118
  %2983 = vmatprep.subr.bf16.mxu0 %v2123
  %2984 = vmatpush1.bf16.msra.mxu0 %v2122
  %2985 = vmatprep.subr.bf16.mxu0 %v2127
  %2986 = vmatpush1.bf16.msra.mxu0 %v2126
  %2987 = vmatprep.subr.bf16.mxu0 %v2131
  %2988 = vmatpush1.bf16.msra.mxu0 %v2130
  %2989 = vmatprep.subr.bf16.mxu0 %v2135
  %2990 = vmatpush1.bf16.msra.mxu0 %v2134
  %2991 = vmatprep.subr.bf16.mxu0 0
  %2992 = vmatpush1.bf16.msra.mxu0 0
  %2993 = vmatprep.subr.bf16.mxu0 0
  %2994 = vmatpush1.bf16.msra.mxu0 0
  %2995 = vmatprep.subr.bf16.mxu0 0
  %2996 = vmatpush1.bf16.msra.mxu0 0
  %2997 = vmatprep.subr.bf16.mxu0 0
  %2998 = vmatpush1.bf16.msra.mxu0 0
  %2999 = vmatprep.subr.bf16.mxu0 0
  %3000 = vmatpush1.bf16.msra.mxu0 0
  %3001 = vmatprep.subr.bf16.mxu0 0
  %3002 = vmatpush1.bf16.msra.mxu0 0
  %3003 = vmatprep.subr.bf16.mxu0 0
  %3004 = vmatpush1.bf16.msra.mxu0 0
  %3005 = vmatprep.subr.bf16.mxu0 0
  %3006 = vmatpush1.bf16.msra.mxu0 0
  %3007 = vmatprep.mubr.bf16.mxu0 0
  %3008 = vmatmul.mubr.bf16.gmra.mrb[0].mxu0 %v2974
  %v3009 = vpop.f32.mrb[0].mxu0
  %v3010 = vadd.f32 0.0, %v3009
  %v3011 = vpop.f32.mrb[0].mxu0
  %v3012 = vadd.f32 0.0, %v3011
  %v3013 = vpop.f32.mrb[0].mxu0
  %v3014 = vpop.f32.mrb[0].mxu0
  %3015 = vdwg.mxu0
  %3016 = vmatprep.subr.bf16.mxu0 %v2109
  %3017 = vmatpush1.bf16.msra.mxu0 %v2108
  %3018 = vmatprep.subr.bf16.mxu0 %v2113
  %3019 = vmatpush1.bf16.msra.mxu0 %v2112
  %3020 = vmatprep.subr.bf16.mxu0 %v2117
  %3021 = vmatpush1.bf16.msra.mxu0 %v2116
  %3022 = vmatprep.subr.bf16.mxu0 %v2121
  %3023 = vmatpush1.bf16.msra.mxu0 %v2120
  %3024 = vmatprep.subr.bf16.mxu0 %v2125
  %3025 = vmatpush1.bf16.msra.mxu0 %v2124
  %3026 = vmatprep.subr.bf16.mxu0 %v2129
  %3027 = vmatpush1.bf16.msra.mxu0 %v2128
  %3028 = vmatprep.subr.bf16.mxu0 %v2133
  %3029 = vmatpush1.bf16.msra.mxu0 %v2132
  %3030 = vmatprep.subr.bf16.mxu0 %v2137
  %3031 = vmatpush1.bf16.msra.mxu0 %v2136
  %3032 = vmatprep.subr.bf16.mxu0 0
  %3033 = vmatpush1.bf16.msra.mxu0 0
  %3034 = vmatprep.subr.bf16.mxu0 0
  %3035 = vmatpush1.bf16.msra.mxu0 0
  %3036 = vmatprep.subr.bf16.mxu0 0
  %3037 = vmatpush1.bf16.msra.mxu0 0
  %3038 = vmatprep.subr.bf16.mxu0 0
  %3039 = vmatpush1.bf16.msra.mxu0 0
  %3040 = vmatprep.subr.bf16.mxu0 0
  %3041 = vmatpush1.bf16.msra.mxu0 0
  %3042 = vmatprep.subr.bf16.mxu0 0
  %3043 = vmatpush1.bf16.msra.mxu0 0
  %3044 = vmatprep.subr.bf16.mxu0 0
  %3045 = vmatpush1.bf16.msra.mxu0 0
  %3046 = vmatprep.subr.bf16.mxu0 0
  %3047 = vmatpush1.bf16.msra.mxu0 0
  %3048 = vmatprep.mubr.bf16.mxu0 0
  %3049 = vmatmul.mubr.bf16.gmra.mrb[0].mxu0 %v2974
  %v3050 = vpop.f32.mrb[0].mxu0
  %v3051 = vadd.f32 0.0, %v3050
  %v3052 = vpop.f32.mrb[0].mxu0
  %v3053 = vadd.f32 0.0, %v3052
  %v3054 = vpop.f32.mrb[0].mxu0
  %v3055 = vpop.f32.mrb[0].mxu0
  %3056 = vdwg.mxu0
  %v3057 = vadd.f32 %v2970, %v3010
  %v3058 = vadd.f32 %v2971, %v3012
  %v3059 = vadd.f32 %v2972, %v3051
  %v3060 = vadd.f32 %v2973, %v3053
  %v3061 = vxor.u32 %v3057, 2147483648
  %v3062 = vxor.u32 %v3058, 2147483648
  %v3063 = vxor.u32 %v3059, 2147483648
  %v3064 = vmul.f32 %v3061, 1.442695
  %v3065 = vpow.pop %v3064
  %v3066 = vmul.f32 %v3062, 1.442695
  %v3067 = vpow.pop %v3066
  %v3068 = vmul.f32 %v3063, 1.442695
  %v3069 = vpow.pop %v3068
  %v3070 = vadd.f32 %v3065, 1.0
  %v3071 = vadd.f32 %v3067, 1.0
  %v3072 = vadd.f32 %v3069, 1.0
  %v3073 = vrcp.pop %v3070
  %v3074 = vmul.f32 1.0, %v3073
  %v3075 = vrcp.pop %v3071
  %v3076 = vmul.f32 1.0, %v3075
  %v3077 = vrcp.pop %v3072
  %v3078 = vmul.f32 1.0, %v3077
  %v3079 = vtanh.pop %v3060
  %v3080 = vmul.f32 %v3076, %v2967
  %v3081 = vmul.f32 %v3074, %v3079
  %v3082 = vadd.f32 %v3080, %v3081
  %v3083 = vtanh.pop %v3082
  %v3084 = vmul.f32 %v3078, %v3083
  %v3085 = vpack.c.bf16 %v3084, %v3084
  %v3086 = vld [vmem:[%s7] sm:$0xf]
  %v3087 = vld [vmem:[%s7 + $0x4] sm:$0xf]
  %v3088 = vld [vmem:[%s7 + $0x8] sm:$0xf]
  %v3089 = vld [vmem:[%s7 + $0xc] sm:$0xf]
  %v3090 = vld [vmem:[%s7 + $0x10] sm:$0xf]
  %v3091 = vld [vmem:[%s7 + $0x14] sm:$0xf]
  %v3092 = vld [vmem:[%s7 + $0x18] sm:$0xf]
  %v3093 = vld [vmem:[%s7 + $0x1c] sm:$0xf]
  %v3094 = vld [vmem:[%s7 + $0x20] sm:$0xf]
  %v3095 = vld [vmem:[%s7 + $0x24] sm:$0xf]
  %v3096 = vld [vmem:[%s7 + $0x28] sm:$0xf]
  %v3097 = vld [vmem:[%s7 + $0x2c] sm:$0xf]
  %v3098 = vld [vmem:[%s7 + $0x30] sm:$0xf]
  %v3099 = vld [vmem:[%s7 + $0x34] sm:$0xf]
  %v3100 = vld [vmem:[%s7 + $0x38] sm:$0xf]
  %v3101 = vld [vmem:[%s7 + $0x3c] sm:$0xf]
  %v3102 = vld [vmem:[%s8] sm:$0x1]
  %v3104 = vlaneseq
  %v3105 = vshrl.u32 %v3104, 7
  %v3106 = vsub.s32 0, %v3105
  %v3107 = vrot.slane %v3102, %v3106
  %v3125 = vunpack.c.l.b16 %v3086
  %v3126 = vunpack.c.l.b16 %v3087
  %v3127 = vunpack.c.l.b16 %v3088
  %v3128 = vunpack.c.l.b16 %v3089
  %v3129 = vunpack.c.l.b16 %v3090
  %v3130 = vunpack.c.l.b16 %v3091
  %v3131 = vunpack.c.l.b16 %v3092
  %v3132 = vunpack.c.l.b16 %v3093
  %v3133 = vunpack.c.l.b16 %v3094
  %v3134 = vunpack.c.l.b16 %v3095
  %v3135 = vunpack.c.l.b16 %v3096
  %v3136 = vunpack.c.l.b16 %v3097
  %v3137 = vunpack.c.l.b16 %v3098
  %v3138 = vunpack.c.l.b16 %v3099
  %v3139 = vunpack.c.l.b16 %v3100
  %v3140 = vunpack.c.l.b16 %v3101
  %v3141 = vpack.c.b16 %v3126, %v3125
  %v3142 = vpack.c.b16 %v3128, %v3127
  %v3143 = vpack.c.b16 %v3130, %v3129
  %v3144 = vpack.c.b16 %v3132, %v3131
  %v3145 = vpack.c.b16 %v3134, %v3133
  %v3146 = vpack.c.b16 %v3136, %v3135
  %v3147 = vpack.c.b16 %v3138, %v3137
  %v3148 = vpack.c.b16 %v3140, %v3139
  %3157 = vmatprep.subr.bf16.mxu0 0
  %3158 = vmatpush1.bf16.msra.mxu0 %v3141
  %3159 = vmatprep.subr.bf16.mxu0 0
  %3160 = vmatpush1.bf16.msra.mxu0 %v3142
  %3161 = vmatprep.subr.bf16.mxu0 0
  %3162 = vmatpush1.bf16.msra.mxu0 %v3143
  %3163 = vmatprep.subr.bf16.mxu0 0
  %3164 = vmatpush1.bf16.msra.mxu0 %v3144
  %3165 = vmatprep.subr.bf16.mxu0 0
  %3166 = vmatpush1.bf16.msra.mxu0 %v3145
  %3167 = vmatprep.subr.bf16.mxu0 0
  %3168 = vmatpush1.bf16.msra.mxu0 %v3146
  %3169 = vmatprep.subr.bf16.mxu0 0
  %3170 = vmatpush1.bf16.msra.mxu0 %v3147
  %3171 = vmatprep.subr.bf16.mxu0 0
  %3172 = vmatpush1.bf16.msra.mxu0 %v3148
  %3173 = vmatprep.subr.bf16.mxu0 0
  %3174 = vmatpush1.bf16.msra.mxu0 0
  %3175 = vmatprep.subr.bf16.mxu0 0
  %3176 = vmatpush1.bf16.msra.mxu0 0
  %3177 = vmatprep.subr.bf16.mxu0 0
  %3178 = vmatpush1.bf16.msra.mxu0 0
  %3179 = vmatprep.subr.bf16.mxu0 0
  %3180 = vmatpush1.bf16.msra.mxu0 0
  %3181 = vmatprep.subr.bf16.mxu0 0
  %3182 = vmatpush1.bf16.msra.mxu0 0
  %3183 = vmatprep.subr.bf16.mxu0 0
  %3184 = vmatpush1.bf16.msra.mxu0 0
  %3185 = vmatprep.subr.bf16.mxu0 0
  %3186 = vmatpush1.bf16.msra.mxu0 0
  %3187 = vmatprep.subr.bf16.mxu0 0
  %3188 = vmatpush1.bf16.msra.mxu0 0
  %3189 = vmatprep.mubr.bf16.mxu0 0
  %3190 = vmatmul.mubr.bf16.gmra.mrb[0].mxu0 %v3085
  %v3191 = vpop.f32.mrb[0].mxu0
  %v3192 = vadd.f32 %v3107, %v3191
  %v3193 = vpop.f32.mrb[0].mxu0
  %v3194 = vpop.f32.mrb[0].mxu0
  %v3195 = vpop.f32.mrb[0].mxu0
  %3196 = vdwg.mxu0
  %3197 = vst [vmem:[%s9] sm:$0xff] %v3192
  // Predicated region
  $region38: #{lstm_model_forward.1} parent=0 // pred_check
    _
  $region39: #{lstm_model_forward.1} parent=0 // pred_check_branch
    %3199 = sbr.rel (0) target = $region41
  $region40: #{lstm_model_forward.1} parent=0 // pred_region
    _
  $region41: #{lstm_model_forward.1} parent=0 // pred_fallthru
    _
  // Predicated region
  $region42: #{lstm_model_forward.1} parent=0 // pred_check
    _
  $region43: #{lstm_model_forward.1} parent=0 // pred_check_branch
    %3201 = sbr.rel (0) target = $region45
  $region44: #{lstm_model_forward.1} parent=0 // pred_region
    _
  $region45: #{lstm_model_forward.1} parent=0 // pred_fallthru
    _

</llo_original>
